<compile_context>
chip_gen: v6e
topology: v6e:2x2x1
jax: 0.10.0
libtpu: 0.0.40
codegen_flags: <defaults>
</compile_context>

<pallas_src>
import jax
import jax.numpy as jnp
from jax.experimental import pallas as pl
from jax.experimental.pallas import tpu as pltpu

# ---- scaled-down constants (real model: 960 channels, 7x7 feature map) ----
MOBILENET_V3_OUT_CHANNELS = 64          # real: 960
FEAT_H = FEAT_W = 8                     # real: 7
C_MID = MOBILENET_V3_OUT_CHANNELS // 4  # conv output channels (16)
MOBILENET_V3_AVG_POOL_OUT_SIZE = C_MID * (FEAT_H // 2) * (FEAT_W // 2)  # 256
LANES = 128                             # TPU vreg lane width


# --------------------------- fused Pallas kernel ----------------------------
def age_head_kernel(x_ref, wc_ref, bc_ref,
                    w1_ref, b1_ref, w2_ref, b2_ref, w3_ref, b3_ref,
                    w4_ref, b4_ref, w5_ref, b5_ref,
                    o_ref,
                    xp_ref, pat_ref, flat_ref):
    """Conv3x3(pad=1) -> MaxPool2d(2) -> ReLU -> Flatten -> 5x Linear(+ReLU)
    -> Sigmoid for the whole batch in one grid step.  All intermediates stay
    in VMEM; the only HBM traffic is the feature map in and (B, 1) out.
    """
    B, H, W, Cin = x_ref.shape
    Hp, Wp = H // 2, W // 2
    Cpad = wc_ref.shape[1]              # conv out channels, lane-padded to 128

    # ---- zero-pad the feature map in VMEM (no wrapper-side jnp.pad) --------
    xp_ref[...] = jnp.zeros_like(xp_ref)
    xp_ref[:, 1:H + 1, 1:W + 1, :] = x_ref[...]

    # ---- im2col: (B*H*W, 9*Cin) patch matrix -> ONE lane-dense MXU matmul --
    for dh in range(3):
        for dw in range(3):
            t = dh * 3 + dw
            pat_ref[:, t * Cin:(t + 1) * Cin] = (
                xp_ref[:, dh:dh + H, dw:dw + W, :].reshape(B * H * W, Cin))

    conv = jnp.dot(pat_ref[...], wc_ref[...],
                   preferred_element_type=jnp.float32) + bc_ref[...]

    # ---- MaxPool2d(2) + ReLU (channels stay on the 128-lane dim) -----------
    y = conv.reshape(B * Hp, 2, Wp, 2, Cpad)
    y = jnp.max(y, axis=(1, 3))                       # (B*Hp, Wp, Cpad)
    y = jnp.maximum(y, 0.0).reshape(B, Hp, Wp, Cpad)  # (B, Hp, Wp, Cpad)

    # ---- flatten to a lane-dense (B, Hp*Wp*Cpad) slab in VMEM --------------
    # (HWC order; the C-major nn.Flatten permutation is folded into w1.)
    for yy in range(Hp):
        for xx in range(Wp):
            s = yy * Wp + xx
            flat_ref[:, s * Cpad:(s + 1) * Cpad] = y[:, yy, xx, :]

    # ---- classifier: Linear/ReLU stack (Dropout = identity) + Sigmoid ------
    h = flat_ref[...]
    h = jnp.maximum(jnp.dot(h, w1_ref[...],
                            preferred_element_type=jnp.float32) + b1_ref[...], 0.0)
    h = jnp.maximum(jnp.dot(h, w2_ref[...],
                            preferred_element_type=jnp.float32) + b2_ref[...], 0.0)
    h = jnp.maximum(jnp.dot(h, w3_ref[...],
                            preferred_element_type=jnp.float32) + b3_ref[...], 0.0)
    h = jnp.maximum(jnp.dot(h, w4_ref[...],
                            preferred_element_type=jnp.float32) + b4_ref[...], 0.0)
    h = jnp.dot(h, w5_ref[...], preferred_element_type=jnp.float32) + b5_ref[...]
    o_ref[...] = jax.nn.sigmoid(h).astype(o_ref.dtype)


# ------------------------------ wrappers -------------------------------------
def _full_spec(shape):
    nd = len(shape)
    return pl.BlockSpec(shape, lambda i, _nd=nd: (0,) * _nd)


def prepare_head_params(params):
    """One-time weight re-layout for the fused kernel (run once, outside the hot path):
      * conv HWIO weight -> im2col (9*Cin, 128), Cout lane-padded with zeros
      * first Linear: fold the C-major nn.Flatten permutation + channel lane
        padding into its rows; pad out dim to 128
      * middle Linears: zero-pad both dims to 128 (exact: zero bias + ReLU
        keeps padded lanes at exactly 0 all the way through)
    """
    cin, cmid = MOBILENET_V3_OUT_CHANNELS, C_MID
    hp, wp = FEAT_H // 2, FEAT_W // 2

    wc = params["conv_w"].reshape(9 * cin, cmid)            # (dh,dw,ci) rows
    wc = jnp.pad(wc, ((0, 0), (0, LANES - cmid)))           # (576, 128)
    bc = jnp.pad(params["conv_b"], (0, LANES - cmid)).reshape(1, LANES)

    (w1, b1), (w2, b2), (w3, b3), (w4, b4), (w5, b5) = params["linears"]
    d1 = w1.shape[1]
    w1_eff = w1.reshape(cmid, hp, wp, d1)                   # rows: C-major (c,y,x)
    w1_eff = jnp.transpose(w1_eff, (1, 2, 0, 3))            # -> (y, x, c, out)
    w1_eff = jnp.pad(w1_eff, ((0, 0), (0, 0), (0, LANES - cmid), (0, 0)))
    w1_eff = w1_eff.reshape(hp * wp * LANES, d1)            # (2048, 64)
    w1_eff = jnp.pad(w1_eff, ((0, 0), (0, LANES - d1)))     # (2048, 128)
    b1_eff = jnp.pad(b1, (0, LANES - d1)).reshape(1, LANES)

    def pad_lin(w, b, pad_out):
        din, dout = w.shape
        po = (LANES - dout) if pad_out else 0
        return (jnp.pad(w, ((0, LANES - din), (0, po))),
                jnp.pad(b, (0, po)).reshape(1, -1))

    w2p, b2p = pad_lin(w2, b2, True)     # (128, 128)
    w3p, b3p = pad_lin(w3, b3, True)
    w4p, b4p = pad_lin(w4, b4, True)
    w5p, b5p = pad_lin(w5, b5, False)    # (128, 1), (1, 1)
    return (wc, bc, w1_eff, b1_eff, w2p, b2p, w3p, b3p, w4p, b4p, w5p, b5p)


def age_predictor_head(features_nchw, head_params):
    """Forward of the custom avgpool+classifier head as ONE fused pallas_call."""
    x = jnp.transpose(features_nchw, (0, 2, 3, 1))          # NCHW -> NHWC boundary
    B, H, W, Cin = x.shape
    args = (x,) + tuple(head_params)
    return pl.pallas_call(
        age_head_kernel,
        out_shape=jax.ShapeDtypeStruct((B, 1), jnp.float32),
        grid=(1,),                                           # whole batch, one step
        in_specs=[_full_spec(a.shape) for a in args],
        out_specs=_full_spec((B, 1)),
        scratch_shapes=[
            pltpu.VMEM((B, H + 2, W + 2, Cin), jnp.float32),            # padded map
            pltpu.VMEM((B * H * W, 9 * Cin), jnp.float32),              # im2col
            pltpu.VMEM((B, (H // 2) * (W // 2) * LANES), jnp.float32),  # flat acts
        ],
        compiler_params=pltpu.CompilerParams(
            dimension_semantics=("arbitrary",)),
    )(*args)


# --------------------------- parameter init ----------------------------------
def init_params(key):
    p = {}
    k = jax.random.split(key, 16)
    cin, cmid = MOBILENET_V3_OUT_CHANNELS, C_MID
    p["conv_w"] = (jax.random.normal(k[0], (3, 3, cin, cmid), jnp.float32)
                   * (1.0 / (3 * 3 * cin) ** 0.5))           # HWIO layout
    p["conv_b"] = jax.random.normal(k[1], (cmid,), jnp.float32) * 0.01
    F = MOBILENET_V3_AVG_POOL_OUT_SIZE
    dims = [F, F // 4, F // 8, F // 16, F // 32, 1]
    lins = []
    for i in range(5):
        din, dout = dims[i], dims[i + 1]
        w = (jax.random.normal(k[2 + 2 * i], (din, dout), jnp.float32)
             * (1.0 / din ** 0.5))
        b = jax.random.normal(k[3 + 2 * i], (dout,), jnp.float32) * 0.01
        lins.append((w, b))
    p["linears"] = lins
    return p


# ------------------------ pure-JAX reference check ---------------------------
def reference_forward(features_nchw, params):
    x = jnp.transpose(features_nchw, (0, 2, 3, 1))
    y = jax.lax.conv_general_dilated(
        x, params["conv_w"], window_strides=(1, 1), padding="SAME",
        dimension_numbers=("NHWC", "HWIO", "NHWC"))
    y = y + params["conv_b"]
    B, H, W, C = y.shape
    y = y.reshape(B, H // 2, 2, W // 2, 2, C).max(axis=(2, 4))
    y = jnp.maximum(y, 0.0)
    y = jnp.transpose(y, (0, 3, 1, 2)).reshape(B, -1)        # C-major nn.Flatten
    for i, (w, b) in enumerate(params["linears"]):
        y = y @ w + b
        if i < 4:
            y = jnp.maximum(y, 0.0)
    return jax.nn.sigmoid(y)


if __name__ == "__main__":
    key = jax.random.PRNGKey(0)
    pkey, xkey = jax.random.split(key)
    params = init_params(pkey)
    head_params = prepare_head_params(params)     # one-time weight re-layout

    B = 2
    # Stand-in for the frozen MobileNetV3-Large backbone output (NCHW).
    features = jax.random.normal(
        xkey, (B, MOBILENET_V3_OUT_CHANNELS, FEAT_H, FEAT_W), jnp.float32)

    out = jax.block_until_ready(age_predictor_head(features, head_params))
    ref = jax.block_until_ready(reference_forward(features, params))
    assert out.shape == (B, 1)
    assert jnp.allclose(out, ref, atol=1e-5, rtol=1e-5), (out, ref)

    print("KERNEL_OK")
</pallas_src>

<mosaic_0001>
module attributes {stable_mosaic.version = 11 : i64} {
  func.func @age_head_kernel(%arg0: i32, %arg1: memref<2x8x8x64xf32, #tpu.memory_space<vmem>>, %arg2: memref<576x128xf32, #tpu.memory_space<vmem>>, %arg3: memref<1x128xf32, #tpu.memory_space<vmem>>, %arg4: memref<2048x128xf32, #tpu.memory_space<vmem>>, %arg5: memref<1x128xf32, #tpu.memory_space<vmem>>, %arg6: memref<128x128xf32, #tpu.memory_space<vmem>>, %arg7: memref<1x128xf32, #tpu.memory_space<vmem>>, %arg8: memref<128x128xf32, #tpu.memory_space<vmem>>, %arg9: memref<1x128xf32, #tpu.memory_space<vmem>>, %arg10: memref<128x128xf32, #tpu.memory_space<vmem>>, %arg11: memref<1x128xf32, #tpu.memory_space<vmem>>, %arg12: memref<128x1xf32, #tpu.memory_space<vmem>>, %arg13: memref<1x1xf32, #tpu.memory_space<vmem>>, %arg14: memref<2x1xf32, #tpu.memory_space<vmem>>, %arg15: memref<2x10x10x64xf32, #tpu.memory_space<vmem>>, %arg16: memref<128x576xf32, #tpu.memory_space<vmem>>, %arg17: memref<2x2048xf32, #tpu.memory_space<vmem>>) attributes {dimension_semantics = [#tpu.dimension_semantics<arbitrary>], iteration_bounds = array<i64: 1>, scalar_prefetch = 0 : i64, scratch_operands = 3 : i64, tpu.core_type = #tpu.core_type<tc>, window_params = [{pipeline_mode = #tpu.pipeline_mode<synchronous>, transform_indices = @transform_0, window_bounds = array<i64: 2, 8, 8, 64>}, {pipeline_mode = #tpu.pipeline_mode<synchronous>, transform_indices = @transform_1, window_bounds = array<i64: 576, 128>}, {pipeline_mode = #tpu.pipeline_mode<synchronous>, transform_indices = @transform_2, window_bounds = array<i64: 1, 128>}, {pipeline_mode = #tpu.pipeline_mode<synchronous>, transform_indices = @transform_3, window_bounds = array<i64: 2048, 128>}, {pipeline_mode = #tpu.pipeline_mode<synchronous>, transform_indices = @transform_4, window_bounds = array<i64: 1, 128>}, {pipeline_mode = #tpu.pipeline_mode<synchronous>, transform_indices = @transform_5, window_bounds = array<i64: 128, 128>}, {pipeline_mode = #tpu.pipeline_mode<synchronous>, transform_indices = @transform_6, window_bounds = array<i64: 1, 128>}, {pipeline_mode = #tpu.pipeline_mode<synchronous>, transform_indices = @transform_7, window_bounds = array<i64: 128, 128>}, {pipeline_mode = #tpu.pipeline_mode<synchronous>, transform_indices = @transform_8, window_bounds = array<i64: 1, 128>}, {pipeline_mode = #tpu.pipeline_mode<synchronous>, transform_indices = @transform_9, window_bounds = array<i64: 128, 128>}, {pipeline_mode = #tpu.pipeline_mode<synchronous>, transform_indices = @transform_10, window_bounds = array<i64: 1, 128>}, {pipeline_mode = #tpu.pipeline_mode<synchronous>, transform_indices = @transform_11, window_bounds = array<i64: 128, 1>}, {pipeline_mode = #tpu.pipeline_mode<synchronous>, transform_indices = @transform_12, window_bounds = array<i64: 1, 1>}, {pipeline_mode = #tpu.pipeline_mode<synchronous>, transform_indices = @transform_13, window_bounds = array<i64: 2, 1>}]} {
    %cst = arith.constant 0.000000e+00 : f32
    %0 = vector.broadcast %cst : f32 to vector<2x10x10x64xf32>
    %c0 = arith.constant 0 : index
    %c0_0 = arith.constant 0 : index
    %c0_1 = arith.constant 0 : index
    %c0_2 = arith.constant 0 : index
    %1 = vector.load %arg15[%c0, %c0_0, %c0_1, %c0_2] : memref<2x10x10x64xf32, #tpu.memory_space<vmem>>, vector<2x10x10x64xf32>
    tpu.vector_store %arg15[%c0, %c0_0, %c0_1, %c0_2], %0 {strides = array<i32>} : memref<2x10x10x64xf32, #tpu.memory_space<vmem>>, vector<2x10x10x64xf32>,
    %c0_3 = arith.constant 0 : index
    %c0_4 = arith.constant 0 : index
    %c0_5 = arith.constant 0 : index
    %c0_6 = arith.constant 0 : index
    %2 = vector.load %arg1[%c0_3, %c0_4, %c0_5, %c0_6] : memref<2x8x8x64xf32, #tpu.memory_space<vmem>>, vector<2x8x8x64xf32>
    %c0_7 = arith.constant 0 : index
    %c1 = arith.constant 1 : index
    %c1_8 = arith.constant 1 : index
    %c0_9 = arith.constant 0 : index
    %3 = vector.load %arg15[%c0_7, %c1, %c1_8, %c0_9] : memref<2x10x10x64xf32, #tpu.memory_space<vmem>>, vector<2x8x8x64xf32>
    tpu.vector_store %arg15[%c0_7, %c1, %c1_8, %c0_9], %2 {strides = array<i32>} : memref<2x10x10x64xf32, #tpu.memory_space<vmem>>, vector<2x8x8x64xf32>,
    %c0_10 = arith.constant 0 : index
    %c0_11 = arith.constant 0 : index
    %c0_12 = arith.constant 0 : index
    %c0_13 = arith.constant 0 : index
    %4 = vector.load %arg15[%c0_10, %c0_11, %c0_12, %c0_13] : memref<2x10x10x64xf32, #tpu.memory_space<vmem>>, vector<2x8x8x64xf32>
    %5 = vector.shape_cast %4 : vector<2x8x8x64xf32> to vector<128x64xf32>
    %c0_14 = arith.constant 0 : index
    %c0_15 = arith.constant 0 : index
    %6 = vector.load %arg16[%c0_14, %c0_15] : memref<128x576xf32, #tpu.memory_space<vmem>>, vector<128x64xf32>
    tpu.vector_store %arg16[%c0_14, %c0_15], %5 {strides = array<i32>} : memref<128x576xf32, #tpu.memory_space<vmem>>, vector<128x64xf32>,
    %c0_16 = arith.constant 0 : index
    %c0_17 = arith.constant 0 : index
    %c1_18 = arith.constant 1 : index
    %c0_19 = arith.constant 0 : index
    %7 = vector.load %arg15[%c0_16, %c0_17, %c1_18, %c0_19] : memref<2x10x10x64xf32, #tpu.memory_space<vmem>>, vector<2x8x8x64xf32>
    %8 = vector.shape_cast %7 : vector<2x8x8x64xf32> to vector<128x64xf32>
    %c0_20 = arith.constant 0 : index
    %c64 = arith.constant 64 : index
    %9 = vector.load %arg16[%c0_20, %c64] : memref<128x576xf32, #tpu.memory_space<vmem>>, vector<128x64xf32>
    tpu.vector_store %arg16[%c0_20, %c64], %8 {strides = array<i32>} : memref<128x576xf32, #tpu.memory_space<vmem>>, vector<128x64xf32>,
    %c0_21 = arith.constant 0 : index
    %c0_22 = arith.constant 0 : index
    %c2 = arith.constant 2 : index
    %c0_23 = arith.constant 0 : index
    %10 = vector.load %arg15[%c0_21, %c0_22, %c2, %c0_23] : memref<2x10x10x64xf32, #tpu.memory_space<vmem>>, vector<2x8x8x64xf32>
    %11 = vector.shape_cast %10 : vector<2x8x8x64xf32> to vector<128x64xf32>
    %c0_24 = arith.constant 0 : index
    %c128 = arith.constant 128 : index
    %12 = vector.load %arg16[%c0_24, %c128] : memref<128x576xf32, #tpu.memory_space<vmem>>, vector<128x64xf32>
    tpu.vector_store %arg16[%c0_24, %c128], %11 {strides = array<i32>} : memref<128x576xf32, #tpu.memory_space<vmem>>, vector<128x64xf32>,
    %c0_25 = arith.constant 0 : index
    %c1_26 = arith.constant 1 : index
    %c0_27 = arith.constant 0 : index
    %c0_28 = arith.constant 0 : index
    %13 = vector.load %arg15[%c0_25, %c1_26, %c0_27, %c0_28] : memref<2x10x10x64xf32, #tpu.memory_space<vmem>>, vector<2x8x8x64xf32>
    %14 = vector.shape_cast %13 : vector<2x8x8x64xf32> to vector<128x64xf32>
    %c0_29 = arith.constant 0 : index
    %c192 = arith.constant 192 : index
    %15 = vector.load %arg16[%c0_29, %c192] : memref<128x576xf32, #tpu.memory_space<vmem>>, vector<128x64xf32>
    tpu.vector_store %arg16[%c0_29, %c192], %14 {strides = array<i32>} : memref<128x576xf32, #tpu.memory_space<vmem>>, vector<128x64xf32>,
    %c0_30 = arith.constant 0 : index
    %c1_31 = arith.constant 1 : index
    %c1_32 = arith.constant 1 : index
    %c0_33 = arith.constant 0 : index
    %16 = vector.load %arg15[%c0_30, %c1_31, %c1_32, %c0_33] : memref<2x10x10x64xf32, #tpu.memory_space<vmem>>, vector<2x8x8x64xf32>
    %17 = vector.shape_cast %16 : vector<2x8x8x64xf32> to vector<128x64xf32>
    %c0_34 = arith.constant 0 : index
    %c256 = arith.constant 256 : index
    %18 = vector.load %arg16[%c0_34, %c256] : memref<128x576xf32, #tpu.memory_space<vmem>>, vector<128x64xf32>
    tpu.vector_store %arg16[%c0_34, %c256], %17 {strides = array<i32>} : memref<128x576xf32, #tpu.memory_space<vmem>>, vector<128x64xf32>,
    %c0_35 = arith.constant 0 : index
    %c1_36 = arith.constant 1 : index
    %c2_37 = arith.constant 2 : index
    %c0_38 = arith.constant 0 : index
    %19 = vector.load %arg15[%c0_35, %c1_36, %c2_37, %c0_38] : memref<2x10x10x64xf32, #tpu.memory_space<vmem>>, vector<2x8x8x64xf32>
    %20 = vector.shape_cast %19 : vector<2x8x8x64xf32> to vector<128x64xf32>
    %c0_39 = arith.constant 0 : index
    %c320 = arith.constant 320 : index
    %21 = vector.load %arg16[%c0_39, %c320] : memref<128x576xf32, #tpu.memory_space<vmem>>, vector<128x64xf32>
    tpu.vector_store %arg16[%c0_39, %c320], %20 {strides = array<i32>} : memref<128x576xf32, #tpu.memory_space<vmem>>, vector<128x64xf32>,
    %c0_40 = arith.constant 0 : index
    %c2_41 = arith.constant 2 : index
    %c0_42 = arith.constant 0 : index
    %c0_43 = arith.constant 0 : index
    %22 = vector.load %arg15[%c0_40, %c2_41, %c0_42, %c0_43] : memref<2x10x10x64xf32, #tpu.memory_space<vmem>>, vector<2x8x8x64xf32>
    %23 = vector.shape_cast %22 : vector<2x8x8x64xf32> to vector<128x64xf32>
    %c0_44 = arith.constant 0 : index
    %c384 = arith.constant 384 : index
    %24 = vector.load %arg16[%c0_44, %c384] : memref<128x576xf32, #tpu.memory_space<vmem>>, vector<128x64xf32>
    tpu.vector_store %arg16[%c0_44, %c384], %23 {strides = array<i32>} : memref<128x576xf32, #tpu.memory_space<vmem>>, vector<128x64xf32>,
    %c0_45 = arith.constant 0 : index
    %c2_46 = arith.constant 2 : index
    %c1_47 = arith.constant 1 : index
    %c0_48 = arith.constant 0 : index
    %25 = vector.load %arg15[%c0_45, %c2_46, %c1_47, %c0_48] : memref<2x10x10x64xf32, #tpu.memory_space<vmem>>, vector<2x8x8x64xf32>
    %26 = vector.shape_cast %25 : vector<2x8x8x64xf32> to vector<128x64xf32>
    %c0_49 = arith.constant 0 : index
    %c448 = arith.constant 448 : index
    %27 = vector.load %arg16[%c0_49, %c448] : memref<128x576xf32, #tpu.memory_space<vmem>>, vector<128x64xf32>
    tpu.vector_store %arg16[%c0_49, %c448], %26 {strides = array<i32>} : memref<128x576xf32, #tpu.memory_space<vmem>>, vector<128x64xf32>,
    %c0_50 = arith.constant 0 : index
    %c2_51 = arith.constant 2 : index
    %c2_52 = arith.constant 2 : index
    %c0_53 = arith.constant 0 : index
    %28 = vector.load %arg15[%c0_50, %c2_51, %c2_52, %c0_53] : memref<2x10x10x64xf32, #tpu.memory_space<vmem>>, vector<2x8x8x64xf32>
    %29 = vector.shape_cast %28 : vector<2x8x8x64xf32> to vector<128x64xf32>
    %c0_54 = arith.constant 0 : index
    %c512 = arith.constant 512 : index
    %30 = vector.load %arg16[%c0_54, %c512] : memref<128x576xf32, #tpu.memory_space<vmem>>, vector<128x64xf32>
    tpu.vector_store %arg16[%c0_54, %c512], %29 {strides = array<i32>} : memref<128x576xf32, #tpu.memory_space<vmem>>, vector<128x64xf32>,
    %c0_55 = arith.constant 0 : index
    %c0_56 = arith.constant 0 : index
    %31 = vector.load %arg16[%c0_55, %c0_56] : memref<128x576xf32, #tpu.memory_space<vmem>>, vector<128x576xf32>
    %c0_57 = arith.constant 0 : index
    %c0_58 = arith.constant 0 : index
    %32 = vector.load %arg2[%c0_57, %c0_58] : memref<576x128xf32, #tpu.memory_space<vmem>>, vector<576x128xf32>
    %cst_59 = arith.constant dense<0.000000e+00> : vector<128x128xf32>
    %33 = tpu.matmul %31, %32, %cst_59 {dimension_numbers = #tpu.dot_dimension_numbers<[1], [0], [0], [1], [0, 0, 1, 1], [], []>} : vector<128x576xf32>, vector<576x128xf32>, vector<128x128xf32> -> vector<128x128xf32>
    %c0_60 = arith.constant 0 : index
    %c0_61 = arith.constant 0 : index
    %34 = vector.load %arg3[%c0_60, %c0_61] : memref<1x128xf32, #tpu.memory_space<vmem>>, vector<1x128xf32>
    %35 = vector.broadcast %34 : vector<1x128xf32> to vector<128x128xf32>
    %36 = arith.addf %33, %35 : vector<128x128xf32>
    %37 = vector.shape_cast %36 : vector<128x128xf32> to vector<8x2x4x2x128xf32>
    %cst_62 = arith.constant dense<0xFF800000> : vector<8x4x128xf32>
    %38 = vector.multi_reduction <maximumf>, %37, %cst_62 [1, 3] : vector<8x2x4x2x128xf32> to vector<8x4x128xf32>
    %cst_63 = arith.constant 0.000000e+00 : f32
    %39 = vector.broadcast %cst_63 : f32 to vector<8x4x128xf32>
    %40 = arith.maximumf %38, %39 : vector<8x4x128xf32>
    %41 = vector.shape_cast %40 : vector<8x4x128xf32> to vector<2x4x4x128xf32>
    %42 = vector.extract_strided_slice %41 {offsets = [0, 0, 0, 0], sizes = [2, 1, 1, 128], strides = [1, 1, 1, 1]} : vector<2x4x4x128xf32> to vector<2x1x1x128xf32>
    %43 = vector.shape_cast %42 : vector<2x1x1x128xf32> to vector<2x128xf32>
    %c0_64 = arith.constant 0 : index
    %c0_65 = arith.constant 0 : index
    %44 = vector.load %arg17[%c0_64, %c0_65] : memref<2x2048xf32, #tpu.memory_space<vmem>>, vector<2x128xf32>
    tpu.vector_store %arg17[%c0_64, %c0_65], %43 {strides = array<i32>} : memref<2x2048xf32, #tpu.memory_space<vmem>>, vector<2x128xf32>,
    %45 = vector.extract_strided_slice %41 {offsets = [0, 0, 1, 0], sizes = [2, 1, 1, 128], strides = [1, 1, 1, 1]} : vector<2x4x4x128xf32> to vector<2x1x1x128xf32>
    %46 = vector.shape_cast %45 : vector<2x1x1x128xf32> to vector<2x128xf32>
    %c0_66 = arith.constant 0 : index
    %c128_67 = arith.constant 128 : index
    %47 = vector.load %arg17[%c0_66, %c128_67] : memref<2x2048xf32, #tpu.memory_space<vmem>>, vector<2x128xf32>
    tpu.vector_store %arg17[%c0_66, %c128_67], %46 {strides = array<i32>} : memref<2x2048xf32, #tpu.memory_space<vmem>>, vector<2x128xf32>,
    %48 = vector.extract_strided_slice %41 {offsets = [0, 0, 2, 0], sizes = [2, 1, 1, 128], strides = [1, 1, 1, 1]} : vector<2x4x4x128xf32> to vector<2x1x1x128xf32>
    %49 = vector.shape_cast %48 : vector<2x1x1x128xf32> to vector<2x128xf32>
    %c0_68 = arith.constant 0 : index
    %c256_69 = arith.constant 256 : index
    %50 = vector.load %arg17[%c0_68, %c256_69] : memref<2x2048xf32, #tpu.memory_space<vmem>>, vector<2x128xf32>
    tpu.vector_store %arg17[%c0_68, %c256_69], %49 {strides = array<i32>} : memref<2x2048xf32, #tpu.memory_space<vmem>>, vector<2x128xf32>,
    %51 = vector.extract_strided_slice %41 {offsets = [0, 0, 3, 0], sizes = [2, 1, 1, 128], strides = [1, 1, 1, 1]} : vector<2x4x4x128xf32> to vector<2x1x1x128xf32>
    %52 = vector.shape_cast %51 : vector<2x1x1x128xf32> to vector<2x128xf32>
    %c0_70 = arith.constant 0 : index
    %c384_71 = arith.constant 384 : index
    %53 = vector.load %arg17[%c0_70, %c384_71] : memref<2x2048xf32, #tpu.memory_space<vmem>>, vector<2x128xf32>
    tpu.vector_store %arg17[%c0_70, %c384_71], %52 {strides = array<i32>} : memref<2x2048xf32, #tpu.memory_space<vmem>>, vector<2x128xf32>,
    %54 = vector.extract_strided_slice %41 {offsets = [0, 1, 0, 0], sizes = [2, 1, 1, 128], strides = [1, 1, 1, 1]} : vector<2x4x4x128xf32> to vector<2x1x1x128xf32>
    %55 = vector.shape_cast %54 : vector<2x1x1x128xf32> to vector<2x128xf32>
    %c0_72 = arith.constant 0 : index
    %c512_73 = arith.constant 512 : index
    %56 = vector.load %arg17[%c0_72, %c512_73] : memref<2x2048xf32, #tpu.memory_space<vmem>>, vector<2x128xf32>
    tpu.vector_store %arg17[%c0_72, %c512_73], %55 {strides = array<i32>} : memref<2x2048xf32, #tpu.memory_space<vmem>>, vector<2x128xf32>,
    %57 = vector.extract_strided_slice %41 {offsets = [0, 1, 1, 0], sizes = [2, 1, 1, 128], strides = [1, 1, 1, 1]} : vector<2x4x4x128xf32> to vector<2x1x1x128xf32>
    %58 = vector.shape_cast %57 : vector<2x1x1x128xf32> to vector<2x128xf32>
    %c0_74 = arith.constant 0 : index
    %c640 = arith.constant 640 : index
    %59 = vector.load %arg17[%c0_74, %c640] : memref<2x2048xf32, #tpu.memory_space<vmem>>, vector<2x128xf32>
    tpu.vector_store %arg17[%c0_74, %c640], %58 {strides = array<i32>} : memref<2x2048xf32, #tpu.memory_space<vmem>>, vector<2x128xf32>,
    %60 = vector.extract_strided_slice %41 {offsets = [0, 1, 2, 0], sizes = [2, 1, 1, 128], strides = [1, 1, 1, 1]} : vector<2x4x4x128xf32> to vector<2x1x1x128xf32>
    %61 = vector.shape_cast %60 : vector<2x1x1x128xf32> to vector<2x128xf32>
    %c0_75 = arith.constant 0 : index
    %c768 = arith.constant 768 : index
    %62 = vector.load %arg17[%c0_75, %c768] : memref<2x2048xf32, #tpu.memory_space<vmem>>, vector<2x128xf32>
    tpu.vector_store %arg17[%c0_75, %c768], %61 {strides = array<i32>} : memref<2x2048xf32, #tpu.memory_space<vmem>>, vector<2x128xf32>,
    %63 = vector.extract_strided_slice %41 {offsets = [0, 1, 3, 0], sizes = [2, 1, 1, 128], strides = [1, 1, 1, 1]} : vector<2x4x4x128xf32> to vector<2x1x1x128xf32>
    %64 = vector.shape_cast %63 : vector<2x1x1x128xf32> to vector<2x128xf32>
    %c0_76 = arith.constant 0 : index
    %c896 = arith.constant 896 : index
    %65 = vector.load %arg17[%c0_76, %c896] : memref<2x2048xf32, #tpu.memory_space<vmem>>, vector<2x128xf32>
    tpu.vector_store %arg17[%c0_76, %c896], %64 {strides = array<i32>} : memref<2x2048xf32, #tpu.memory_space<vmem>>, vector<2x128xf32>,
    %66 = vector.extract_strided_slice %41 {offsets = [0, 2, 0, 0], sizes = [2, 1, 1, 128], strides = [1, 1, 1, 1]} : vector<2x4x4x128xf32> to vector<2x1x1x128xf32>
    %67 = vector.shape_cast %66 : vector<2x1x1x128xf32> to vector<2x128xf32>
    %c0_77 = arith.constant 0 : index
    %c1024 = arith.constant 1024 : index
    %68 = vector.load %arg17[%c0_77, %c1024] : memref<2x2048xf32, #tpu.memory_space<vmem>>, vector<2x128xf32>
    tpu.vector_store %arg17[%c0_77, %c1024], %67 {strides = array<i32>} : memref<2x2048xf32, #tpu.memory_space<vmem>>, vector<2x128xf32>,
    %69 = vector.extract_strided_slice %41 {offsets = [0, 2, 1, 0], sizes = [2, 1, 1, 128], strides = [1, 1, 1, 1]} : vector<2x4x4x128xf32> to vector<2x1x1x128xf32>
    %70 = vector.shape_cast %69 : vector<2x1x1x128xf32> to vector<2x128xf32>
    %c0_78 = arith.constant 0 : index
    %c1152 = arith.constant 1152 : index
    %71 = vector.load %arg17[%c0_78, %c1152] : memref<2x2048xf32, #tpu.memory_space<vmem>>, vector<2x128xf32>
    tpu.vector_store %arg17[%c0_78, %c1152], %70 {strides = array<i32>} : memref<2x2048xf32, #tpu.memory_space<vmem>>, vector<2x128xf32>,
    %72 = vector.extract_strided_slice %41 {offsets = [0, 2, 2, 0], sizes = [2, 1, 1, 128], strides = [1, 1, 1, 1]} : vector<2x4x4x128xf32> to vector<2x1x1x128xf32>
    %73 = vector.shape_cast %72 : vector<2x1x1x128xf32> to vector<2x128xf32>
    %c0_79 = arith.constant 0 : index
    %c1280 = arith.constant 1280 : index
    %74 = vector.load %arg17[%c0_79, %c1280] : memref<2x2048xf32, #tpu.memory_space<vmem>>, vector<2x128xf32>
    tpu.vector_store %arg17[%c0_79, %c1280], %73 {strides = array<i32>} : memref<2x2048xf32, #tpu.memory_space<vmem>>, vector<2x128xf32>,
    %75 = vector.extract_strided_slice %41 {offsets = [0, 2, 3, 0], sizes = [2, 1, 1, 128], strides = [1, 1, 1, 1]} : vector<2x4x4x128xf32> to vector<2x1x1x128xf32>
    %76 = vector.shape_cast %75 : vector<2x1x1x128xf32> to vector<2x128xf32>
    %c0_80 = arith.constant 0 : index
    %c1408 = arith.constant 1408 : index
    %77 = vector.load %arg17[%c0_80, %c1408] : memref<2x2048xf32, #tpu.memory_space<vmem>>, vector<2x128xf32>
    tpu.vector_store %arg17[%c0_80, %c1408], %76 {strides = array<i32>} : memref<2x2048xf32, #tpu.memory_space<vmem>>, vector<2x128xf32>,
    %78 = vector.extract_strided_slice %41 {offsets = [0, 3, 0, 0], sizes = [2, 1, 1, 128], strides = [1, 1, 1, 1]} : vector<2x4x4x128xf32> to vector<2x1x1x128xf32>
    %79 = vector.shape_cast %78 : vector<2x1x1x128xf32> to vector<2x128xf32>
    %c0_81 = arith.constant 0 : index
    %c1536 = arith.constant 1536 : index
    %80 = vector.load %arg17[%c0_81, %c1536] : memref<2x2048xf32, #tpu.memory_space<vmem>>, vector<2x128xf32>
    tpu.vector_store %arg17[%c0_81, %c1536], %79 {strides = array<i32>} : memref<2x2048xf32, #tpu.memory_space<vmem>>, vector<2x128xf32>,
    %81 = vector.extract_strided_slice %41 {offsets = [0, 3, 1, 0], sizes = [2, 1, 1, 128], strides = [1, 1, 1, 1]} : vector<2x4x4x128xf32> to vector<2x1x1x128xf32>
    %82 = vector.shape_cast %81 : vector<2x1x1x128xf32> to vector<2x128xf32>
    %c0_82 = arith.constant 0 : index
    %c1664 = arith.constant 1664 : index
    %83 = vector.load %arg17[%c0_82, %c1664] : memref<2x2048xf32, #tpu.memory_space<vmem>>, vector<2x128xf32>
    tpu.vector_store %arg17[%c0_82, %c1664], %82 {strides = array<i32>} : memref<2x2048xf32, #tpu.memory_space<vmem>>, vector<2x128xf32>,
    %84 = vector.extract_strided_slice %41 {offsets = [0, 3, 2, 0], sizes = [2, 1, 1, 128], strides = [1, 1, 1, 1]} : vector<2x4x4x128xf32> to vector<2x1x1x128xf32>
    %85 = vector.shape_cast %84 : vector<2x1x1x128xf32> to vector<2x128xf32>
    %c0_83 = arith.constant 0 : index
    %c1792 = arith.constant 1792 : index
    %86 = vector.load %arg17[%c0_83, %c1792] : memref<2x2048xf32, #tpu.memory_space<vmem>>, vector<2x128xf32>
    tpu.vector_store %arg17[%c0_83, %c1792], %85 {strides = array<i32>} : memref<2x2048xf32, #tpu.memory_space<vmem>>, vector<2x128xf32>,
    %87 = vector.extract_strided_slice %41 {offsets = [0, 3, 3, 0], sizes = [2, 1, 1, 128], strides = [1, 1, 1, 1]} : vector<2x4x4x128xf32> to vector<2x1x1x128xf32>
    %88 = vector.shape_cast %87 : vector<2x1x1x128xf32> to vector<2x128xf32>
    %c0_84 = arith.constant 0 : index
    %c1920 = arith.constant 1920 : index
    %89 = vector.load %arg17[%c0_84, %c1920] : memref<2x2048xf32, #tpu.memory_space<vmem>>, vector<2x128xf32>
    tpu.vector_store %arg17[%c0_84, %c1920], %88 {strides = array<i32>} : memref<2x2048xf32, #tpu.memory_space<vmem>>, vector<2x128xf32>,
    %c0_85 = arith.constant 0 : index
    %c0_86 = arith.constant 0 : index
    %90 = vector.load %arg17[%c0_85, %c0_86] : memref<2x2048xf32, #tpu.memory_space<vmem>>, vector<2x2048xf32>
    %c0_87 = arith.constant 0 : index
    %c0_88 = arith.constant 0 : index
    %91 = vector.load %arg4[%c0_87, %c0_88] : memref<2048x128xf32, #tpu.memory_space<vmem>>, vector<2048x128xf32>
    %cst_89 = arith.constant dense<0.000000e+00> : vector<2x128xf32>
    %92 = tpu.matmul %90, %91, %cst_89 {dimension_numbers = #tpu.dot_dimension_numbers<[1], [0], [0], [1], [0, 0, 1, 1], [], []>} : vector<2x2048xf32>, vector<2048x128xf32>, vector<2x128xf32> -> vector<2x128xf32>
    %c0_90 = arith.constant 0 : index
    %c0_91 = arith.constant 0 : index
    %93 = vector.load %arg5[%c0_90, %c0_91] : memref<1x128xf32, #tpu.memory_space<vmem>>, vector<1x128xf32>
    %94 = vector.broadcast %93 : vector<1x128xf32> to vector<2x128xf32>
    %95 = arith.addf %92, %94 : vector<2x128xf32>
    %cst_92 = arith.constant 0.000000e+00 : f32
    %96 = vector.broadcast %cst_92 : f32 to vector<2x128xf32>
    %97 = arith.maximumf %95, %96 : vector<2x128xf32>
    %c0_93 = arith.constant 0 : index
    %c0_94 = arith.constant 0 : index
    %98 = vector.load %arg6[%c0_93, %c0_94] : memref<128x128xf32, #tpu.memory_space<vmem>>, vector<128x128xf32>
    %cst_95 = arith.constant dense<0.000000e+00> : vector<2x128xf32>
    %99 = tpu.matmul %97, %98, %cst_95 {dimension_numbers = #tpu.dot_dimension_numbers<[1], [0], [0], [1], [0, 0, 1, 1], [], []>} : vector<2x128xf32>, vector<128x128xf32>, vector<2x128xf32> -> vector<2x128xf32>
    %c0_96 = arith.constant 0 : index
    %c0_97 = arith.constant 0 : index
    %100 = vector.load %arg7[%c0_96, %c0_97] : memref<1x128xf32, #tpu.memory_space<vmem>>, vector<1x128xf32>
    %101 = vector.broadcast %100 : vector<1x128xf32> to vector<2x128xf32>
    %102 = arith.addf %99, %101 : vector<2x128xf32>
    %cst_98 = arith.constant 0.000000e+00 : f32
    %103 = vector.broadcast %cst_98 : f32 to vector<2x128xf32>
    %104 = arith.maximumf %102, %103 : vector<2x128xf32>
    %c0_99 = arith.constant 0 : index
    %c0_100 = arith.constant 0 : index
    %105 = vector.load %arg8[%c0_99, %c0_100] : memref<128x128xf32, #tpu.memory_space<vmem>>, vector<128x128xf32>
    %cst_101 = arith.constant dense<0.000000e+00> : vector<2x128xf32>
    %106 = tpu.matmul %104, %105, %cst_101 {dimension_numbers = #tpu.dot_dimension_numbers<[1], [0], [0], [1], [0, 0, 1, 1], [], []>} : vector<2x128xf32>, vector<128x128xf32>, vector<2x128xf32> -> vector<2x128xf32>
    %c0_102 = arith.constant 0 : index
    %c0_103 = arith.constant 0 : index
    %107 = vector.load %arg9[%c0_102, %c0_103] : memref<1x128xf32, #tpu.memory_space<vmem>>, vector<1x128xf32>
    %108 = vector.broadcast %107 : vector<1x128xf32> to vector<2x128xf32>
    %109 = arith.addf %106, %108 : vector<2x128xf32>
    %cst_104 = arith.constant 0.000000e+00 : f32
    %110 = vector.broadcast %cst_104 : f32 to vector<2x128xf32>
    %111 = arith.maximumf %109, %110 : vector<2x128xf32>
    %c0_105 = arith.constant 0 : index
    %c0_106 = arith.constant 0 : index
    %112 = vector.load %arg10[%c0_105, %c0_106] : memref<128x128xf32, #tpu.memory_space<vmem>>, vector<128x128xf32>
    %cst_107 = arith.constant dense<0.000000e+00> : vector<2x128xf32>
    %113 = tpu.matmul %111, %112, %cst_107 {dimension_numbers = #tpu.dot_dimension_numbers<[1], [0], [0], [1], [0, 0, 1, 1], [], []>} : vector<2x128xf32>, vector<128x128xf32>, vector<2x128xf32> -> vector<2x128xf32>
    %c0_108 = arith.constant 0 : index
    %c0_109 = arith.constant 0 : index
    %114 = vector.load %arg11[%c0_108, %c0_109] : memref<1x128xf32, #tpu.memory_space<vmem>>, vector<1x128xf32>
    %115 = vector.broadcast %114 : vector<1x128xf32> to vector<2x128xf32>
    %116 = arith.addf %113, %115 : vector<2x128xf32>
    %cst_110 = arith.constant 0.000000e+00 : f32
    %117 = vector.broadcast %cst_110 : f32 to vector<2x128xf32>
    %118 = arith.maximumf %116, %117 : vector<2x128xf32>
    %c0_111 = arith.constant 0 : index
    %c0_112 = arith.constant 0 : index
    %119 = vector.load %arg12[%c0_111, %c0_112] : memref<128x1xf32, #tpu.memory_space<vmem>>, vector<128x1xf32>
    %cst_113 = arith.constant dense<0.000000e+00> : vector<2x1xf32>
    %120 = tpu.matmul %118, %119, %cst_113 {dimension_numbers = #tpu.dot_dimension_numbers<[1], [0], [0], [1], [0, 0, 1, 1], [], []>} : vector<2x128xf32>, vector<128x1xf32>, vector<2x1xf32> -> vector<2x1xf32>
    %c0_114 = arith.constant 0 : index
    %c0_115 = arith.constant 0 : index
    %121 = vector.load %arg13[%c0_114, %c0_115] : memref<1x1xf32, #tpu.memory_space<vmem>>, vector<1x1xf32>
    %122 = vector.broadcast %121 : vector<1x1xf32> to vector<2x1xf32>
    %123 = arith.addf %120, %122 : vector<2x1xf32>
    %124 = arith.negf %123 : vector<2x1xf32>
    %125 = math.exp %124 : vector<2x1xf32>
    %cst_116 = arith.constant 1.000000e+00 : f32
    %126 = vector.broadcast %cst_116 : f32 to vector<2x1xf32>
    %127 = arith.addf %126, %125 : vector<2x1xf32>
    %128 = arith.divf %126, %127 : vector<2x1xf32>
    %c0_117 = arith.constant 0 : index
    %c0_118 = arith.constant 0 : index
    %129 = vector.load %arg14[%c0_117, %c0_118] : memref<2x1xf32, #tpu.memory_space<vmem>>, vector<2x1xf32>
    tpu.vector_store %arg14[%c0_117, %c0_118], %128 {strides = array<i32>} : memref<2x1xf32, #tpu.memory_space<vmem>>, vector<2x1xf32>,
    return
  }
  func.func @transform_0(%arg0: i32) -> (i32, i32, i32, i32) {
    %c0_i32 = arith.constant 0 : i32
    %c0_i32_0 = arith.constant 0 : i32
    %c0_i32_1 = arith.constant 0 : i32
    %c0_i32_2 = arith.constant 0 : i32
    %c0_i32_3 = arith.constant 0 : i32
    return %c0_i32, %c0_i32_0, %c0_i32_1, %c0_i32_2 : i32, i32, i32, i32
  }
  func.func @transform_1(%arg0: i32) -> (i32, i32) {
    %c0_i32 = arith.constant 0 : i32
    %c0_i32_0 = arith.constant 0 : i32
    %c0_i32_1 = arith.constant 0 : i32
    return %c0_i32, %c0_i32_0 : i32, i32
  }
  func.func @transform_2(%arg0: i32) -> (i32, i32) {
    %c0_i32 = arith.constant 0 : i32
    %c0_i32_0 = arith.constant 0 : i32
    %c0_i32_1 = arith.constant 0 : i32
    return %c0_i32, %c0_i32_0 : i32, i32
  }
  func.func @transform_3(%arg0: i32) -> (i32, i32) {
    %c0_i32 = arith.constant 0 : i32
    %c0_i32_0 = arith.constant 0 : i32
    %c0_i32_1 = arith.constant 0 : i32
    return %c0_i32, %c0_i32_0 : i32, i32
  }
  func.func @transform_4(%arg0: i32) -> (i32, i32) {
    %c0_i32 = arith.constant 0 : i32
    %c0_i32_0 = arith.constant 0 : i32
    %c0_i32_1 = arith.constant 0 : i32
    return %c0_i32, %c0_i32_0 : i32, i32
  }
  func.func @transform_5(%arg0: i32) -> (i32, i32) {
    %c0_i32 = arith.constant 0 : i32
    %c0_i32_0 = arith.constant 0 : i32
    %c0_i32_1 = arith.constant 0 : i32
    return %c0_i32, %c0_i32_0 : i32, i32
  }
  func.func @transform_6(%arg0: i32) -> (i32, i32) {
    %c0_i32 = arith.constant 0 : i32
    %c0_i32_0 = arith.constant 0 : i32
    %c0_i32_1 = arith.constant 0 : i32
    return %c0_i32, %c0_i32_0 : i32, i32
  }
  func.func @transform_7(%arg0: i32) -> (i32, i32) {
    %c0_i32 = arith.constant 0 : i32
    %c0_i32_0 = arith.constant 0 : i32
    %c0_i32_1 = arith.constant 0 : i32
    return %c0_i32, %c0_i32_0 : i32, i32
  }
  func.func @transform_8(%arg0: i32) -> (i32, i32) {
    %c0_i32 = arith.constant 0 : i32
    %c0_i32_0 = arith.constant 0 : i32
    %c0_i32_1 = arith.constant 0 : i32
    return %c0_i32, %c0_i32_0 : i32, i32
  }
  func.func @transform_9(%arg0: i32) -> (i32, i32) {
    %c0_i32 = arith.constant 0 : i32
    %c0_i32_0 = arith.constant 0 : i32
    %c0_i32_1 = arith.constant 0 : i32
    return %c0_i32, %c0_i32_0 : i32, i32
  }
  func.func @transform_10(%arg0: i32) -> (i32, i32) {
    %c0_i32 = arith.constant 0 : i32
    %c0_i32_0 = arith.constant 0 : i32
    %c0_i32_1 = arith.constant 0 : i32
    return %c0_i32, %c0_i32_0 : i32, i32
  }
  func.func @transform_11(%arg0: i32) -> (i32, i32) {
    %c0_i32 = arith.constant 0 : i32
    %c0_i32_0 = arith.constant 0 : i32
    %c0_i32_1 = arith.constant 0 : i32
    return %c0_i32, %c0_i32_0 : i32, i32
  }
  func.func @transform_12(%arg0: i32) -> (i32, i32) {
    %c0_i32 = arith.constant 0 : i32
    %c0_i32_0 = arith.constant 0 : i32
    %c0_i32_1 = arith.constant 0 : i32
    return %c0_i32, %c0_i32_0 : i32, i32
  }
  func.func @transform_13(%arg0: i32) -> (i32, i32) {
    %c0_i32 = arith.constant 0 : i32
    %c0_i32_0 = arith.constant 0 : i32
    %c0_i32_1 = arith.constant 0 : i32
    return %c0_i32, %c0_i32_0 : i32, i32
  }
}

</mosaic_0001>

<llo_original>
// kernel: tpu_custom_call.1
$region0: #{tpu_custom_call.1}
  #allocation0 [shape = 'u32[]', space=smem, size = 0x4, offset = 0x4, fixed_abs, tag = 'smem constant byte address 0x4 - core index']
  #allocation1 [shape = 'u32[144,128]{1,0:T(1,128)}', space=vmem, size = 0x12000, scoped, tag = 'internal scratch']
  #allocation2 [shape = 'f32[2,10,10,64]{3,2,1,0:T(8,128)}', space=vmem, size = 0x28000, scoped, tag = 'scratch operand']
  #allocation3 [shape = 'f32[128,576]{1,0:T(8,128)}', space=vmem, size = 0x50000, scoped, tag = 'scratch operand']
  #allocation4 [shape = 'f32[2,2048]{1,0:T(2,128)}', space=vmem, size = 0x4000, scoped, tag = 'scratch operand']
  #allocation5 [shape = 'f32[1,1]{1,0:T(1,128)S(1)}', space=vmem, size = 0x200, scoped, tag = 'scoped memory for tpu_custom_call.1']
  %s0 = inlined_call_operand.vmem [shape: f32[2,8,8,64], index: 0, kind: input, shape index: {}]
  %s1 = inlined_call_operand.hbm [shape: f32[576,128], index: 1, kind: input, shape index: {}]
  %s2 = inlined_call_operand.vmem [shape: f32[1,128], index: 2, kind: input, shape index: {}]
  %s3 = inlined_call_operand.hbm [shape: f32[2048,128], index: 3, kind: input, shape index: {}]
  %s4 = inlined_call_operand.vmem [shape: f32[1,128], index: 4, kind: input, shape index: {}]
  %s5 = inlined_call_operand.hbm [shape: f32[128,128], index: 5, kind: input, shape index: {}]
  %s6 = inlined_call_operand.vmem [shape: f32[1,128], index: 6, kind: input, shape index: {}]
  %s7 = inlined_call_operand.hbm [shape: f32[128,128], index: 7, kind: input, shape index: {}]
  %s8 = inlined_call_operand.vmem [shape: f32[1,128], index: 8, kind: input, shape index: {}]
  %s9 = inlined_call_operand.hbm [shape: f32[128,128], index: 9, kind: input, shape index: {}]
  %s10 = inlined_call_operand.vmem [shape: f32[1,128], index: 10, kind: input, shape index: {}]
  %s11 = inlined_call_operand.vmem [shape: f32[128,1], index: 11, kind: input, shape index: {}]
  %s12 = inlined_call_operand.<no memory space> [shape: f32[1,1], index: 12, kind: input, shape index: {}]
  %s13 = inlined_call_operand.vmem [shape: f32[2,1], index: 13, kind: output, shape index: {}]
  %s14 = sld [smem:[#allocation0]]
  $region82: #{tpu_custom_call.1} parent=0
    _
  %s16 = ssub.s32 1, %s14
  %s17 = scalar_select 0, %s16, %s14
  %v18 = vstv %s12
  %19 = vst [vmem:[#allocation5] sm:$0x1] %v18
  $region1: #{tpu_custom_call.1} parent=0
    #allocation6 [shape = 'u8[294912]{0}', space=vmem, size = 0x48000, scoped, tag = 'input window, operand 1, single buffered']
    #allocation7 [shape = 's32[1]{0}', space=sflag, size = 0x4, scoped, tag = 'scoped memory for tpu_custom_call.1']
    #allocation8 [shape = 'u8[1048576]{0}', space=vmem, size = 0x100000, scoped, tag = 'input window, operand 3, single buffered']
    #allocation9 [shape = 's32[1]{0}', space=sflag, size = 0x4, scoped, tag = 'scoped memory for tpu_custom_call.1']
    #allocation10 [shape = 'u8[65536]{0}', space=vmem, size = 0x10000, scoped, tag = 'input window, operand 5, single buffered']
    #allocation11 [shape = 'u8[65536]{0}', space=vmem, size = 0x10000, scoped, tag = 'input window, operand 7, single buffered']
    #allocation12 [shape = 's32[1]{0}', space=sflag, size = 0x4, scoped, tag = 'scoped memory for tpu_custom_call.1']
    #allocation13 [shape = 'u8[65536]{0}', space=vmem, size = 0x10000, scoped, tag = 'input window, operand 9, single buffered']
    %20 = vsyncpa [#allocation7], 0
    %21 = vsyncpa [#allocation9], 0
    %22 = vsyncpa [#allocation12], 0
    // Predicated region
    $region2: #{tpu_custom_call.1} parent=1 // pred_check
      _
    $region3: #{tpu_custom_call.1} parent=1 // pred_check_branch
      %24 = sbr.rel (0) target = $region5
    $region4: #{tpu_custom_call.1} parent=1 // pred_region
      _
    $region5: #{tpu_custom_call.1} parent=1 // pred_fallthru
      _
    // Predicated region
    $region6: #{tpu_custom_call.1} parent=1 // pred_check
      _
    $region7: #{tpu_custom_call.1} parent=1 // pred_check_branch
      %26 = sbr.rel (0) target = $region9
    $region8: #{tpu_custom_call.1} parent=1 // pred_region
      %s28 = ssub.s32 9216, 9216
      %29 = vsyncadd [#allocation7], %s28
      %s30 = sshll.u32 [#allocation6], 4
      %s31 = int_to_ptr.vmem [resolvable:$true] %s30
      %36 = dma.hbm_to_vmem [thread:$0]  %s1, 9216, %s31, [#allocation7], 128, 128, 8
    $region9: #{tpu_custom_call.1} parent=1 // pred_fallthru
      _
    // Predicated region
    $region10: #{tpu_custom_call.1} parent=1 // pred_check
      _
    $region11: #{tpu_custom_call.1} parent=1 // pred_check_branch
      %38 = sbr.rel (0) target = $region13
    $region12: #{tpu_custom_call.1} parent=1 // pred_region
      _
    $region13: #{tpu_custom_call.1} parent=1 // pred_fallthru
      _
    // Predicated region
    $region14: #{tpu_custom_call.1} parent=1 // pred_check
      _
    $region15: #{tpu_custom_call.1} parent=1 // pred_check_branch
      %40 = sbr.rel (0) target = $region17
    $region16: #{tpu_custom_call.1} parent=1 // pred_region
      %s42 = ssub.s32 32768, 32768
      %43 = vsyncadd [#allocation9], %s42
      %s44 = sshll.u32 [#allocation8], 4
      %s45 = int_to_ptr.vmem [resolvable:$true] %s44
      %50 = dma.hbm_to_vmem [thread:$0]  %s3, 32768, %s45, [#allocation9], 128, 128, 8
    $region17: #{tpu_custom_call.1} parent=1 // pred_fallthru
      _
    // Predicated region
    $region18: #{tpu_custom_call.1} parent=1 // pred_check
      _
    $region19: #{tpu_custom_call.1} parent=1 // pred_check_branch
      %52 = sbr.rel (0) target = $region21
    $region20: #{tpu_custom_call.1} parent=1 // pred_region
      _
    $region21: #{tpu_custom_call.1} parent=1 // pred_fallthru
      _
    // Predicated region
    $region22: #{tpu_custom_call.1} parent=1 // pred_check
      _
    $region23: #{tpu_custom_call.1} parent=1 // pred_check_branch
      %54 = sbr.rel (0) target = $region25
    $region24: #{tpu_custom_call.1} parent=1 // pred_region
      %s56 = ssub.s32 2048, 2048
      %57 = vsyncadd [#allocation9], %s56
      %s58 = sshll.u32 [#allocation10], 4
      %s59 = int_to_ptr.vmem [resolvable:$true] %s58
      %64 = dma.hbm_to_vmem [thread:$0]  %s5, 2048, %s59, [#allocation9], 128, 128, 8
    $region25: #{tpu_custom_call.1} parent=1 // pred_fallthru
      _
    // Predicated region
    $region26: #{tpu_custom_call.1} parent=1 // pred_check
      _
    $region27: #{tpu_custom_call.1} parent=1 // pred_check_branch
      %66 = sbr.rel (0) target = $region29
    $region28: #{tpu_custom_call.1} parent=1 // pred_region
      _
    $region29: #{tpu_custom_call.1} parent=1 // pred_fallthru
      _
    // Predicated region
    $region30: #{tpu_custom_call.1} parent=1 // pred_check
      _
    $region31: #{tpu_custom_call.1} parent=1 // pred_check_branch
      %68 = sbr.rel (0) target = $region33
    $region32: #{tpu_custom_call.1} parent=1 // pred_region
      %s70 = ssub.s32 2048, 2048
      %71 = vsyncadd [#allocation12], %s70
      %s72 = sshll.u32 [#allocation11], 4
      %s73 = int_to_ptr.vmem [resolvable:$true] %s72
      %78 = dma.hbm_to_vmem [thread:$0]  %s7, 2048, %s73, [#allocation12], 128, 128, 8
    $region33: #{tpu_custom_call.1} parent=1 // pred_fallthru
      _
    // Predicated region
    $region34: #{tpu_custom_call.1} parent=1 // pred_check
      _
    $region35: #{tpu_custom_call.1} parent=1 // pred_check_branch
      %80 = sbr.rel (0) target = $region37
    $region36: #{tpu_custom_call.1} parent=1 // pred_region
      _
    $region37: #{tpu_custom_call.1} parent=1 // pred_fallthru
      _
    // Predicated region
    $region38: #{tpu_custom_call.1} parent=1 // pred_check
      _
    $region39: #{tpu_custom_call.1} parent=1 // pred_check_branch
      %82 = sbr.rel (0) target = $region41
    $region40: #{tpu_custom_call.1} parent=1 // pred_region
      %s84 = ssub.s32 2048, 2048
      %85 = vsyncadd [#allocation12], %s84
      %s86 = sshll.u32 [#allocation13], 4
      %s87 = int_to_ptr.vmem [resolvable:$true] %s86
      %92 = dma.hbm_to_vmem [thread:$0]  %s9, 2048, %s87, [#allocation12], 128, 128, 8
    $region41: #{tpu_custom_call.1} parent=1 // pred_fallthru
      _
    // Predicated region
    $region42: #{tpu_custom_call.1} parent=1 // pred_check
      _
    $region43: #{tpu_custom_call.1} parent=1 // pred_check_branch
      %94 = sbr.rel (0) target = $region45
    $region44: #{tpu_custom_call.1} parent=1 // pred_region
      _
    $region45: #{tpu_custom_call.1} parent=1 // pred_fallthru
      _
    // Predicated region
    $region46: #{tpu_custom_call.1} parent=1 // pred_check
      _
    $region47: #{tpu_custom_call.1} parent=1 // pred_check_branch
      %96 = sbr.rel (0) target = $region49
    $region48: #{tpu_custom_call.1} parent=1 // pred_region
      _
    $region49: #{tpu_custom_call.1} parent=1 // pred_fallthru
      _
    // Predicated region
    $region50: #{tpu_custom_call.1} parent=1 // pred_check
      _
    $region51: #{tpu_custom_call.1} parent=1 // pred_check_branch
      %98 = sbr.rel (0) target = $region53
    $region52: #{tpu_custom_call.1} parent=1 // pred_region
      _
    $region53: #{tpu_custom_call.1} parent=1 // pred_fallthru
      _
    // Predicated region
    $region54: #{tpu_custom_call.1} parent=1 // pred_check
      _
    $region55: #{tpu_custom_call.1} parent=1 // pred_check_branch
      %100 = sbr.rel (0) target = $region57
    $region56: #{tpu_custom_call.1} parent=1 // pred_region
      %101 = dma.done [#allocation7], 9216
    $region57: #{tpu_custom_call.1} parent=1 // pred_fallthru
      _
    // Predicated region
    $region58: #{tpu_custom_call.1} parent=1 // pred_check
      _
    $region59: #{tpu_custom_call.1} parent=1 // pred_check_branch
      %103 = sbr.rel (0) target = $region61
    $region60: #{tpu_custom_call.1} parent=1 // pred_region
      %104 = dma.done [#allocation9], 32768
    $region61: #{tpu_custom_call.1} parent=1 // pred_fallthru
      _
    // Predicated region
    $region62: #{tpu_custom_call.1} parent=1 // pred_check
      _
    $region63: #{tpu_custom_call.1} parent=1 // pred_check_branch
      %106 = sbr.rel (0) target = $region65
    $region64: #{tpu_custom_call.1} parent=1 // pred_region
      %107 = dma.done [#allocation9], 2048
    $region65: #{tpu_custom_call.1} parent=1 // pred_fallthru
      _
    // Predicated region
    $region66: #{tpu_custom_call.1} parent=1 // pred_check
      _
    $region67: #{tpu_custom_call.1} parent=1 // pred_check_branch
      %109 = sbr.rel (0) target = $region69
    $region68: #{tpu_custom_call.1} parent=1 // pred_region
      %110 = dma.done [#allocation12], 2048
    $region69: #{tpu_custom_call.1} parent=1 // pred_fallthru
      _
    // Predicated region
    $region70: #{tpu_custom_call.1} parent=1 // pred_check
      _
    $region71: #{tpu_custom_call.1} parent=1 // pred_check_branch
      %112 = sbr.rel (0) target = $region73
    $region72: #{tpu_custom_call.1} parent=1 // pred_region
      %113 = dma.done [#allocation12], 2048
    $region73: #{tpu_custom_call.1} parent=1 // pred_fallthru
      _
    %vm114 = vcmask 523264
    %115 = vst.msk [vmem:[#allocation2] sm:$0xff] %vm114, 0.0
    %vm116 = vcmask 517120
    %117 = vst.msk [vmem:[#allocation2 + $0x8] sm:$0x3] %vm116, 0.0
    %118 = vst.msk [vmem:[#allocation2 + $0x10] sm:$0xff] %vm114, 0.0
    %119 = vst.msk [vmem:[#allocation2 + $0x18] sm:$0x3] %vm116, 0.0
    %120 = vst.msk [vmem:[#allocation2 + $0x20] sm:$0xff] %vm114, 0.0
    %121 = vst.msk [vmem:[#allocation2 + $0x28] sm:$0x3] %vm116, 0.0
    %122 = vst.msk [vmem:[#allocation2 + $0x30] sm:$0xff] %vm114, 0.0
    %123 = vst.msk [vmem:[#allocation2 + $0x38] sm:$0x3] %vm116, 0.0
    %124 = vst.msk [vmem:[#allocation2 + $0x40] sm:$0xff] %vm114, 0.0
    %125 = vst.msk [vmem:[#allocation2 + $0x48] sm:$0x3] %vm116, 0.0
    %126 = vst.msk [vmem:[#allocation2 + $0x50] sm:$0xff] %vm114, 0.0
    %127 = vst.msk [vmem:[#allocation2 + $0x58] sm:$0x3] %vm116, 0.0
    %128 = vst.msk [vmem:[#allocation2 + $0x60] sm:$0xff] %vm114, 0.0
    %129 = vst.msk [vmem:[#allocation2 + $0x68] sm:$0x3] %vm116, 0.0
    %130 = vst.msk [vmem:[#allocation2 + $0x70] sm:$0xff] %vm114, 0.0
    %131 = vst.msk [vmem:[#allocation2 + $0x78] sm:$0x3] %vm116, 0.0
    %132 = vst.msk [vmem:[#allocation2 + $0x80] sm:$0xff] %vm114, 0.0
    %133 = vst.msk [vmem:[#allocation2 + $0x88] sm:$0x3] %vm116, 0.0
    %134 = vst.msk [vmem:[#allocation2 + $0x90] sm:$0xff] %vm114, 0.0
    %135 = vst.msk [vmem:[#allocation2 + $0x98] sm:$0x3] %vm116, 0.0
    %136 = vst.msk [vmem:[#allocation2 + $0xa0] sm:$0xff] %vm114, 0.0
    %137 = vst.msk [vmem:[#allocation2 + $0xa8] sm:$0x3] %vm116, 0.0
    %138 = vst.msk [vmem:[#allocation2 + $0xb0] sm:$0xff] %vm114, 0.0
    %139 = vst.msk [vmem:[#allocation2 + $0xb8] sm:$0x3] %vm116, 0.0
    %140 = vst.msk [vmem:[#allocation2 + $0xc0] sm:$0xff] %vm114, 0.0
    %141 = vst.msk [vmem:[#allocation2 + $0xc8] sm:$0x3] %vm116, 0.0
    %142 = vst.msk [vmem:[#allocation2 + $0xd0] sm:$0xff] %vm114, 0.0
    %143 = vst.msk [vmem:[#allocation2 + $0xd8] sm:$0x3] %vm116, 0.0
    %144 = vst.msk [vmem:[#allocation2 + $0xe0] sm:$0xff] %vm114, 0.0
    %145 = vst.msk [vmem:[#allocation2 + $0xe8] sm:$0x3] %vm116, 0.0
    %146 = vst.msk [vmem:[#allocation2 + $0xf0] sm:$0xff] %vm114, 0.0
    %147 = vst.msk [vmem:[#allocation2 + $0xf8] sm:$0x3] %vm116, 0.0
    %148 = vst.msk [vmem:[#allocation2 + $0x100] sm:$0xff] %vm114, 0.0
    %149 = vst.msk [vmem:[#allocation2 + $0x108] sm:$0x3] %vm116, 0.0
    %150 = vst.msk [vmem:[#allocation2 + $0x110] sm:$0xff] %vm114, 0.0
    %151 = vst.msk [vmem:[#allocation2 + $0x118] sm:$0x3] %vm116, 0.0
    %152 = vst.msk [vmem:[#allocation2 + $0x120] sm:$0xff] %vm114, 0.0
    %153 = vst.msk [vmem:[#allocation2 + $0x128] sm:$0x3] %vm116, 0.0
    %154 = vst.msk [vmem:[#allocation2 + $0x130] sm:$0xff] %vm114, 0.0
    %155 = vst.msk [vmem:[#allocation2 + $0x138] sm:$0x3] %vm116, 0.0
    %v156 = vld [vmem:[%s0] sm:$0xff]
    %v157 = vld [vmem:[%s0 + $0x8] sm:$0xff]
    %v158 = vld [vmem:[%s0 + $0x10] sm:$0xff]
    %v159 = vld [vmem:[%s0 + $0x18] sm:$0xff]
    %v160 = vld [vmem:[%s0 + $0x20] sm:$0xff]
    %v161 = vld [vmem:[%s0 + $0x28] sm:$0xff]
    %v162 = vld [vmem:[%s0 + $0x30] sm:$0xff]
    %v163 = vld [vmem:[%s0 + $0x38] sm:$0xff]
    %v164 = vld [vmem:[%s0 + $0x40] sm:$0xff]
    %v165 = vld [vmem:[%s0 + $0x48] sm:$0xff]
    %v166 = vld [vmem:[%s0 + $0x50] sm:$0xff]
    %v167 = vld [vmem:[%s0 + $0x58] sm:$0xff]
    %v168 = vld [vmem:[%s0 + $0x60] sm:$0xff]
    %v169 = vld [vmem:[%s0 + $0x68] sm:$0xff]
    %v170 = vld [vmem:[%s0 + $0x70] sm:$0xff]
    %v171 = vld [vmem:[%s0 + $0x78] sm:$0xff]
    %s172 = scalar_lea.vmem [#allocation2], 16
    %173 = vst.msk [vmem:[%s172 + $0x1] sm:$0xff] %vm114, %v156
    %174 = vst.msk [vmem:[%s172 + $0x11] sm:$0xff] %vm114, %v157
    %175 = vst.msk [vmem:[%s172 + $0x21] sm:$0xff] %vm114, %v158
    %176 = vst.msk [vmem:[%s172 + $0x31] sm:$0xff] %vm114, %v159
    %177 = vst.msk [vmem:[%s172 + $0x41] sm:$0xff] %vm114, %v160
    %178 = vst.msk [vmem:[%s172 + $0x51] sm:$0xff] %vm114, %v161
    %179 = vst.msk [vmem:[%s172 + $0x61] sm:$0xff] %vm114, %v162
    %180 = vst.msk [vmem:[%s172 + $0x71] sm:$0xff] %vm114, %v163
    %181 = vst.msk [vmem:[%s172 + $0xa1] sm:$0xff] %vm114, %v164
    %182 = vst.msk [vmem:[%s172 + $0xb1] sm:$0xff] %vm114, %v165
    %183 = vst.msk [vmem:[%s172 + $0xc1] sm:$0xff] %vm114, %v166
    %184 = vst.msk [vmem:[%s172 + $0xd1] sm:$0xff] %vm114, %v167
    %185 = vst.msk [vmem:[%s172 + $0xe1] sm:$0xff] %vm114, %v168
    %186 = vst.msk [vmem:[%s172 + $0xf1] sm:$0xff] %vm114, %v169
    %187 = vst.msk [vmem:[%s172 + $0x101] sm:$0xff] %vm114, %v170
    %188 = vst.msk [vmem:[%s172 + $0x111] sm:$0xff] %vm114, %v171
    %v189 = vld [vmem:[#allocation2] sm:$0xff]
    %v190 = vld [vmem:[#allocation2 + $0x10] sm:$0xff]
    %v191 = vld [vmem:[#allocation2 + $0x20] sm:$0xff]
    %v192 = vld [vmem:[#allocation2 + $0x30] sm:$0xff]
    %v193 = vld [vmem:[#allocation2 + $0x40] sm:$0xff]
    %v194 = vld [vmem:[#allocation2 + $0x50] sm:$0xff]
    %v195 = vld [vmem:[#allocation2 + $0x60] sm:$0xff]
    %v196 = vld [vmem:[#allocation2 + $0x70] sm:$0xff]
    %v197 = vld [vmem:[#allocation2 + $0xa0] sm:$0xff]
    %v198 = vld [vmem:[#allocation2 + $0xb0] sm:$0xff]
    %v199 = vld [vmem:[#allocation2 + $0xc0] sm:$0xff]
    %v200 = vld [vmem:[#allocation2 + $0xd0] sm:$0xff]
    %v201 = vld [vmem:[#allocation2 + $0xe0] sm:$0xff]
    %v202 = vld [vmem:[#allocation2 + $0xf0] sm:$0xff]
    %v203 = vld [vmem:[#allocation2 + $0x100] sm:$0xff]
    %v204 = vld [vmem:[#allocation2 + $0x110] sm:$0xff]
    %205 = vst.msk [vmem:[#allocation3] sm:$0xff] %vm114, %v189
    %206 = vst.msk [vmem:[#allocation3 + $0x28] sm:$0xff] %vm114, %v190
    %207 = vst.msk [vmem:[#allocation3 + $0x50] sm:$0xff] %vm114, %v191
    %208 = vst.msk [vmem:[#allocation3 + $0x78] sm:$0xff] %vm114, %v192
    %209 = vst.msk [vmem:[#allocation3 + $0xa0] sm:$0xff] %vm114, %v193
    %210 = vst.msk [vmem:[#allocation3 + $0xc8] sm:$0xff] %vm114, %v194
    %211 = vst.msk [vmem:[#allocation3 + $0xf0] sm:$0xff] %vm114, %v195
    %212 = vst.msk [vmem:[#allocation3 + $0x118] sm:$0xff] %vm114, %v196
    %213 = vst.msk [vmem:[#allocation3 + $0x140] sm:$0xff] %vm114, %v197
    %214 = vst.msk [vmem:[#allocation3 + $0x168] sm:$0xff] %vm114, %v198
    %215 = vst.msk [vmem:[#allocation3 + $0x190] sm:$0xff] %vm114, %v199
    %216 = vst.msk [vmem:[#allocation3 + $0x1b8] sm:$0xff] %vm114, %v200
    %217 = vst.msk [vmem:[#allocation3 + $0x1e0] sm:$0xff] %vm114, %v201
    %218 = vst.msk [vmem:[#allocation3 + $0x208] sm:$0xff] %vm114, %v202
    %219 = vst.msk [vmem:[#allocation3 + $0x230] sm:$0xff] %vm114, %v203
    %220 = vst.msk [vmem:[#allocation3 + $0x258] sm:$0xff] %vm114, %v204
    %v221 = vld [vmem:[#allocation2 + $0x1] sm:$0xff]
    %v222 = vld [vmem:[#allocation2 + $0x11] sm:$0xff]
    %v223 = vld [vmem:[#allocation2 + $0x21] sm:$0xff]
    %v224 = vld [vmem:[#allocation2 + $0x31] sm:$0xff]
    %v225 = vld [vmem:[#allocation2 + $0x41] sm:$0xff]
    %v226 = vld [vmem:[#allocation2 + $0x51] sm:$0xff]
    %v227 = vld [vmem:[#allocation2 + $0x61] sm:$0xff]
    %v228 = vld [vmem:[#allocation2 + $0x71] sm:$0xff]
    %v229 = vld [vmem:[#allocation2 + $0xa1] sm:$0xff]
    %v230 = vld [vmem:[#allocation2 + $0xb1] sm:$0xff]
    %v231 = vld [vmem:[#allocation2 + $0xc1] sm:$0xff]
    %v232 = vld [vmem:[#allocation2 + $0xd1] sm:$0xff]
    %v233 = vld [vmem:[#allocation2 + $0xe1] sm:$0xff]
    %v234 = vld [vmem:[#allocation2 + $0xf1] sm:$0xff]
    %v235 = vld [vmem:[#allocation2 + $0x101] sm:$0xff]
    %v236 = vld [vmem:[#allocation2 + $0x111] sm:$0xff]
    %253 = vrot.lane.b32.xlu0 %v221, 64
    %v254 = vpop.permute.xlu0 %253
    %255 = vrot.lane.b32.xlu0 %v222, 64
    %v256 = vpop.permute.xlu0 %255
    %257 = vrot.lane.b32.xlu0 %v223, 64
    %v258 = vpop.permute.xlu0 %257
    %259 = vrot.lane.b32.xlu0 %v224, 64
    %v260 = vpop.permute.xlu0 %259
    %261 = vrot.lane.b32.xlu0 %v225, 64
    %v262 = vpop.permute.xlu0 %261
    %263 = vrot.lane.b32.xlu0 %v226, 64
    %v264 = vpop.permute.xlu0 %263
    %265 = vrot.lane.b32.xlu0 %v227, 64
    %v266 = vpop.permute.xlu0 %265
    %267 = vrot.lane.b32.xlu0 %v228, 64
    %v268 = vpop.permute.xlu0 %267
    %269 = vrot.lane.b32.xlu0 %v229, 64
    %v270 = vpop.permute.xlu0 %269
    %271 = vrot.lane.b32.xlu0 %v230, 64
    %v272 = vpop.permute.xlu0 %271
    %273 = vrot.lane.b32.xlu0 %v231, 64
    %v274 = vpop.permute.xlu0 %273
    %275 = vrot.lane.b32.xlu0 %v232, 64
    %v276 = vpop.permute.xlu0 %275
    %277 = vrot.lane.b32.xlu0 %v233, 64
    %v278 = vpop.permute.xlu0 %277
    %279 = vrot.lane.b32.xlu0 %v234, 64
    %v280 = vpop.permute.xlu0 %279
    %281 = vrot.lane.b32.xlu0 %v235, 64
    %v282 = vpop.permute.xlu0 %281
    %283 = vrot.lane.b32.xlu0 %v236, 64
    %v284 = vpop.permute.xlu0 %283
    %vm301 = vcmask 1048064
    %302 = vst.msk [vmem:[#allocation3] sm:$0xff] %vm301, %v254
    %303 = vst.msk [vmem:[#allocation3 + $0x28] sm:$0xff] %vm301, %v256
    %304 = vst.msk [vmem:[#allocation3 + $0x50] sm:$0xff] %vm301, %v258
    %305 = vst.msk [vmem:[#allocation3 + $0x78] sm:$0xff] %vm301, %v260
    %306 = vst.msk [vmem:[#allocation3 + $0xa0] sm:$0xff] %vm301, %v262
    %307 = vst.msk [vmem:[#allocation3 + $0xc8] sm:$0xff] %vm301, %v264
    %308 = vst.msk [vmem:[#allocation3 + $0xf0] sm:$0xff] %vm301, %v266
    %309 = vst.msk [vmem:[#allocation3 + $0x118] sm:$0xff] %vm301, %v268
    %310 = vst.msk [vmem:[#allocation3 + $0x140] sm:$0xff] %vm301, %v270
    %311 = vst.msk [vmem:[#allocation3 + $0x168] sm:$0xff] %vm301, %v272
    %312 = vst.msk [vmem:[#allocation3 + $0x190] sm:$0xff] %vm301, %v274
    %313 = vst.msk [vmem:[#allocation3 + $0x1b8] sm:$0xff] %vm301, %v276
    %314 = vst.msk [vmem:[#allocation3 + $0x1e0] sm:$0xff] %vm301, %v278
    %315 = vst.msk [vmem:[#allocation3 + $0x208] sm:$0xff] %vm301, %v280
    %316 = vst.msk [vmem:[#allocation3 + $0x230] sm:$0xff] %vm301, %v282
    %317 = vst.msk [vmem:[#allocation3 + $0x258] sm:$0xff] %vm301, %v284
    %v318 = vld [vmem:[#allocation2 + $0x2] sm:$0xff]
    %v319 = vld [vmem:[#allocation2 + $0x12] sm:$0xff]
    %v320 = vld [vmem:[#allocation2 + $0x22] sm:$0xff]
    %v321 = vld [vmem:[#allocation2 + $0x32] sm:$0xff]
    %v322 = vld [vmem:[#allocation2 + $0x42] sm:$0xff]
    %v323 = vld [vmem:[#allocation2 + $0x52] sm:$0xff]
    %v324 = vld [vmem:[#allocation2 + $0x62] sm:$0xff]
    %v325 = vld [vmem:[#allocation2 + $0x72] sm:$0xff]
    %v326 = vld [vmem:[#allocation2 + $0xa2] sm:$0xff]
    %v327 = vld [vmem:[#allocation2 + $0xb2] sm:$0xff]
    %v328 = vld [vmem:[#allocation2 + $0xc2] sm:$0xff]
    %v329 = vld [vmem:[#allocation2 + $0xd2] sm:$0xff]
    %v330 = vld [vmem:[#allocation2 + $0xe2] sm:$0xff]
    %v331 = vld [vmem:[#allocation2 + $0xf2] sm:$0xff]
    %v332 = vld [vmem:[#allocation2 + $0x102] sm:$0xff]
    %v333 = vld [vmem:[#allocation2 + $0x112] sm:$0xff]
    %334 = vst.msk [vmem:[#allocation3 + $0x8] sm:$0xff] %vm114, %v318
    %335 = vst.msk [vmem:[#allocation3 + $0x30] sm:$0xff] %vm114, %v319
    %336 = vst.msk [vmem:[#allocation3 + $0x58] sm:$0xff] %vm114, %v320
    %337 = vst.msk [vmem:[#allocation3 + $0x80] sm:$0xff] %vm114, %v321
    %338 = vst.msk [vmem:[#allocation3 + $0xa8] sm:$0xff] %vm114, %v322
    %339 = vst.msk [vmem:[#allocation3 + $0xd0] sm:$0xff] %vm114, %v323
    %340 = vst.msk [vmem:[#allocation3 + $0xf8] sm:$0xff] %vm114, %v324
    %341 = vst.msk [vmem:[#allocation3 + $0x120] sm:$0xff] %vm114, %v325
    %342 = vst.msk [vmem:[#allocation3 + $0x148] sm:$0xff] %vm114, %v326
    %343 = vst.msk [vmem:[#allocation3 + $0x170] sm:$0xff] %vm114, %v327
    %344 = vst.msk [vmem:[#allocation3 + $0x198] sm:$0xff] %vm114, %v328
    %345 = vst.msk [vmem:[#allocation3 + $0x1c0] sm:$0xff] %vm114, %v329
    %346 = vst.msk [vmem:[#allocation3 + $0x1e8] sm:$0xff] %vm114, %v330
    %347 = vst.msk [vmem:[#allocation3 + $0x210] sm:$0xff] %vm114, %v331
    %348 = vst.msk [vmem:[#allocation3 + $0x238] sm:$0xff] %vm114, %v332
    %349 = vst.msk [vmem:[#allocation3 + $0x260] sm:$0xff] %vm114, %v333
    %v350 = vld [vmem:[%s172] sm:$0xff]
    %v351 = vld [vmem:[%s172 + $0x10] sm:$0xff]
    %v352 = vld [vmem:[%s172 + $0x20] sm:$0xff]
    %v353 = vld [vmem:[%s172 + $0x30] sm:$0xff]
    %v354 = vld [vmem:[%s172 + $0x40] sm:$0xff]
    %v355 = vld [vmem:[%s172 + $0x50] sm:$0xff]
    %v356 = vld [vmem:[%s172 + $0x60] sm:$0xff]
    %v357 = vld [vmem:[%s172 + $0x70] sm:$0xff]
    %v358 = vld [vmem:[%s172 + $0xa0] sm:$0xff]
    %v359 = vld [vmem:[%s172 + $0xb0] sm:$0xff]
    %v360 = vld [vmem:[%s172 + $0xc0] sm:$0xff]
    %v361 = vld [vmem:[%s172 + $0xd0] sm:$0xff]
    %v362 = vld [vmem:[%s172 + $0xe0] sm:$0xff]
    %v363 = vld [vmem:[%s172 + $0xf0] sm:$0xff]
    %v364 = vld [vmem:[%s172 + $0x100] sm:$0xff]
    %v365 = vld [vmem:[%s172 + $0x110] sm:$0xff]
    %382 = vrot.lane.b32.xlu0 %v350, 64
    %v383 = vpop.permute.xlu0 %382
    %384 = vrot.lane.b32.xlu0 %v351, 64
    %v385 = vpop.permute.xlu0 %384
    %386 = vrot.lane.b32.xlu0 %v352, 64
    %v387 = vpop.permute.xlu0 %386
    %388 = vrot.lane.b32.xlu0 %v353, 64
    %v389 = vpop.permute.xlu0 %388
    %390 = vrot.lane.b32.xlu0 %v354, 64
    %v391 = vpop.permute.xlu0 %390
    %392 = vrot.lane.b32.xlu0 %v355, 64
    %v393 = vpop.permute.xlu0 %392
    %394 = vrot.lane.b32.xlu0 %v356, 64
    %v395 = vpop.permute.xlu0 %394
    %396 = vrot.lane.b32.xlu0 %v357, 64
    %v397 = vpop.permute.xlu0 %396
    %398 = vrot.lane.b32.xlu0 %v358, 64
    %v399 = vpop.permute.xlu0 %398
    %400 = vrot.lane.b32.xlu0 %v359, 64
    %v401 = vpop.permute.xlu0 %400
    %402 = vrot.lane.b32.xlu0 %v360, 64
    %v403 = vpop.permute.xlu0 %402
    %404 = vrot.lane.b32.xlu0 %v361, 64
    %v405 = vpop.permute.xlu0 %404
    %406 = vrot.lane.b32.xlu0 %v362, 64
    %v407 = vpop.permute.xlu0 %406
    %408 = vrot.lane.b32.xlu0 %v363, 64
    %v409 = vpop.permute.xlu0 %408
    %410 = vrot.lane.b32.xlu0 %v364, 64
    %v411 = vpop.permute.xlu0 %410
    %412 = vrot.lane.b32.xlu0 %v365, 64
    %v413 = vpop.permute.xlu0 %412
    %430 = vst.msk [vmem:[#allocation3 + $0x8] sm:$0xff] %vm301, %v383
    %431 = vst.msk [vmem:[#allocation3 + $0x30] sm:$0xff] %vm301, %v385
    %432 = vst.msk [vmem:[#allocation3 + $0x58] sm:$0xff] %vm301, %v387
    %433 = vst.msk [vmem:[#allocation3 + $0x80] sm:$0xff] %vm301, %v389
    %434 = vst.msk [vmem:[#allocation3 + $0xa8] sm:$0xff] %vm301, %v391
    %435 = vst.msk [vmem:[#allocation3 + $0xd0] sm:$0xff] %vm301, %v393
    %436 = vst.msk [vmem:[#allocation3 + $0xf8] sm:$0xff] %vm301, %v395
    %437 = vst.msk [vmem:[#allocation3 + $0x120] sm:$0xff] %vm301, %v397
    %438 = vst.msk [vmem:[#allocation3 + $0x148] sm:$0xff] %vm301, %v399
    %439 = vst.msk [vmem:[#allocation3 + $0x170] sm:$0xff] %vm301, %v401
    %440 = vst.msk [vmem:[#allocation3 + $0x198] sm:$0xff] %vm301, %v403
    %441 = vst.msk [vmem:[#allocation3 + $0x1c0] sm:$0xff] %vm301, %v405
    %442 = vst.msk [vmem:[#allocation3 + $0x1e8] sm:$0xff] %vm301, %v407
    %443 = vst.msk [vmem:[#allocation3 + $0x210] sm:$0xff] %vm301, %v409
    %444 = vst.msk [vmem:[#allocation3 + $0x238] sm:$0xff] %vm301, %v411
    %445 = vst.msk [vmem:[#allocation3 + $0x260] sm:$0xff] %vm301, %v413
    %v446 = vld [vmem:[%s172 + $0x1] sm:$0xff]
    %v447 = vld [vmem:[%s172 + $0x11] sm:$0xff]
    %v448 = vld [vmem:[%s172 + $0x21] sm:$0xff]
    %v449 = vld [vmem:[%s172 + $0x31] sm:$0xff]
    %v450 = vld [vmem:[%s172 + $0x41] sm:$0xff]
    %v451 = vld [vmem:[%s172 + $0x51] sm:$0xff]
    %v452 = vld [vmem:[%s172 + $0x61] sm:$0xff]
    %v453 = vld [vmem:[%s172 + $0x71] sm:$0xff]
    %v454 = vld [vmem:[%s172 + $0xa1] sm:$0xff]
    %v455 = vld [vmem:[%s172 + $0xb1] sm:$0xff]
    %v456 = vld [vmem:[%s172 + $0xc1] sm:$0xff]
    %v457 = vld [vmem:[%s172 + $0xd1] sm:$0xff]
    %v458 = vld [vmem:[%s172 + $0xe1] sm:$0xff]
    %v459 = vld [vmem:[%s172 + $0xf1] sm:$0xff]
    %v460 = vld [vmem:[%s172 + $0x101] sm:$0xff]
    %v461 = vld [vmem:[%s172 + $0x111] sm:$0xff]
    %462 = vst.msk [vmem:[#allocation3 + $0x10] sm:$0xff] %vm114, %v446
    %463 = vst.msk [vmem:[#allocation3 + $0x38] sm:$0xff] %vm114, %v447
    %464 = vst.msk [vmem:[#allocation3 + $0x60] sm:$0xff] %vm114, %v448
    %465 = vst.msk [vmem:[#allocation3 + $0x88] sm:$0xff] %vm114, %v449
    %466 = vst.msk [vmem:[#allocation3 + $0xb0] sm:$0xff] %vm114, %v450
    %467 = vst.msk [vmem:[#allocation3 + $0xd8] sm:$0xff] %vm114, %v451
    %468 = vst.msk [vmem:[#allocation3 + $0x100] sm:$0xff] %vm114, %v452
    %469 = vst.msk [vmem:[#allocation3 + $0x128] sm:$0xff] %vm114, %v453
    %470 = vst.msk [vmem:[#allocation3 + $0x150] sm:$0xff] %vm114, %v454
    %471 = vst.msk [vmem:[#allocation3 + $0x178] sm:$0xff] %vm114, %v455
    %472 = vst.msk [vmem:[#allocation3 + $0x1a0] sm:$0xff] %vm114, %v456
    %473 = vst.msk [vmem:[#allocation3 + $0x1c8] sm:$0xff] %vm114, %v457
    %474 = vst.msk [vmem:[#allocation3 + $0x1f0] sm:$0xff] %vm114, %v458
    %475 = vst.msk [vmem:[#allocation3 + $0x218] sm:$0xff] %vm114, %v459
    %476 = vst.msk [vmem:[#allocation3 + $0x240] sm:$0xff] %vm114, %v460
    %477 = vst.msk [vmem:[#allocation3 + $0x268] sm:$0xff] %vm114, %v461
    %v478 = vld [vmem:[%s172 + $0x2] sm:$0xff]
    %v479 = vld [vmem:[%s172 + $0x12] sm:$0xff]
    %v480 = vld [vmem:[%s172 + $0x22] sm:$0xff]
    %v481 = vld [vmem:[%s172 + $0x32] sm:$0xff]
    %v482 = vld [vmem:[%s172 + $0x42] sm:$0xff]
    %v483 = vld [vmem:[%s172 + $0x52] sm:$0xff]
    %v484 = vld [vmem:[%s172 + $0x62] sm:$0xff]
    %v485 = vld [vmem:[%s172 + $0x72] sm:$0xff]
    %v486 = vld [vmem:[%s172 + $0xa2] sm:$0xff]
    %v487 = vld [vmem:[%s172 + $0xb2] sm:$0xff]
    %v488 = vld [vmem:[%s172 + $0xc2] sm:$0xff]
    %v489 = vld [vmem:[%s172 + $0xd2] sm:$0xff]
    %v490 = vld [vmem:[%s172 + $0xe2] sm:$0xff]
    %v491 = vld [vmem:[%s172 + $0xf2] sm:$0xff]
    %v492 = vld [vmem:[%s172 + $0x102] sm:$0xff]
    %v493 = vld [vmem:[%s172 + $0x112] sm:$0xff]
    %510 = vrot.lane.b32.xlu0 %v478, 64
    %v511 = vpop.permute.xlu0 %510
    %512 = vrot.lane.b32.xlu0 %v479, 64
    %v513 = vpop.permute.xlu0 %512
    %514 = vrot.lane.b32.xlu0 %v480, 64
    %v515 = vpop.permute.xlu0 %514
    %516 = vrot.lane.b32.xlu0 %v481, 64
    %v517 = vpop.permute.xlu0 %516
    %518 = vrot.lane.b32.xlu0 %v482, 64
    %v519 = vpop.permute.xlu0 %518
    %520 = vrot.lane.b32.xlu0 %v483, 64
    %v521 = vpop.permute.xlu0 %520
    %522 = vrot.lane.b32.xlu0 %v484, 64
    %v523 = vpop.permute.xlu0 %522
    %524 = vrot.lane.b32.xlu0 %v485, 64
    %v525 = vpop.permute.xlu0 %524
    %526 = vrot.lane.b32.xlu0 %v486, 64
    %v527 = vpop.permute.xlu0 %526
    %528 = vrot.lane.b32.xlu0 %v487, 64
    %v529 = vpop.permute.xlu0 %528
    %530 = vrot.lane.b32.xlu0 %v488, 64
    %v531 = vpop.permute.xlu0 %530
    %532 = vrot.lane.b32.xlu0 %v489, 64
    %v533 = vpop.permute.xlu0 %532
    %534 = vrot.lane.b32.xlu0 %v490, 64
    %v535 = vpop.permute.xlu0 %534
    %536 = vrot.lane.b32.xlu0 %v491, 64
    %v537 = vpop.permute.xlu0 %536
    %538 = vrot.lane.b32.xlu0 %v492, 64
    %v539 = vpop.permute.xlu0 %538
    %540 = vrot.lane.b32.xlu0 %v493, 64
    %v541 = vpop.permute.xlu0 %540
    %558 = vst.msk [vmem:[#allocation3 + $0x10] sm:$0xff] %vm301, %v511
    %559 = vst.msk [vmem:[#allocation3 + $0x38] sm:$0xff] %vm301, %v513
    %560 = vst.msk [vmem:[#allocation3 + $0x60] sm:$0xff] %vm301, %v515
    %561 = vst.msk [vmem:[#allocation3 + $0x88] sm:$0xff] %vm301, %v517
    %562 = vst.msk [vmem:[#allocation3 + $0xb0] sm:$0xff] %vm301, %v519
    %563 = vst.msk [vmem:[#allocation3 + $0xd8] sm:$0xff] %vm301, %v521
    %564 = vst.msk [vmem:[#allocation3 + $0x100] sm:$0xff] %vm301, %v523
    %565 = vst.msk [vmem:[#allocation3 + $0x128] sm:$0xff] %vm301, %v525
    %566 = vst.msk [vmem:[#allocation3 + $0x150] sm:$0xff] %vm301, %v527
    %567 = vst.msk [vmem:[#allocation3 + $0x178] sm:$0xff] %vm301, %v529
    %568 = vst.msk [vmem:[#allocation3 + $0x1a0] sm:$0xff] %vm301, %v531
    %569 = vst.msk [vmem:[#allocation3 + $0x1c8] sm:$0xff] %vm301, %v533
    %570 = vst.msk [vmem:[#allocation3 + $0x1f0] sm:$0xff] %vm301, %v535
    %571 = vst.msk [vmem:[#allocation3 + $0x218] sm:$0xff] %vm301, %v537
    %572 = vst.msk [vmem:[#allocation3 + $0x240] sm:$0xff] %vm301, %v539
    %573 = vst.msk [vmem:[#allocation3 + $0x268] sm:$0xff] %vm301, %v541
    %s574 = scalar_lea.vmem [#allocation2], 32
    %v575 = vld [vmem:[%s574] sm:$0xff]
    %v576 = vld [vmem:[%s574 + $0x10] sm:$0xff]
    %v577 = vld [vmem:[%s574 + $0x20] sm:$0xff]
    %v578 = vld [vmem:[%s574 + $0x30] sm:$0xff]
    %v579 = vld [vmem:[%s574 + $0x40] sm:$0xff]
    %v580 = vld [vmem:[%s574 + $0x50] sm:$0xff]
    %v581 = vld [vmem:[%s574 + $0x60] sm:$0xff]
    %v582 = vld [vmem:[%s574 + $0x70] sm:$0xff]
    %v583 = vld [vmem:[%s574 + $0xa0] sm:$0xff]
    %v584 = vld [vmem:[%s574 + $0xb0] sm:$0xff]
    %v585 = vld [vmem:[%s574 + $0xc0] sm:$0xff]
    %v586 = vld [vmem:[%s574 + $0xd0] sm:$0xff]
    %v587 = vld [vmem:[%s574 + $0xe0] sm:$0xff]
    %v588 = vld [vmem:[%s574 + $0xf0] sm:$0xff]
    %v589 = vld [vmem:[%s574 + $0x100] sm:$0xff]
    %v590 = vld [vmem:[%s574 + $0x110] sm:$0xff]
    %591 = vst.msk [vmem:[#allocation3 + $0x18] sm:$0xff] %vm114, %v575
    %592 = vst.msk [vmem:[#allocation3 + $0x40] sm:$0xff] %vm114, %v576
    %593 = vst.msk [vmem:[#allocation3 + $0x68] sm:$0xff] %vm114, %v577
    %594 = vst.msk [vmem:[#allocation3 + $0x90] sm:$0xff] %vm114, %v578
    %595 = vst.msk [vmem:[#allocation3 + $0xb8] sm:$0xff] %vm114, %v579
    %596 = vst.msk [vmem:[#allocation3 + $0xe0] sm:$0xff] %vm114, %v580
    %597 = vst.msk [vmem:[#allocation3 + $0x108] sm:$0xff] %vm114, %v581
    %598 = vst.msk [vmem:[#allocation3 + $0x130] sm:$0xff] %vm114, %v582
    %599 = vst.msk [vmem:[#allocation3 + $0x158] sm:$0xff] %vm114, %v583
    %600 = vst.msk [vmem:[#allocation3 + $0x180] sm:$0xff] %vm114, %v584
    %601 = vst.msk [vmem:[#allocation3 + $0x1a8] sm:$0xff] %vm114, %v585
    %602 = vst.msk [vmem:[#allocation3 + $0x1d0] sm:$0xff] %vm114, %v586
    %603 = vst.msk [vmem:[#allocation3 + $0x1f8] sm:$0xff] %vm114, %v587
    %604 = vst.msk [vmem:[#allocation3 + $0x220] sm:$0xff] %vm114, %v588
    %605 = vst.msk [vmem:[#allocation3 + $0x248] sm:$0xff] %vm114, %v589
    %606 = vst.msk [vmem:[#allocation3 + $0x270] sm:$0xff] %vm114, %v590
    %v607 = vld [vmem:[%s574 + $0x1] sm:$0xff]
    %v608 = vld [vmem:[%s574 + $0x11] sm:$0xff]
    %v609 = vld [vmem:[%s574 + $0x21] sm:$0xff]
    %v610 = vld [vmem:[%s574 + $0x31] sm:$0xff]
    %v611 = vld [vmem:[%s574 + $0x41] sm:$0xff]
    %v612 = vld [vmem:[%s574 + $0x51] sm:$0xff]
    %v613 = vld [vmem:[%s574 + $0x61] sm:$0xff]
    %v614 = vld [vmem:[%s574 + $0x71] sm:$0xff]
    %v615 = vld [vmem:[%s574 + $0xa1] sm:$0xff]
    %v616 = vld [vmem:[%s574 + $0xb1] sm:$0xff]
    %v617 = vld [vmem:[%s574 + $0xc1] sm:$0xff]
    %v618 = vld [vmem:[%s574 + $0xd1] sm:$0xff]
    %v619 = vld [vmem:[%s574 + $0xe1] sm:$0xff]
    %v620 = vld [vmem:[%s574 + $0xf1] sm:$0xff]
    %v621 = vld [vmem:[%s574 + $0x101] sm:$0xff]
    %v622 = vld [vmem:[%s574 + $0x111] sm:$0xff]
    %639 = vrot.lane.b32.xlu0 %v607, 64
    %v640 = vpop.permute.xlu0 %639
    %641 = vrot.lane.b32.xlu0 %v608, 64
    %v642 = vpop.permute.xlu0 %641
    %643 = vrot.lane.b32.xlu0 %v609, 64
    %v644 = vpop.permute.xlu0 %643
    %645 = vrot.lane.b32.xlu0 %v610, 64
    %v646 = vpop.permute.xlu0 %645
    %647 = vrot.lane.b32.xlu0 %v611, 64
    %v648 = vpop.permute.xlu0 %647
    %649 = vrot.lane.b32.xlu0 %v612, 64
    %v650 = vpop.permute.xlu0 %649
    %651 = vrot.lane.b32.xlu0 %v613, 64
    %v652 = vpop.permute.xlu0 %651
    %653 = vrot.lane.b32.xlu0 %v614, 64
    %v654 = vpop.permute.xlu0 %653
    %655 = vrot.lane.b32.xlu0 %v615, 64
    %v656 = vpop.permute.xlu0 %655
    %657 = vrot.lane.b32.xlu0 %v616, 64
    %v658 = vpop.permute.xlu0 %657
    %659 = vrot.lane.b32.xlu0 %v617, 64
    %v660 = vpop.permute.xlu0 %659
    %661 = vrot.lane.b32.xlu0 %v618, 64
    %v662 = vpop.permute.xlu0 %661
    %663 = vrot.lane.b32.xlu0 %v619, 64
    %v664 = vpop.permute.xlu0 %663
    %665 = vrot.lane.b32.xlu0 %v620, 64
    %v666 = vpop.permute.xlu0 %665
    %667 = vrot.lane.b32.xlu0 %v621, 64
    %v668 = vpop.permute.xlu0 %667
    %669 = vrot.lane.b32.xlu0 %v622, 64
    %v670 = vpop.permute.xlu0 %669
    %687 = vst.msk [vmem:[#allocation3 + $0x18] sm:$0xff] %vm301, %v640
    %688 = vst.msk [vmem:[#allocation3 + $0x40] sm:$0xff] %vm301, %v642
    %689 = vst.msk [vmem:[#allocation3 + $0x68] sm:$0xff] %vm301, %v644
    %690 = vst.msk [vmem:[#allocation3 + $0x90] sm:$0xff] %vm301, %v646
    %691 = vst.msk [vmem:[#allocation3 + $0xb8] sm:$0xff] %vm301, %v648
    %692 = vst.msk [vmem:[#allocation3 + $0xe0] sm:$0xff] %vm301, %v650
    %693 = vst.msk [vmem:[#allocation3 + $0x108] sm:$0xff] %vm301, %v652
    %694 = vst.msk [vmem:[#allocation3 + $0x130] sm:$0xff] %vm301, %v654
    %695 = vst.msk [vmem:[#allocation3 + $0x158] sm:$0xff] %vm301, %v656
    %696 = vst.msk [vmem:[#allocation3 + $0x180] sm:$0xff] %vm301, %v658
    %697 = vst.msk [vmem:[#allocation3 + $0x1a8] sm:$0xff] %vm301, %v660
    %698 = vst.msk [vmem:[#allocation3 + $0x1d0] sm:$0xff] %vm301, %v662
    %699 = vst.msk [vmem:[#allocation3 + $0x1f8] sm:$0xff] %vm301, %v664
    %700 = vst.msk [vmem:[#allocation3 + $0x220] sm:$0xff] %vm301, %v666
    %701 = vst.msk [vmem:[#allocation3 + $0x248] sm:$0xff] %vm301, %v668
    %702 = vst.msk [vmem:[#allocation3 + $0x270] sm:$0xff] %vm301, %v670
    %v703 = vld [vmem:[%s574 + $0x2] sm:$0xff]
    %v704 = vld [vmem:[%s574 + $0x12] sm:$0xff]
    %v705 = vld [vmem:[%s574 + $0x22] sm:$0xff]
    %v706 = vld [vmem:[%s574 + $0x32] sm:$0xff]
    %v707 = vld [vmem:[%s574 + $0x42] sm:$0xff]
    %v708 = vld [vmem:[%s574 + $0x52] sm:$0xff]
    %v709 = vld [vmem:[%s574 + $0x62] sm:$0xff]
    %v710 = vld [vmem:[%s574 + $0x72] sm:$0xff]
    %v711 = vld [vmem:[%s574 + $0xa2] sm:$0xff]
    %v712 = vld [vmem:[%s574 + $0xb2] sm:$0xff]
    %v713 = vld [vmem:[%s574 + $0xc2] sm:$0xff]
    %v714 = vld [vmem:[%s574 + $0xd2] sm:$0xff]
    %v715 = vld [vmem:[%s574 + $0xe2] sm:$0xff]
    %v716 = vld [vmem:[%s574 + $0xf2] sm:$0xff]
    %v717 = vld [vmem:[%s574 + $0x102] sm:$0xff]
    %v718 = vld [vmem:[%s574 + $0x112] sm:$0xff]
    %719 = vst.msk [vmem:[#allocation3 + $0x20] sm:$0xff] %vm114, %v703
    %720 = vst.msk [vmem:[#allocation3 + $0x48] sm:$0xff] %vm114, %v704
    %721 = vst.msk [vmem:[#allocation3 + $0x70] sm:$0xff] %vm114, %v705
    %722 = vst.msk [vmem:[#allocation3 + $0x98] sm:$0xff] %vm114, %v706
    %723 = vst.msk [vmem:[#allocation3 + $0xc0] sm:$0xff] %vm114, %v707
    %724 = vst.msk [vmem:[#allocation3 + $0xe8] sm:$0xff] %vm114, %v708
    %725 = vst.msk [vmem:[#allocation3 + $0x110] sm:$0xff] %vm114, %v709
    %726 = vst.msk [vmem:[#allocation3 + $0x138] sm:$0xff] %vm114, %v710
    %727 = vst.msk [vmem:[#allocation3 + $0x160] sm:$0xff] %vm114, %v711
    %728 = vst.msk [vmem:[#allocation3 + $0x188] sm:$0xff] %vm114, %v712
    %729 = vst.msk [vmem:[#allocation3 + $0x1b0] sm:$0xff] %vm114, %v713
    %730 = vst.msk [vmem:[#allocation3 + $0x1d8] sm:$0xff] %vm114, %v714
    %731 = vst.msk [vmem:[#allocation3 + $0x200] sm:$0xff] %vm114, %v715
    %732 = vst.msk [vmem:[#allocation3 + $0x228] sm:$0xff] %vm114, %v716
    %733 = vst.msk [vmem:[#allocation3 + $0x250] sm:$0xff] %vm114, %v717
    %734 = vst.msk [vmem:[#allocation3 + $0x278] sm:$0xff] %vm114, %v718
    %v735 = vld [vmem:[#allocation3] sm:$0xff]
    %v736 = vld [vmem:[#allocation3 + $0x8] sm:$0xff]
    %v737 = vld [vmem:[#allocation3 + $0x10] sm:$0xff]
    %v738 = vld [vmem:[#allocation3 + $0x18] sm:$0xff]
    %v739 = vld [vmem:[#allocation3 + $0x20] sm:$0xff]
    %v740 = vld [vmem:[#allocation3 + $0x28] sm:$0xff]
    %v741 = vld [vmem:[#allocation3 + $0x30] sm:$0xff]
    %v742 = vld [vmem:[#allocation3 + $0x38] sm:$0xff]
    %v743 = vld [vmem:[#allocation3 + $0x40] sm:$0xff]
    %v744 = vld [vmem:[#allocation3 + $0x48] sm:$0xff]
    %v745 = vld [vmem:[#allocation3 + $0x50] sm:$0xff]
    %v746 = vld [vmem:[#allocation3 + $0x58] sm:$0xff]
    %v747 = vld [vmem:[#allocation3 + $0x60] sm:$0xff]
    %v748 = vld [vmem:[#allocation3 + $0x68] sm:$0xff]
    %v749 = vld [vmem:[#allocation3 + $0x70] sm:$0xff]
    %v750 = vld [vmem:[#allocation3 + $0x78] sm:$0xff]
    %v751 = vld [vmem:[#allocation3 + $0x80] sm:$0xff]
    %v752 = vld [vmem:[#allocation3 + $0x88] sm:$0xff]
    %v753 = vld [vmem:[#allocation3 + $0x90] sm:$0xff]
    %v754 = vld [vmem:[#allocation3 + $0x98] sm:$0xff]
    %v755 = vld [vmem:[#allocation3 + $0xa0] sm:$0xff]
    %v756 = vld [vmem:[#allocation3 + $0xa8] sm:$0xff]
    %v757 = vld [vmem:[#allocation3 + $0xb0] sm:$0xff]
    %v758 = vld [vmem:[#allocation3 + $0xb8] sm:$0xff]
    %v759 = vld [vmem:[#allocation3 + $0xc0] sm:$0xff]
    %v760 = vld [vmem:[#allocation3 + $0xc8] sm:$0xff]
    %v761 = vld [vmem:[#allocation3 + $0xd0] sm:$0xff]
    %v762 = vld [vmem:[#allocation3 + $0xd8] sm:$0xff]
    %v763 = vld [vmem:[#allocation3 + $0xe0] sm:$0xff]
    %v764 = vld [vmem:[#allocation3 + $0xe8] sm:$0xff]
    %v765 = vld [vmem:[#allocation3 + $0xf0] sm:$0xff]
    %v766 = vld [vmem:[#allocation3 + $0xf8] sm:$0xff]
    %v767 = vld [vmem:[#allocation3 + $0x100] sm:$0xff]
    %v768 = vld [vmem:[#allocation3 + $0x108] sm:$0xff]
    %v769 = vld [vmem:[#allocation3 + $0x110] sm:$0xff]
    %v770 = vld [vmem:[#allocation3 + $0x118] sm:$0xff]
    %v771 = vld [vmem:[#allocation3 + $0x120] sm:$0xff]
    %v772 = vld [vmem:[#allocation3 + $0x128] sm:$0xff]
    %v773 = vld [vmem:[#allocation3 + $0x130] sm:$0xff]
    %v774 = vld [vmem:[#allocation3 + $0x138] sm:$0xff]
    %v775 = vld [vmem:[#allocation3 + $0x140] sm:$0xff]
    %v776 = vld [vmem:[#allocation3 + $0x148] sm:$0xff]
    %v777 = vld [vmem:[#allocation3 + $0x150] sm:$0xff]
    %v778 = vld [vmem:[#allocation3 + $0x158] sm:$0xff]
    %v779 = vld [vmem:[#allocation3 + $0x160] sm:$0xff]
    %v780 = vld [vmem:[#allocation3 + $0x168] sm:$0xff]
    %v781 = vld [vmem:[#allocation3 + $0x170] sm:$0xff]
    %v782 = vld [vmem:[#allocation3 + $0x178] sm:$0xff]
    %v783 = vld [vmem:[#allocation3 + $0x180] sm:$0xff]
    %v784 = vld [vmem:[#allocation3 + $0x188] sm:$0xff]
    %v785 = vld [vmem:[#allocation3 + $0x190] sm:$0xff]
    %v786 = vld [vmem:[#allocation3 + $0x198] sm:$0xff]
    %v787 = vld [vmem:[#allocation3 + $0x1a0] sm:$0xff]
    %v788 = vld [vmem:[#allocation3 + $0x1a8] sm:$0xff]
    %v789 = vld [vmem:[#allocation3 + $0x1b0] sm:$0xff]
    %v790 = vld [vmem:[#allocation3 + $0x1b8] sm:$0xff]
    %v791 = vld [vmem:[#allocation3 + $0x1c0] sm:$0xff]
    %v792 = vld [vmem:[#allocation3 + $0x1c8] sm:$0xff]
    %v793 = vld [vmem:[#allocation3 + $0x1d0] sm:$0xff]
    %v794 = vld [vmem:[#allocation3 + $0x1d8] sm:$0xff]
    %v795 = vld [vmem:[#allocation3 + $0x1e0] sm:$0xff]
    %v796 = vld [vmem:[#allocation3 + $0x1e8] sm:$0xff]
    %v797 = vld [vmem:[#allocation3 + $0x1f0] sm:$0xff]
    %v798 = vld [vmem:[#allocation3 + $0x1f8] sm:$0xff]
    %v799 = vld [vmem:[#allocation3 + $0x200] sm:$0xff]
    %v800 = vld [vmem:[#allocation3 + $0x208] sm:$0xff]
    %v801 = vld [vmem:[#allocation3 + $0x210] sm:$0xff]
    %v802 = vld [vmem:[#allocation3 + $0x218] sm:$0xff]
    %v803 = vld [vmem:[#allocation3 + $0x220] sm:$0xff]
    %v804 = vld [vmem:[#allocation3 + $0x228] sm:$0xff]
    %v805 = vld [vmem:[#allocation3 + $0x230] sm:$0xff]
    %v806 = vld [vmem:[#allocation3 + $0x238] sm:$0xff]
    %v807 = vld [vmem:[#allocation3 + $0x240] sm:$0xff]
    %v808 = vld [vmem:[#allocation3 + $0x248] sm:$0xff]
    %v809 = vld [vmem:[#allocation3 + $0x250] sm:$0xff]
    %v810 = vld [vmem:[#allocation3 + $0x258] sm:$0xff]
    %v811 = vld [vmem:[#allocation3 + $0x260] sm:$0xff]
    %v812 = vld [vmem:[#allocation3 + $0x268] sm:$0xff]
    %v813 = vld [vmem:[#allocation3 + $0x270] sm:$0xff]
    %v814 = vld [vmem:[#allocation3 + $0x278] sm:$0xff]
    %v815 = vld [vmem:[#allocation6] sm:$0xff]
    %v816 = vld [vmem:[#allocation6 + $0x8] sm:$0xff]
    %v817 = vld [vmem:[#allocation6 + $0x10] sm:$0xff]
    %v818 = vld [vmem:[#allocation6 + $0x18] sm:$0xff]
    %v819 = vld [vmem:[#allocation6 + $0x20] sm:$0xff]
    %v820 = vld [vmem:[#allocation6 + $0x28] sm:$0xff]
    %v821 = vld [vmem:[#allocation6 + $0x30] sm:$0xff]
    %v822 = vld [vmem:[#allocation6 + $0x38] sm:$0xff]
    %v823 = vld [vmem:[#allocation6 + $0x40] sm:$0xff]
    %v824 = vld [vmem:[#allocation6 + $0x48] sm:$0xff]
    %v825 = vld [vmem:[#allocation6 + $0x50] sm:$0xff]
    %v826 = vld [vmem:[#allocation6 + $0x58] sm:$0xff]
    %v827 = vld [vmem:[#allocation6 + $0x60] sm:$0xff]
    %v828 = vld [vmem:[#allocation6 + $0x68] sm:$0xff]
    %v829 = vld [vmem:[#allocation6 + $0x70] sm:$0xff]
    %v830 = vld [vmem:[#allocation6 + $0x78] sm:$0xff]
    %v831 = vld [vmem:[#allocation6 + $0x80] sm:$0xff]
    %v832 = vld [vmem:[#allocation6 + $0x88] sm:$0xff]
    %v833 = vld [vmem:[#allocation6 + $0x90] sm:$0xff]
    %v834 = vld [vmem:[#allocation6 + $0x98] sm:$0xff]
    %v835 = vld [vmem:[#allocation6 + $0xa0] sm:$0xff]
    %v836 = vld [vmem:[#allocation6 + $0xa8] sm:$0xff]
    %v837 = vld [vmem:[#allocation6 + $0xb0] sm:$0xff]
    %v838 = vld [vmem:[#allocation6 + $0xb8] sm:$0xff]
    %v839 = vld [vmem:[#allocation6 + $0xc0] sm:$0xff]
    %v840 = vld [vmem:[#allocation6 + $0xc8] sm:$0xff]
    %v841 = vld [vmem:[#allocation6 + $0xd0] sm:$0xff]
    %v842 = vld [vmem:[#allocation6 + $0xd8] sm:$0xff]
    %v843 = vld [vmem:[#allocation6 + $0xe0] sm:$0xff]
    %v844 = vld [vmem:[#allocation6 + $0xe8] sm:$0xff]
    %v845 = vld [vmem:[#allocation6 + $0xf0] sm:$0xff]
    %v846 = vld [vmem:[#allocation6 + $0xf8] sm:$0xff]
    %v847 = vld [vmem:[#allocation6 + $0x100] sm:$0xff]
    %v848 = vld [vmem:[#allocation6 + $0x108] sm:$0xff]
    %v849 = vld [vmem:[#allocation6 + $0x110] sm:$0xff]
    %v850 = vld [vmem:[#allocation6 + $0x118] sm:$0xff]
    %v851 = vld [vmem:[#allocation6 + $0x120] sm:$0xff]
    %v852 = vld [vmem:[#allocation6 + $0x128] sm:$0xff]
    %v853 = vld [vmem:[#allocation6 + $0x130] sm:$0xff]
    %v854 = vld [vmem:[#allocation6 + $0x138] sm:$0xff]
    %v855 = vld [vmem:[#allocation6 + $0x140] sm:$0xff]
    %v856 = vld [vmem:[#allocation6 + $0x148] sm:$0xff]
    %v857 = vld [vmem:[#allocation6 + $0x150] sm:$0xff]
    %v858 = vld [vmem:[#allocation6 + $0x158] sm:$0xff]
    %v859 = vld [vmem:[#allocation6 + $0x160] sm:$0xff]
    %v860 = vld [vmem:[#allocation6 + $0x168] sm:$0xff]
    %v861 = vld [vmem:[#allocation6 + $0x170] sm:$0xff]
    %v862 = vld [vmem:[#allocation6 + $0x178] sm:$0xff]
    %v863 = vld [vmem:[#allocation6 + $0x180] sm:$0xff]
    %v864 = vld [vmem:[#allocation6 + $0x188] sm:$0xff]
    %v865 = vld [vmem:[#allocation6 + $0x190] sm:$0xff]
    %v866 = vld [vmem:[#allocation6 + $0x198] sm:$0xff]
    %v867 = vld [vmem:[#allocation6 + $0x1a0] sm:$0xff]
    %v868 = vld [vmem:[#allocation6 + $0x1a8] sm:$0xff]
    %v869 = vld [vmem:[#allocation6 + $0x1b0] sm:$0xff]
    %v870 = vld [vmem:[#allocation6 + $0x1b8] sm:$0xff]
    %v871 = vld [vmem:[#allocation6 + $0x1c0] sm:$0xff]
    %v872 = vld [vmem:[#allocation6 + $0x1c8] sm:$0xff]
    %v873 = vld [vmem:[#allocation6 + $0x1d0] sm:$0xff]
    %v874 = vld [vmem:[#allocation6 + $0x1d8] sm:$0xff]
    %v875 = vld [vmem:[#allocation6 + $0x1e0] sm:$0xff]
    %v876 = vld [vmem:[#allocation6 + $0x1e8] sm:$0xff]
    %v877 = vld [vmem:[#allocation6 + $0x1f0] sm:$0xff]
    %v878 = vld [vmem:[#allocation6 + $0x1f8] sm:$0xff]
    %v879 = vld [vmem:[#allocation6 + $0x200] sm:$0xff]
    %v880 = vld [vmem:[#allocation6 + $0x208] sm:$0xff]
    %v881 = vld [vmem:[#allocation6 + $0x210] sm:$0xff]
    %v882 = vld [vmem:[#allocation6 + $0x218] sm:$0xff]
    %v883 = vld [vmem:[#allocation6 + $0x220] sm:$0xff]
    %v884 = vld [vmem:[#allocation6 + $0x228] sm:$0xff]
    %v885 = vld [vmem:[#allocation6 + $0x230] sm:$0xff]
    %v886 = vld [vmem:[#allocation6 + $0x238] sm:$0xff]
    %v887 = vld [vmem:[%s2] sm:$0x1]
    %v889 = vlaneseq
    %v890 = vshrl.u32 %v889, 7
    %v891 = vsub.s32 0, %v890
    %v892 = vrot.slane %v887, %v891
    %v895 = vsel %vm114, %v739, 0
    %v898 = vsel %vm114, %v744, 0
    %v901 = vsel %vm114, %v749, 0
    %v904 = vsel %vm114, %v754, 0
    %v907 = vsel %vm114, %v759, 0
    %v910 = vsel %vm114, %v764, 0
    %v913 = vsel %vm114, %v769, 0
    %v916 = vsel %vm114, %v774, 0
    %v919 = vsel %vm114, %v779, 0
    %v922 = vsel %vm114, %v784, 0
    %v925 = vsel %vm114, %v789, 0
    %v928 = vsel %vm114, %v794, 0
    %v931 = vsel %vm114, %v799, 0
    %v934 = vsel %vm114, %v804, 0
    %v937 = vsel %vm114, %v809, 0
    %v940 = vsel %vm114, %v814, 0
    %942 = vmatprep.subr.mxu0 0.0
    %943 = vmatpush1.msra.mxu0 %v830
    %944 = vmatprep.subr.mxu0 0.0
    %945 = vmatpush1.msra.mxu0 %v829
    %946 = vmatprep.subr.mxu0 0.0
    %947 = vmatpush1.msra.mxu0 %v828
    %948 = vmatprep.subr.mxu0 0.0
    %949 = vmatpush1.msra.mxu0 %v827
    %950 = vmatprep.subr.mxu0 0.0
    %951 = vmatpush1.msra.mxu0 %v826
    %952 = vmatprep.subr.mxu0 0.0
    %953 = vmatpush1.msra.mxu0 %v825
    %954 = vmatprep.subr.mxu0 0.0
    %955 = vmatpush1.msra.mxu0 %v824
    %956 = vmatprep.subr.mxu0 0.0
    %957 = vmatpush1.msra.mxu0 %v823
    %958 = vmatprep.subr.mxu0 0.0
    %959 = vmatpush1.msra.mxu0 %v822
    %960 = vmatprep.subr.mxu0 0.0
    %961 = vmatpush1.msra.mxu0 %v821
    %962 = vmatprep.subr.mxu0 0.0
    %963 = vmatpush1.msra.mxu0 %v820
    %964 = vmatprep.subr.mxu0 0.0
    %965 = vmatpush1.msra.mxu0 %v819
    %966 = vmatprep.subr.mxu0 0.0
    %967 = vmatpush1.msra.mxu0 %v818
    %968 = vmatprep.subr.mxu0 0.0
    %969 = vmatpush1.msra.mxu0 %v817
    %970 = vmatprep.subr.mxu0 0.0
    %971 = vmatpush1.msra.mxu0 %v816
    %972 = vmatprep.subr.mxu0 0.0
    %973 = vmatpush1.msra.mxu0 %v815
    %974 = vmatprep.subr.mxu0 0.0
    %975 = vmatpush2.msra.mxu0 %v846
    %976 = vmatprep.subr.mxu0 0.0
    %977 = vmatpush2.msra.mxu0 %v845
    %978 = vmatprep.subr.mxu0 0.0
    %979 = vmatpush2.msra.mxu0 %v844
    %980 = vmatprep.subr.mxu0 0.0
    %981 = vmatpush2.msra.mxu0 %v843
    %982 = vmatprep.subr.mxu0 0.0
    %983 = vmatpush2.msra.mxu0 %v842
    %984 = vmatprep.subr.mxu0 0.0
    %985 = vmatpush2.msra.mxu0 %v841
    %986 = vmatprep.subr.mxu0 0.0
    %987 = vmatpush2.msra.mxu0 %v840
    %988 = vmatprep.subr.mxu0 0.0
    %989 = vmatpush2.msra.mxu0 %v839
    %990 = vmatprep.subr.mxu0 0.0
    %991 = vmatpush2.msra.mxu0 %v838
    %992 = vmatprep.subr.mxu0 0.0
    %993 = vmatpush2.msra.mxu0 %v837
    %994 = vmatprep.subr.mxu0 0.0
    %995 = vmatpush2.msra.mxu0 %v836
    %996 = vmatprep.subr.mxu0 0.0
    %997 = vmatpush2.msra.mxu0 %v835
    %998 = vmatprep.subr.mxu0 0.0
    %999 = vmatpush2.msra.mxu0 %v834
    %1000 = vmatprep.subr.mxu0 0.0
    %1001 = vmatpush2.msra.mxu0 %v833
    %1002 = vmatprep.subr.mxu0 0.0
    %1003 = vmatpush2.msra.mxu0 %v832
    %1004 = vmatprep.subr.mxu0 0.0
    %1005 = vmatpush2.msra.mxu0 %v831
    %1006 = vmatprep.mubr.f32.mxu0 %v736
    %1007 = vmatmul.mubr.f32.gmra.mxu0 %v735
    %v1008 = vpop.f32.mrf.mxu0
    %v1009 = vadd.f32 %v892, %v1008
    %v1010 = vpop.f32.mrf.mxu0
    %1011 = vmatprep.mubr.f32.mxu0 %v741
    %1012 = vmatmul.mubr.f32.gmra.mxu0 %v740
    %v1013 = vpop.f32.mrf.mxu0
    %v1014 = vadd.f32 %v892, %v1013
    %v1015 = vpop.f32.mrf.mxu0
    %1016 = vmatprep.mubr.f32.mxu0 %v746
    %1017 = vmatmul.mubr.f32.gmra.mxu0 %v745
    %v1018 = vpop.f32.mrf.mxu0
    %v1019 = vadd.f32 %v892, %v1018
    %v1020 = vpop.f32.mrf.mxu0
    %1021 = vmatprep.mubr.f32.mxu0 %v751
    %1022 = vmatmul.mubr.f32.gmra.mxu0 %v750
    %v1023 = vpop.f32.mrf.mxu0
    %v1024 = vadd.f32 %v892, %v1023
    %v1025 = vpop.f32.mrf.mxu0
    %1026 = vmatprep.mubr.f32.mxu0 %v756
    %1027 = vmatmul.mubr.f32.gmra.mxu0 %v755
    %v1028 = vpop.f32.mrf.mxu0
    %v1029 = vadd.f32 %v892, %v1028
    %v1030 = vpop.f32.mrf.mxu0
    %1031 = vmatprep.mubr.f32.mxu0 %v761
    %1032 = vmatmul.mubr.f32.gmra.mxu0 %v760
    %v1033 = vpop.f32.mrf.mxu0
    %v1034 = vadd.f32 %v892, %v1033
    %v1035 = vpop.f32.mrf.mxu0
    %1036 = vmatprep.mubr.f32.mxu0 %v766
    %1037 = vmatmul.mubr.f32.gmra.mxu0 %v765
    %v1038 = vpop.f32.mrf.mxu0
    %v1039 = vadd.f32 %v892, %v1038
    %v1040 = vpop.f32.mrf.mxu0
    %1041 = vmatprep.mubr.f32.mxu0 %v771
    %1042 = vmatmul.mubr.f32.gmra.mxu0 %v770
    %v1043 = vpop.f32.mrf.mxu0
    %v1044 = vadd.f32 %v892, %v1043
    %v1045 = vpop.f32.mrf.mxu0
    %1046 = vmatprep.mubr.f32.mxu0 %v776
    %1047 = vmatmul.mubr.f32.gmra.mxu0 %v775
    %v1048 = vpop.f32.mrf.mxu0
    %v1049 = vadd.f32 %v892, %v1048
    %v1050 = vpop.f32.mrf.mxu0
    %1051 = vmatprep.mubr.f32.mxu0 %v781
    %1052 = vmatmul.mubr.f32.gmra.mxu0 %v780
    %v1053 = vpop.f32.mrf.mxu0
    %v1054 = vadd.f32 %v892, %v1053
    %v1055 = vpop.f32.mrf.mxu0
    %1056 = vmatprep.mubr.f32.mxu0 %v786
    %1057 = vmatmul.mubr.f32.gmra.mxu0 %v785
    %v1058 = vpop.f32.mrf.mxu0
    %v1059 = vadd.f32 %v892, %v1058
    %v1060 = vpop.f32.mrf.mxu0
    %1061 = vmatprep.mubr.f32.mxu0 %v791
    %1062 = vmatmul.mubr.f32.gmra.mxu0 %v790
    %v1063 = vpop.f32.mrf.mxu0
    %v1064 = vadd.f32 %v892, %v1063
    %v1065 = vpop.f32.mrf.mxu0
    %1066 = vmatprep.mubr.f32.mxu0 %v796
    %1067 = vmatmul.mubr.f32.gmra.mxu0 %v795
    %v1068 = vpop.f32.mrf.mxu0
    %v1069 = vadd.f32 %v892, %v1068
    %v1070 = vpop.f32.mrf.mxu0
    %1071 = vmatprep.mubr.f32.mxu0 %v801
    %1072 = vmatmul.mubr.f32.gmra.mxu0 %v800
    %v1073 = vpop.f32.mrf.mxu0
    %v1074 = vadd.f32 %v892, %v1073
    %v1075 = vpop.f32.mrf.mxu0
    %1076 = vmatprep.mubr.f32.mxu0 %v806
    %1077 = vmatmul.mubr.f32.gmra.mxu0 %v805
    %v1078 = vpop.f32.mrf.mxu0
    %v1079 = vadd.f32 %v892, %v1078
    %v1080 = vpop.f32.mrf.mxu0
    %1081 = vmatprep.mubr.f32.mxu0 %v811
    %1082 = vmatmul.mubr.f32.gmra.mxu0 %v810
    %v1083 = vpop.f32.mrf.mxu0
    %v1084 = vadd.f32 %v892, %v1083
    %v1085 = vpop.f32.mrf.mxu0
    %1086 = vdwg.mxu0
    %1087 = vmatprep.subr.mxu0 0.0
    %1088 = vmatpush1.msra.mxu0 %v862
    %1089 = vmatprep.subr.mxu0 0.0
    %1090 = vmatpush1.msra.mxu0 %v861
    %1091 = vmatprep.subr.mxu0 0.0
    %1092 = vmatpush1.msra.mxu0 %v860
    %1093 = vmatprep.subr.mxu0 0.0
    %1094 = vmatpush1.msra.mxu0 %v859
    %1095 = vmatprep.subr.mxu0 0.0
    %1096 = vmatpush1.msra.mxu0 %v858
    %1097 = vmatprep.subr.mxu0 0.0
    %1098 = vmatpush1.msra.mxu0 %v857
    %1099 = vmatprep.subr.mxu0 0.0
    %1100 = vmatpush1.msra.mxu0 %v856
    %1101 = vmatprep.subr.mxu0 0.0
    %1102 = vmatpush1.msra.mxu0 %v855
    %1103 = vmatprep.subr.mxu0 0.0
    %1104 = vmatpush1.msra.mxu0 %v854
    %1105 = vmatprep.subr.mxu0 0.0
    %1106 = vmatpush1.msra.mxu0 %v853
    %1107 = vmatprep.subr.mxu0 0.0
    %1108 = vmatpush1.msra.mxu0 %v852
    %1109 = vmatprep.subr.mxu0 0.0
    %1110 = vmatpush1.msra.mxu0 %v851
    %1111 = vmatprep.subr.mxu0 0.0
    %1112 = vmatpush1.msra.mxu0 %v850
    %1113 = vmatprep.subr.mxu0 0.0
    %1114 = vmatpush1.msra.mxu0 %v849
    %1115 = vmatprep.subr.mxu0 0.0
    %1116 = vmatpush1.msra.mxu0 %v848
    %1117 = vmatprep.subr.mxu0 0.0
    %1118 = vmatpush1.msra.mxu0 %v847
    %1119 = vmatprep.subr.mxu0 0.0
    %1120 = vmatpush2.msra.mxu0 %v878
    %1121 = vmatprep.subr.mxu0 0.0
    %1122 = vmatpush2.msra.mxu0 %v877
    %1123 = vmatprep.subr.mxu0 0.0
    %1124 = vmatpush2.msra.mxu0 %v876
    %1125 = vmatprep.subr.mxu0 0.0
    %1126 = vmatpush2.msra.mxu0 %v875
    %1127 = vmatprep.subr.mxu0 0.0
    %1128 = vmatpush2.msra.mxu0 %v874
    %1129 = vmatprep.subr.mxu0 0.0
    %1130 = vmatpush2.msra.mxu0 %v873
    %1131 = vmatprep.subr.mxu0 0.0
    %1132 = vmatpush2.msra.mxu0 %v872
    %1133 = vmatprep.subr.mxu0 0.0
    %1134 = vmatpush2.msra.mxu0 %v871
    %1135 = vmatprep.subr.mxu0 0.0
    %1136 = vmatpush2.msra.mxu0 %v870
    %1137 = vmatprep.subr.mxu0 0.0
    %1138 = vmatpush2.msra.mxu0 %v869
    %1139 = vmatprep.subr.mxu0 0.0
    %1140 = vmatpush2.msra.mxu0 %v868
    %1141 = vmatprep.subr.mxu0 0.0
    %1142 = vmatpush2.msra.mxu0 %v867
    %1143 = vmatprep.subr.mxu0 0.0
    %1144 = vmatpush2.msra.mxu0 %v866
    %1145 = vmatprep.subr.mxu0 0.0
    %1146 = vmatpush2.msra.mxu0 %v865
    %1147 = vmatprep.subr.mxu0 0.0
    %1148 = vmatpush2.msra.mxu0 %v864
    %1149 = vmatprep.subr.mxu0 0.0
    %1150 = vmatpush2.msra.mxu0 %v863
    %1151 = vmatprep.mubr.f32.mxu0 %v738
    %1152 = vmatmul.mubr.f32.gmra.mxu0 %v737
    %v1153 = vpop.f32.mrf.mxu0
    %v1154 = vadd.f32 %v1009, %v1153
    %v1155 = vpop.f32.mrf.mxu0
    %1156 = vmatprep.mubr.f32.mxu0 %v743
    %1157 = vmatmul.mubr.f32.gmra.mxu0 %v742
    %v1158 = vpop.f32.mrf.mxu0
    %v1159 = vadd.f32 %v1014, %v1158
    %v1160 = vpop.f32.mrf.mxu0
    %1161 = vmatprep.mubr.f32.mxu0 %v748
    %1162 = vmatmul.mubr.f32.gmra.mxu0 %v747
    %v1163 = vpop.f32.mrf.mxu0
    %v1164 = vadd.f32 %v1019, %v1163
    %v1165 = vpop.f32.mrf.mxu0
    %1166 = vmatprep.mubr.f32.mxu0 %v753
    %1167 = vmatmul.mubr.f32.gmra.mxu0 %v752
    %v1168 = vpop.f32.mrf.mxu0
    %v1169 = vadd.f32 %v1024, %v1168
    %v1170 = vpop.f32.mrf.mxu0
    %1171 = vmatprep.mubr.f32.mxu0 %v758
    %1172 = vmatmul.mubr.f32.gmra.mxu0 %v757
    %v1173 = vpop.f32.mrf.mxu0
    %v1174 = vadd.f32 %v1029, %v1173
    %v1175 = vpop.f32.mrf.mxu0
    %1176 = vmatprep.mubr.f32.mxu0 %v763
    %1177 = vmatmul.mubr.f32.gmra.mxu0 %v762
    %v1178 = vpop.f32.mrf.mxu0
    %v1179 = vadd.f32 %v1034, %v1178
    %v1180 = vpop.f32.mrf.mxu0
    %1181 = vmatprep.mubr.f32.mxu0 %v768
    %1182 = vmatmul.mubr.f32.gmra.mxu0 %v767
    %v1183 = vpop.f32.mrf.mxu0
    %v1184 = vadd.f32 %v1039, %v1183
    %v1185 = vpop.f32.mrf.mxu0
    %1186 = vmatprep.mubr.f32.mxu0 %v773
    %1187 = vmatmul.mubr.f32.gmra.mxu0 %v772
    %v1188 = vpop.f32.mrf.mxu0
    %v1189 = vadd.f32 %v1044, %v1188
    %v1190 = vpop.f32.mrf.mxu0
    %1191 = vmatprep.mubr.f32.mxu0 %v778
    %1192 = vmatmul.mubr.f32.gmra.mxu0 %v777
    %v1193 = vpop.f32.mrf.mxu0
    %v1194 = vadd.f32 %v1049, %v1193
    %v1195 = vpop.f32.mrf.mxu0
    %1196 = vmatprep.mubr.f32.mxu0 %v783
    %1197 = vmatmul.mubr.f32.gmra.mxu0 %v782
    %v1198 = vpop.f32.mrf.mxu0
    %v1199 = vadd.f32 %v1054, %v1198
    %v1200 = vpop.f32.mrf.mxu0
    %1201 = vmatprep.mubr.f32.mxu0 %v788
    %1202 = vmatmul.mubr.f32.gmra.mxu0 %v787
    %v1203 = vpop.f32.mrf.mxu0
    %v1204 = vadd.f32 %v1059, %v1203
    %v1205 = vpop.f32.mrf.mxu0
    %1206 = vmatprep.mubr.f32.mxu0 %v793
    %1207 = vmatmul.mubr.f32.gmra.mxu0 %v792
    %v1208 = vpop.f32.mrf.mxu0
    %v1209 = vadd.f32 %v1064, %v1208
    %v1210 = vpop.f32.mrf.mxu0
    %1211 = vmatprep.mubr.f32.mxu0 %v798
    %1212 = vmatmul.mubr.f32.gmra.mxu0 %v797
    %v1213 = vpop.f32.mrf.mxu0
    %v1214 = vadd.f32 %v1069, %v1213
    %v1215 = vpop.f32.mrf.mxu0
    %1216 = vmatprep.mubr.f32.mxu0 %v803
    %1217 = vmatmul.mubr.f32.gmra.mxu0 %v802
    %v1218 = vpop.f32.mrf.mxu0
    %v1219 = vadd.f32 %v1074, %v1218
    %v1220 = vpop.f32.mrf.mxu0
    %1221 = vmatprep.mubr.f32.mxu0 %v808
    %1222 = vmatmul.mubr.f32.gmra.mxu0 %v807
    %v1223 = vpop.f32.mrf.mxu0
    %v1224 = vadd.f32 %v1079, %v1223
    %v1225 = vpop.f32.mrf.mxu0
    %1226 = vmatprep.mubr.f32.mxu0 %v813
    %1227 = vmatmul.mubr.f32.gmra.mxu0 %v812
    %v1228 = vpop.f32.mrf.mxu0
    %v1229 = vadd.f32 %v1084, %v1228
    %v1230 = vpop.f32.mrf.mxu0
    %1231 = vdwg.mxu0
    %1232 = vmatprep.subr.mxu0 0.0
    %1233 = vmatpush1.msra.mxu0 0.0
    %1234 = vmatprep.subr.mxu0 0.0
    %1235 = vmatpush1.msra.mxu0 0.0
    %1236 = vmatprep.subr.mxu0 0.0
    %1237 = vmatpush1.msra.mxu0 0.0
    %1238 = vmatprep.subr.mxu0 0.0
    %1239 = vmatpush1.msra.mxu0 0.0
    %1240 = vmatprep.subr.mxu0 0.0
    %1241 = vmatpush1.msra.mxu0 0.0
    %1242 = vmatprep.subr.mxu0 0.0
    %1243 = vmatpush1.msra.mxu0 0.0
    %1244 = vmatprep.subr.mxu0 0.0
    %1245 = vmatpush1.msra.mxu0 0.0
    %1246 = vmatprep.subr.mxu0 0.0
    %1247 = vmatpush1.msra.mxu0 0.0
    %1248 = vmatprep.subr.mxu0 0.0
    %1249 = vmatpush1.msra.mxu0 %v886
    %1250 = vmatprep.subr.mxu0 0.0
    %1251 = vmatpush1.msra.mxu0 %v885
    %1252 = vmatprep.subr.mxu0 0.0
    %1253 = vmatpush1.msra.mxu0 %v884
    %1254 = vmatprep.subr.mxu0 0.0
    %1255 = vmatpush1.msra.mxu0 %v883
    %1256 = vmatprep.subr.mxu0 0.0
    %1257 = vmatpush1.msra.mxu0 %v882
    %1258 = vmatprep.subr.mxu0 0.0
    %1259 = vmatpush1.msra.mxu0 %v881
    %1260 = vmatprep.subr.mxu0 0.0
    %1261 = vmatpush1.msra.mxu0 %v880
    %1262 = vmatprep.subr.mxu0 0.0
    %1263 = vmatpush1.msra.mxu0 %v879
    %1264 = vmatprep.subr.mxu0 0.0
    %1265 = vmatpush2.msra.mxu0 0.0
    %1266 = vmatprep.subr.mxu0 0.0
    %1267 = vmatpush2.msra.mxu0 0.0
    %1268 = vmatprep.subr.mxu0 0.0
    %1269 = vmatpush2.msra.mxu0 0.0
    %1270 = vmatprep.subr.mxu0 0.0
    %1271 = vmatpush2.msra.mxu0 0.0
    %1272 = vmatprep.subr.mxu0 0.0
    %1273 = vmatpush2.msra.mxu0 0.0
    %1274 = vmatprep.subr.mxu0 0.0
    %1275 = vmatpush2.msra.mxu0 0.0
    %1276 = vmatprep.subr.mxu0 0.0
    %1277 = vmatpush2.msra.mxu0 0.0
    %1278 = vmatprep.subr.mxu0 0.0
    %1279 = vmatpush2.msra.mxu0 0.0
    %1280 = vmatprep.subr.mxu0 0.0
    %1281 = vmatpush2.msra.mxu0 0.0
    %1282 = vmatprep.subr.mxu0 0.0
    %1283 = vmatpush2.msra.mxu0 0.0
    %1284 = vmatprep.subr.mxu0 0.0
    %1285 = vmatpush2.msra.mxu0 0.0
    %1286 = vmatprep.subr.mxu0 0.0
    %1287 = vmatpush2.msra.mxu0 0.0
    %1288 = vmatprep.subr.mxu0 0.0
    %1289 = vmatpush2.msra.mxu0 0.0
    %1290 = vmatprep.subr.mxu0 0.0
    %1291 = vmatpush2.msra.mxu0 0.0
    %1292 = vmatprep.subr.mxu0 0.0
    %1293 = vmatpush2.msra.mxu0 0.0
    %1294 = vmatprep.subr.mxu0 0.0
    %1295 = vmatpush2.msra.mxu0 0.0
    %1296 = vmatprep.mubr.f32.mxu0 0.0
    %1297 = vmatmul.mubr.f32.gmra.mxu0 %v895
    %v1298 = vpop.f32.mrf.mxu0
    %v1299 = vadd.f32 %v1154, %v1298
    %v1300 = vpop.f32.mrf.mxu0
    %1301 = vmatprep.mubr.f32.mxu0 0.0
    %1302 = vmatmul.mubr.f32.gmra.mxu0 %v898
    %v1303 = vpop.f32.mrf.mxu0
    %v1304 = vadd.f32 %v1159, %v1303
    %v1305 = vpop.f32.mrf.mxu0
    %1306 = vmatprep.mubr.f32.mxu0 0.0
    %1307 = vmatmul.mubr.f32.gmra.mxu0 %v901
    %v1308 = vpop.f32.mrf.mxu0
    %v1309 = vadd.f32 %v1164, %v1308
    %v1310 = vpop.f32.mrf.mxu0
    %1311 = vmatprep.mubr.f32.mxu0 0.0
    %1312 = vmatmul.mubr.f32.gmra.mxu0 %v904
    %v1313 = vpop.f32.mrf.mxu0
    %v1314 = vadd.f32 %v1169, %v1313
    %v1315 = vpop.f32.mrf.mxu0
    %1316 = vmatprep.mubr.f32.mxu0 0.0
    %1317 = vmatmul.mubr.f32.gmra.mxu0 %v907
    %v1318 = vpop.f32.mrf.mxu0
    %v1319 = vadd.f32 %v1174, %v1318
    %v1320 = vpop.f32.mrf.mxu0
    %1321 = vmatprep.mubr.f32.mxu0 0.0
    %1322 = vmatmul.mubr.f32.gmra.mxu0 %v910
    %v1323 = vpop.f32.mrf.mxu0
    %v1324 = vadd.f32 %v1179, %v1323
    %v1325 = vpop.f32.mrf.mxu0
    %1326 = vmatprep.mubr.f32.mxu0 0.0
    %1327 = vmatmul.mubr.f32.gmra.mxu0 %v913
    %v1328 = vpop.f32.mrf.mxu0
    %v1329 = vadd.f32 %v1184, %v1328
    %v1330 = vpop.f32.mrf.mxu0
    %1331 = vmatprep.mubr.f32.mxu0 0.0
    %1332 = vmatmul.mubr.f32.gmra.mxu0 %v916
    %v1333 = vpop.f32.mrf.mxu0
    %v1334 = vadd.f32 %v1189, %v1333
    %v1335 = vpop.f32.mrf.mxu0
    %1336 = vmatprep.mubr.f32.mxu0 0.0
    %1337 = vmatmul.mubr.f32.gmra.mxu0 %v919
    %v1338 = vpop.f32.mrf.mxu0
    %v1339 = vadd.f32 %v1194, %v1338
    %v1340 = vpop.f32.mrf.mxu0
    %1341 = vmatprep.mubr.f32.mxu0 0.0
    %1342 = vmatmul.mubr.f32.gmra.mxu0 %v922
    %v1343 = vpop.f32.mrf.mxu0
    %v1344 = vadd.f32 %v1199, %v1343
    %v1345 = vpop.f32.mrf.mxu0
    %1346 = vmatprep.mubr.f32.mxu0 0.0
    %1347 = vmatmul.mubr.f32.gmra.mxu0 %v925
    %v1348 = vpop.f32.mrf.mxu0
    %v1349 = vadd.f32 %v1204, %v1348
    %v1350 = vpop.f32.mrf.mxu0
    %1351 = vmatprep.mubr.f32.mxu0 0.0
    %1352 = vmatmul.mubr.f32.gmra.mxu0 %v928
    %v1353 = vpop.f32.mrf.mxu0
    %v1354 = vadd.f32 %v1209, %v1353
    %v1355 = vpop.f32.mrf.mxu0
    %1356 = vmatprep.mubr.f32.mxu0 0.0
    %1357 = vmatmul.mubr.f32.gmra.mxu0 %v931
    %v1358 = vpop.f32.mrf.mxu0
    %v1359 = vadd.f32 %v1214, %v1358
    %v1360 = vpop.f32.mrf.mxu0
    %1361 = vmatprep.mubr.f32.mxu0 0.0
    %1362 = vmatmul.mubr.f32.gmra.mxu0 %v934
    %v1363 = vpop.f32.mrf.mxu0
    %v1364 = vadd.f32 %v1219, %v1363
    %v1365 = vpop.f32.mrf.mxu0
    %1366 = vmatprep.mubr.f32.mxu0 0.0
    %1367 = vmatmul.mubr.f32.gmra.mxu0 %v937
    %v1368 = vpop.f32.mrf.mxu0
    %v1369 = vadd.f32 %v1224, %v1368
    %v1370 = vpop.f32.mrf.mxu0
    %1371 = vmatprep.mubr.f32.mxu0 0.0
    %1372 = vmatmul.mubr.f32.gmra.mxu0 %v940
    %v1373 = vpop.f32.mrf.mxu0
    %v1374 = vadd.f32 %v1229, %v1373
    %v1375 = vpop.f32.mrf.mxu0
    %1376 = vdwg.mxu0
    %v1393 = vcombine.high %v1299, %v1299
    %v1395 = vunpack.c.l.s4 1983009808
    %v1396 = vunpack.c.0.s8 %v1395
    %v1397 = vlaneseq
    %v1398 = vshrl.u32 %v1397, 7
    %v1399 = vsub.s32 %v1396, %v1398
    %v1400 = vrot.slane %v1299, %v1399
    %v1402 = vunpack.c.l.s4 1983009808
    %v1403 = vunpack.c.0.s8 %v1402
    %v1404 = vlaneseq
    %v1405 = vshrl.u32 %v1404, 7
    %v1406 = vsub.s32 %v1403, %v1405
    %v1407 = vrot.slane %v1393, %v1406
    %v1408 = vcombine.high %v1400, %v1400
    %v1409 = vcombine.high %v1407, %v1407
    %v1410 = vcombine.high %v1304, %v1304
    %v1412 = vunpack.c.l.s4 1983009808
    %v1413 = vunpack.c.0.s8 %v1412
    %v1414 = vlaneseq
    %v1415 = vshrl.u32 %v1414, 7
    %v1416 = vsub.s32 %v1413, %v1415
    %v1417 = vrot.slane %v1304, %v1416
    %v1419 = vunpack.c.l.s4 1983009808
    %v1420 = vunpack.c.0.s8 %v1419
    %v1421 = vlaneseq
    %v1422 = vshrl.u32 %v1421, 7
    %v1423 = vsub.s32 %v1420, %v1422
    %v1424 = vrot.slane %v1410, %v1423
    %v1425 = vcombine.high %v1417, %v1417
    %v1426 = vcombine.high %v1424, %v1424
    %v1427 = vcombine.high %v1309, %v1309
    %v1429 = vunpack.c.l.s4 1983009808
    %v1430 = vunpack.c.0.s8 %v1429
    %v1431 = vlaneseq
    %v1432 = vshrl.u32 %v1431, 7
    %v1433 = vsub.s32 %v1430, %v1432
    %v1434 = vrot.slane %v1309, %v1433
    %v1436 = vunpack.c.l.s4 1983009808
    %v1437 = vunpack.c.0.s8 %v1436
    %v1438 = vlaneseq
    %v1439 = vshrl.u32 %v1438, 7
    %v1440 = vsub.s32 %v1437, %v1439
    %v1441 = vrot.slane %v1427, %v1440
    %v1442 = vcombine.high %v1434, %v1434
    %v1443 = vcombine.high %v1441, %v1441
    %v1444 = vcombine.high %v1314, %v1314
    %v1446 = vunpack.c.l.s4 1983009808
    %v1447 = vunpack.c.0.s8 %v1446
    %v1448 = vlaneseq
    %v1449 = vshrl.u32 %v1448, 7
    %v1450 = vsub.s32 %v1447, %v1449
    %v1451 = vrot.slane %v1314, %v1450
    %v1453 = vunpack.c.l.s4 1983009808
    %v1454 = vunpack.c.0.s8 %v1453
    %v1455 = vlaneseq
    %v1456 = vshrl.u32 %v1455, 7
    %v1457 = vsub.s32 %v1454, %v1456
    %v1458 = vrot.slane %v1444, %v1457
    %v1459 = vcombine.high %v1451, %v1451
    %v1460 = vcombine.high %v1458, %v1458
    %v1461 = vcombine.high %v1319, %v1319
    %v1463 = vunpack.c.l.s4 1983009808
    %v1464 = vunpack.c.0.s8 %v1463
    %v1465 = vlaneseq
    %v1466 = vshrl.u32 %v1465, 7
    %v1467 = vsub.s32 %v1464, %v1466
    %v1468 = vrot.slane %v1319, %v1467
    %v1470 = vunpack.c.l.s4 1983009808
    %v1471 = vunpack.c.0.s8 %v1470
    %v1472 = vlaneseq
    %v1473 = vshrl.u32 %v1472, 7
    %v1474 = vsub.s32 %v1471, %v1473
    %v1475 = vrot.slane %v1461, %v1474
    %v1476 = vcombine.high %v1468, %v1468
    %v1477 = vcombine.high %v1475, %v1475
    %v1478 = vcombine.high %v1324, %v1324
    %v1480 = vunpack.c.l.s4 1983009808
    %v1481 = vunpack.c.0.s8 %v1480
    %v1482 = vlaneseq
    %v1483 = vshrl.u32 %v1482, 7
    %v1484 = vsub.s32 %v1481, %v1483
    %v1485 = vrot.slane %v1324, %v1484
    %v1487 = vunpack.c.l.s4 1983009808
    %v1488 = vunpack.c.0.s8 %v1487
    %v1489 = vlaneseq
    %v1490 = vshrl.u32 %v1489, 7
    %v1491 = vsub.s32 %v1488, %v1490
    %v1492 = vrot.slane %v1478, %v1491
    %v1493 = vcombine.high %v1485, %v1485
    %v1494 = vcombine.high %v1492, %v1492
    %v1495 = vcombine.high %v1329, %v1329
    %v1497 = vunpack.c.l.s4 1983009808
    %v1498 = vunpack.c.0.s8 %v1497
    %v1499 = vlaneseq
    %v1500 = vshrl.u32 %v1499, 7
    %v1501 = vsub.s32 %v1498, %v1500
    %v1502 = vrot.slane %v1329, %v1501
    %v1504 = vunpack.c.l.s4 1983009808
    %v1505 = vunpack.c.0.s8 %v1504
    %v1506 = vlaneseq
    %v1507 = vshrl.u32 %v1506, 7
    %v1508 = vsub.s32 %v1505, %v1507
    %v1509 = vrot.slane %v1495, %v1508
    %v1510 = vcombine.high %v1502, %v1502
    %v1511 = vcombine.high %v1509, %v1509
    %v1512 = vcombine.high %v1334, %v1334
    %v1514 = vunpack.c.l.s4 1983009808
    %v1515 = vunpack.c.0.s8 %v1514
    %v1516 = vlaneseq
    %v1517 = vshrl.u32 %v1516, 7
    %v1518 = vsub.s32 %v1515, %v1517
    %v1519 = vrot.slane %v1334, %v1518
    %v1521 = vunpack.c.l.s4 1983009808
    %v1522 = vunpack.c.0.s8 %v1521
    %v1523 = vlaneseq
    %v1524 = vshrl.u32 %v1523, 7
    %v1525 = vsub.s32 %v1522, %v1524
    %v1526 = vrot.slane %v1512, %v1525
    %v1527 = vcombine.high %v1519, %v1519
    %v1528 = vcombine.high %v1526, %v1526
    %v1529 = vcombine.high %v1339, %v1339
    %v1531 = vunpack.c.l.s4 1983009808
    %v1532 = vunpack.c.0.s8 %v1531
    %v1533 = vlaneseq
    %v1534 = vshrl.u32 %v1533, 7
    %v1535 = vsub.s32 %v1532, %v1534
    %v1536 = vrot.slane %v1339, %v1535
    %v1538 = vunpack.c.l.s4 1983009808
    %v1539 = vunpack.c.0.s8 %v1538
    %v1540 = vlaneseq
    %v1541 = vshrl.u32 %v1540, 7
    %v1542 = vsub.s32 %v1539, %v1541
    %v1543 = vrot.slane %v1529, %v1542
    %v1544 = vcombine.high %v1536, %v1536
    %v1545 = vcombine.high %v1543, %v1543
    %v1546 = vcombine.high %v1344, %v1344
    %v1548 = vunpack.c.l.s4 1983009808
    %v1549 = vunpack.c.0.s8 %v1548
    %v1550 = vlaneseq
    %v1551 = vshrl.u32 %v1550, 7
    %v1552 = vsub.s32 %v1549, %v1551
    %v1553 = vrot.slane %v1344, %v1552
    %v1555 = vunpack.c.l.s4 1983009808
    %v1556 = vunpack.c.0.s8 %v1555
    %v1557 = vlaneseq
    %v1558 = vshrl.u32 %v1557, 7
    %v1559 = vsub.s32 %v1556, %v1558
    %v1560 = vrot.slane %v1546, %v1559
    %v1561 = vcombine.high %v1553, %v1553
    %v1562 = vcombine.high %v1560, %v1560
    %v1563 = vcombine.high %v1349, %v1349
    %v1565 = vunpack.c.l.s4 1983009808
    %v1566 = vunpack.c.0.s8 %v1565
    %v1567 = vlaneseq
    %v1568 = vshrl.u32 %v1567, 7
    %v1569 = vsub.s32 %v1566, %v1568
    %v1570 = vrot.slane %v1349, %v1569
    %v1572 = vunpack.c.l.s4 1983009808
    %v1573 = vunpack.c.0.s8 %v1572
    %v1574 = vlaneseq
    %v1575 = vshrl.u32 %v1574, 7
    %v1576 = vsub.s32 %v1573, %v1575
    %v1577 = vrot.slane %v1563, %v1576
    %v1578 = vcombine.high %v1570, %v1570
    %v1579 = vcombine.high %v1577, %v1577
    %v1580 = vcombine.high %v1354, %v1354
    %v1582 = vunpack.c.l.s4 1983009808
    %v1583 = vunpack.c.0.s8 %v1582
    %v1584 = vlaneseq
    %v1585 = vshrl.u32 %v1584, 7
    %v1586 = vsub.s32 %v1583, %v1585
    %v1587 = vrot.slane %v1354, %v1586
    %v1589 = vunpack.c.l.s4 1983009808
    %v1590 = vunpack.c.0.s8 %v1589
    %v1591 = vlaneseq
    %v1592 = vshrl.u32 %v1591, 7
    %v1593 = vsub.s32 %v1590, %v1592
    %v1594 = vrot.slane %v1580, %v1593
    %v1595 = vcombine.high %v1587, %v1587
    %v1596 = vcombine.high %v1594, %v1594
    %v1597 = vcombine.high %v1359, %v1359
    %v1599 = vunpack.c.l.s4 1983009808
    %v1600 = vunpack.c.0.s8 %v1599
    %v1601 = vlaneseq
    %v1602 = vshrl.u32 %v1601, 7
    %v1603 = vsub.s32 %v1600, %v1602
    %v1604 = vrot.slane %v1359, %v1603
    %v1606 = vunpack.c.l.s4 1983009808
    %v1607 = vunpack.c.0.s8 %v1606
    %v1608 = vlaneseq
    %v1609 = vshrl.u32 %v1608, 7
    %v1610 = vsub.s32 %v1607, %v1609
    %v1611 = vrot.slane %v1597, %v1610
    %v1612 = vcombine.high %v1604, %v1604
    %v1613 = vcombine.high %v1611, %v1611
    %v1614 = vcombine.high %v1364, %v1364
    %v1616 = vunpack.c.l.s4 1983009808
    %v1617 = vunpack.c.0.s8 %v1616
    %v1618 = vlaneseq
    %v1619 = vshrl.u32 %v1618, 7
    %v1620 = vsub.s32 %v1617, %v1619
    %v1621 = vrot.slane %v1364, %v1620
    %v1623 = vunpack.c.l.s4 1983009808
    %v1624 = vunpack.c.0.s8 %v1623
    %v1625 = vlaneseq
    %v1626 = vshrl.u32 %v1625, 7
    %v1627 = vsub.s32 %v1624, %v1626
    %v1628 = vrot.slane %v1614, %v1627
    %v1629 = vcombine.high %v1621, %v1621
    %v1630 = vcombine.high %v1628, %v1628
    %v1631 = vcombine.high %v1369, %v1369
    %v1633 = vunpack.c.l.s4 1983009808
    %v1634 = vunpack.c.0.s8 %v1633
    %v1635 = vlaneseq
    %v1636 = vshrl.u32 %v1635, 7
    %v1637 = vsub.s32 %v1634, %v1636
    %v1638 = vrot.slane %v1369, %v1637
    %v1640 = vunpack.c.l.s4 1983009808
    %v1641 = vunpack.c.0.s8 %v1640
    %v1642 = vlaneseq
    %v1643 = vshrl.u32 %v1642, 7
    %v1644 = vsub.s32 %v1641, %v1643
    %v1645 = vrot.slane %v1631, %v1644
    %v1646 = vcombine.high %v1638, %v1638
    %v1647 = vcombine.high %v1645, %v1645
    %v1648 = vcombine.high %v1374, %v1374
    %v1650 = vunpack.c.l.s4 1983009808
    %v1651 = vunpack.c.0.s8 %v1650
    %v1652 = vlaneseq
    %v1653 = vshrl.u32 %v1652, 7
    %v1654 = vsub.s32 %v1651, %v1653
    %v1655 = vrot.slane %v1374, %v1654
    %v1657 = vunpack.c.l.s4 1983009808
    %v1658 = vunpack.c.0.s8 %v1657
    %v1659 = vlaneseq
    %v1660 = vshrl.u32 %v1659, 7
    %v1661 = vsub.s32 %v1658, %v1660
    %v1662 = vrot.slane %v1648, %v1661
    %v1663 = vcombine.high %v1655, %v1655
    %v1664 = vcombine.high %v1662, %v1662
    %vm1729 = vcmask 1041408
    %v1730 = vsel %vm1729, %v1400, -inf
    %v1731 = vsel %vm1729, %v1417, -inf
    %v1732 = vmax.f32 %v1730, %v1731
    %v1733 = vrot.slane %v1732, 4
    %v1734 = vmax.f32 %v1732, %v1733
    %v1735 = vrot.slane %v1734, 2
    %v1736 = vmax.f32 %v1734, %v1735
    %v1737 = vrot.slane %v1736, 1
    %v1738 = vmax.f32 %v1736, %v1737
    %v1739 = vsel %vm1729, %v1408, -inf
    %v1740 = vsel %vm1729, %v1425, -inf
    %v1741 = vmax.f32 %v1739, %v1740
    %v1742 = vrot.slane %v1741, 4
    %v1743 = vmax.f32 %v1741, %v1742
    %v1744 = vrot.slane %v1743, 2
    %v1745 = vmax.f32 %v1743, %v1744
    %v1746 = vrot.slane %v1745, 1
    %v1747 = vmax.f32 %v1745, %v1746
    %v1748 = vsel %vm1729, %v1407, -inf
    %v1749 = vsel %vm1729, %v1424, -inf
    %v1750 = vmax.f32 %v1748, %v1749
    %v1751 = vrot.slane %v1750, 4
    %v1752 = vmax.f32 %v1750, %v1751
    %v1753 = vrot.slane %v1752, 2
    %v1754 = vmax.f32 %v1752, %v1753
    %v1755 = vrot.slane %v1754, 1
    %v1756 = vmax.f32 %v1754, %v1755
    %v1757 = vsel %vm1729, %v1409, -inf
    %v1758 = vsel %vm1729, %v1426, -inf
    %v1759 = vmax.f32 %v1757, %v1758
    %v1760 = vrot.slane %v1759, 4
    %v1761 = vmax.f32 %v1759, %v1760
    %v1762 = vrot.slane %v1761, 2
    %v1763 = vmax.f32 %v1761, %v1762
    %v1764 = vrot.slane %v1763, 1
    %v1765 = vmax.f32 %v1763, %v1764
    %v1766 = vsel %vm1729, %v1434, -inf
    %v1767 = vsel %vm1729, %v1451, -inf
    %v1768 = vmax.f32 %v1766, %v1767
    %v1769 = vrot.slane %v1768, 4
    %v1770 = vmax.f32 %v1768, %v1769
    %v1771 = vrot.slane %v1770, 2
    %v1772 = vmax.f32 %v1770, %v1771
    %v1773 = vrot.slane %v1772, 1
    %v1774 = vmax.f32 %v1772, %v1773
    %v1775 = vsel %vm1729, %v1442, -inf
    %v1776 = vsel %vm1729, %v1459, -inf
    %v1777 = vmax.f32 %v1775, %v1776
    %v1778 = vrot.slane %v1777, 4
    %v1779 = vmax.f32 %v1777, %v1778
    %v1780 = vrot.slane %v1779, 2
    %v1781 = vmax.f32 %v1779, %v1780
    %v1782 = vrot.slane %v1781, 1
    %v1783 = vmax.f32 %v1781, %v1782
    %v1784 = vsel %vm1729, %v1441, -inf
    %v1785 = vsel %vm1729, %v1458, -inf
    %v1786 = vmax.f32 %v1784, %v1785
    %v1787 = vrot.slane %v1786, 4
    %v1788 = vmax.f32 %v1786, %v1787
    %v1789 = vrot.slane %v1788, 2
    %v1790 = vmax.f32 %v1788, %v1789
    %v1791 = vrot.slane %v1790, 1
    %v1792 = vmax.f32 %v1790, %v1791
    %v1793 = vsel %vm1729, %v1443, -inf
    %v1794 = vsel %vm1729, %v1460, -inf
    %v1795 = vmax.f32 %v1793, %v1794
    %v1796 = vrot.slane %v1795, 4
    %v1797 = vmax.f32 %v1795, %v1796
    %v1798 = vrot.slane %v1797, 2
    %v1799 = vmax.f32 %v1797, %v1798
    %v1800 = vrot.slane %v1799, 1
    %v1801 = vmax.f32 %v1799, %v1800
    %v1802 = vsel %vm1729, %v1468, -inf
    %v1803 = vsel %vm1729, %v1485, -inf
    %v1804 = vmax.f32 %v1802, %v1803
    %v1805 = vrot.slane %v1804, 4
    %v1806 = vmax.f32 %v1804, %v1805
    %v1807 = vrot.slane %v1806, 2
    %v1808 = vmax.f32 %v1806, %v1807
    %v1809 = vrot.slane %v1808, 1
    %v1810 = vmax.f32 %v1808, %v1809
    %v1811 = vsel %vm1729, %v1476, -inf
    %v1812 = vsel %vm1729, %v1493, -inf
    %v1813 = vmax.f32 %v1811, %v1812
    %v1814 = vrot.slane %v1813, 4
    %v1815 = vmax.f32 %v1813, %v1814
    %v1816 = vrot.slane %v1815, 2
    %v1817 = vmax.f32 %v1815, %v1816
    %v1818 = vrot.slane %v1817, 1
    %v1819 = vmax.f32 %v1817, %v1818
    %v1820 = vsel %vm1729, %v1475, -inf
    %v1821 = vsel %vm1729, %v1492, -inf
    %v1822 = vmax.f32 %v1820, %v1821
    %v1823 = vrot.slane %v1822, 4
    %v1824 = vmax.f32 %v1822, %v1823
    %v1825 = vrot.slane %v1824, 2
    %v1826 = vmax.f32 %v1824, %v1825
    %v1827 = vrot.slane %v1826, 1
    %v1828 = vmax.f32 %v1826, %v1827
    %v1829 = vsel %vm1729, %v1477, -inf
    %v1830 = vsel %vm1729, %v1494, -inf
    %v1831 = vmax.f32 %v1829, %v1830
    %v1832 = vrot.slane %v1831, 4
    %v1833 = vmax.f32 %v1831, %v1832
    %v1834 = vrot.slane %v1833, 2
    %v1835 = vmax.f32 %v1833, %v1834
    %v1836 = vrot.slane %v1835, 1
    %v1837 = vmax.f32 %v1835, %v1836
    %v1838 = vsel %vm1729, %v1502, -inf
    %v1839 = vsel %vm1729, %v1519, -inf
    %v1840 = vmax.f32 %v1838, %v1839
    %v1841 = vrot.slane %v1840, 4
    %v1842 = vmax.f32 %v1840, %v1841
    %v1843 = vrot.slane %v1842, 2
    %v1844 = vmax.f32 %v1842, %v1843
    %v1845 = vrot.slane %v1844, 1
    %v1846 = vmax.f32 %v1844, %v1845
    %v1847 = vsel %vm1729, %v1510, -inf
    %v1848 = vsel %vm1729, %v1527, -inf
    %v1849 = vmax.f32 %v1847, %v1848
    %v1850 = vrot.slane %v1849, 4
    %v1851 = vmax.f32 %v1849, %v1850
    %v1852 = vrot.slane %v1851, 2
    %v1853 = vmax.f32 %v1851, %v1852
    %v1854 = vrot.slane %v1853, 1
    %v1855 = vmax.f32 %v1853, %v1854
    %v1856 = vsel %vm1729, %v1509, -inf
    %v1857 = vsel %vm1729, %v1526, -inf
    %v1858 = vmax.f32 %v1856, %v1857
    %v1859 = vrot.slane %v1858, 4
    %v1860 = vmax.f32 %v1858, %v1859
    %v1861 = vrot.slane %v1860, 2
    %v1862 = vmax.f32 %v1860, %v1861
    %v1863 = vrot.slane %v1862, 1
    %v1864 = vmax.f32 %v1862, %v1863
    %v1865 = vsel %vm1729, %v1511, -inf
    %v1866 = vsel %vm1729, %v1528, -inf
    %v1867 = vmax.f32 %v1865, %v1866
    %v1868 = vrot.slane %v1867, 4
    %v1869 = vmax.f32 %v1867, %v1868
    %v1870 = vrot.slane %v1869, 2
    %v1871 = vmax.f32 %v1869, %v1870
    %v1872 = vrot.slane %v1871, 1
    %v1873 = vmax.f32 %v1871, %v1872
    %v1874 = vsel %vm1729, %v1536, -inf
    %v1875 = vsel %vm1729, %v1553, -inf
    %v1876 = vmax.f32 %v1874, %v1875
    %v1877 = vrot.slane %v1876, 4
    %v1878 = vmax.f32 %v1876, %v1877
    %v1879 = vrot.slane %v1878, 2
    %v1880 = vmax.f32 %v1878, %v1879
    %v1881 = vrot.slane %v1880, 1
    %v1882 = vmax.f32 %v1880, %v1881
    %v1883 = vsel %vm1729, %v1544, -inf
    %v1884 = vsel %vm1729, %v1561, -inf
    %v1885 = vmax.f32 %v1883, %v1884
    %v1886 = vrot.slane %v1885, 4
    %v1887 = vmax.f32 %v1885, %v1886
    %v1888 = vrot.slane %v1887, 2
    %v1889 = vmax.f32 %v1887, %v1888
    %v1890 = vrot.slane %v1889, 1
    %v1891 = vmax.f32 %v1889, %v1890
    %v1892 = vsel %vm1729, %v1543, -inf
    %v1893 = vsel %vm1729, %v1560, -inf
    %v1894 = vmax.f32 %v1892, %v1893
    %v1895 = vrot.slane %v1894, 4
    %v1896 = vmax.f32 %v1894, %v1895
    %v1897 = vrot.slane %v1896, 2
    %v1898 = vmax.f32 %v1896, %v1897
    %v1899 = vrot.slane %v1898, 1
    %v1900 = vmax.f32 %v1898, %v1899
    %v1901 = vsel %vm1729, %v1545, -inf
    %v1902 = vsel %vm1729, %v1562, -inf
    %v1903 = vmax.f32 %v1901, %v1902
    %v1904 = vrot.slane %v1903, 4
    %v1905 = vmax.f32 %v1903, %v1904
    %v1906 = vrot.slane %v1905, 2
    %v1907 = vmax.f32 %v1905, %v1906
    %v1908 = vrot.slane %v1907, 1
    %v1909 = vmax.f32 %v1907, %v1908
    %v1910 = vsel %vm1729, %v1570, -inf
    %v1911 = vsel %vm1729, %v1587, -inf
    %v1912 = vmax.f32 %v1910, %v1911
    %v1913 = vrot.slane %v1912, 4
    %v1914 = vmax.f32 %v1912, %v1913
    %v1915 = vrot.slane %v1914, 2
    %v1916 = vmax.f32 %v1914, %v1915
    %v1917 = vrot.slane %v1916, 1
    %v1918 = vmax.f32 %v1916, %v1917
    %v1919 = vsel %vm1729, %v1578, -inf
    %v1920 = vsel %vm1729, %v1595, -inf
    %v1921 = vmax.f32 %v1919, %v1920
    %v1922 = vrot.slane %v1921, 4
    %v1923 = vmax.f32 %v1921, %v1922
    %v1924 = vrot.slane %v1923, 2
    %v1925 = vmax.f32 %v1923, %v1924
    %v1926 = vrot.slane %v1925, 1
    %v1927 = vmax.f32 %v1925, %v1926
    %v1928 = vsel %vm1729, %v1577, -inf
    %v1929 = vsel %vm1729, %v1594, -inf
    %v1930 = vmax.f32 %v1928, %v1929
    %v1931 = vrot.slane %v1930, 4
    %v1932 = vmax.f32 %v1930, %v1931
    %v1933 = vrot.slane %v1932, 2
    %v1934 = vmax.f32 %v1932, %v1933
    %v1935 = vrot.slane %v1934, 1
    %v1936 = vmax.f32 %v1934, %v1935
    %v1937 = vsel %vm1729, %v1579, -inf
    %v1938 = vsel %vm1729, %v1596, -inf
    %v1939 = vmax.f32 %v1937, %v1938
    %v1940 = vrot.slane %v1939, 4
    %v1941 = vmax.f32 %v1939, %v1940
    %v1942 = vrot.slane %v1941, 2
    %v1943 = vmax.f32 %v1941, %v1942
    %v1944 = vrot.slane %v1943, 1
    %v1945 = vmax.f32 %v1943, %v1944
    %v1946 = vsel %vm1729, %v1604, -inf
    %v1947 = vsel %vm1729, %v1621, -inf
    %v1948 = vmax.f32 %v1946, %v1947
    %v1949 = vrot.slane %v1948, 4
    %v1950 = vmax.f32 %v1948, %v1949
    %v1951 = vrot.slane %v1950, 2
    %v1952 = vmax.f32 %v1950, %v1951
    %v1953 = vrot.slane %v1952, 1
    %v1954 = vmax.f32 %v1952, %v1953
    %v1955 = vsel %vm1729, %v1612, -inf
    %v1956 = vsel %vm1729, %v1629, -inf
    %v1957 = vmax.f32 %v1955, %v1956
    %v1958 = vrot.slane %v1957, 4
    %v1959 = vmax.f32 %v1957, %v1958
    %v1960 = vrot.slane %v1959, 2
    %v1961 = vmax.f32 %v1959, %v1960
    %v1962 = vrot.slane %v1961, 1
    %v1963 = vmax.f32 %v1961, %v1962
    %v1964 = vsel %vm1729, %v1611, -inf
    %v1965 = vsel %vm1729, %v1628, -inf
    %v1966 = vmax.f32 %v1964, %v1965
    %v1967 = vrot.slane %v1966, 4
    %v1968 = vmax.f32 %v1966, %v1967
    %v1969 = vrot.slane %v1968, 2
    %v1970 = vmax.f32 %v1968, %v1969
    %v1971 = vrot.slane %v1970, 1
    %v1972 = vmax.f32 %v1970, %v1971
    %v1973 = vsel %vm1729, %v1613, -inf
    %v1974 = vsel %vm1729, %v1630, -inf
    %v1975 = vmax.f32 %v1973, %v1974
    %v1976 = vrot.slane %v1975, 4
    %v1977 = vmax.f32 %v1975, %v1976
    %v1978 = vrot.slane %v1977, 2
    %v1979 = vmax.f32 %v1977, %v1978
    %v1980 = vrot.slane %v1979, 1
    %v1981 = vmax.f32 %v1979, %v1980
    %v1982 = vsel %vm1729, %v1638, -inf
    %v1983 = vsel %vm1729, %v1655, -inf
    %v1984 = vmax.f32 %v1982, %v1983
    %v1985 = vrot.slane %v1984, 4
    %v1986 = vmax.f32 %v1984, %v1985
    %v1987 = vrot.slane %v1986, 2
    %v1988 = vmax.f32 %v1986, %v1987
    %v1989 = vrot.slane %v1988, 1
    %v1990 = vmax.f32 %v1988, %v1989
    %v1991 = vsel %vm1729, %v1646, -inf
    %v1992 = vsel %vm1729, %v1663, -inf
    %v1993 = vmax.f32 %v1991, %v1992
    %v1994 = vrot.slane %v1993, 4
    %v1995 = vmax.f32 %v1993, %v1994
    %v1996 = vrot.slane %v1995, 2
    %v1997 = vmax.f32 %v1995, %v1996
    %v1998 = vrot.slane %v1997, 1
    %v1999 = vmax.f32 %v1997, %v1998
    %v2000 = vsel %vm1729, %v1645, -inf
    %v2001 = vsel %vm1729, %v1662, -inf
    %v2002 = vmax.f32 %v2000, %v2001
    %v2003 = vrot.slane %v2002, 4
    %v2004 = vmax.f32 %v2002, %v2003
    %v2005 = vrot.slane %v2004, 2
    %v2006 = vmax.f32 %v2004, %v2005
    %v2007 = vrot.slane %v2006, 1
    %v2008 = vmax.f32 %v2006, %v2007
    %v2009 = vsel %vm1729, %v1647, -inf
    %v2010 = vsel %vm1729, %v1664, -inf
    %v2011 = vmax.f32 %v2009, %v2010
    %v2012 = vrot.slane %v2011, 4
    %v2013 = vmax.f32 %v2011, %v2012
    %v2014 = vrot.slane %v2013, 2
    %v2015 = vmax.f32 %v2013, %v2014
    %v2016 = vrot.slane %v2015, 1
    %v2017 = vmax.f32 %v2015, %v2016
    %v2018 = vmax.f32 %v1738, 0.0
    %v2019 = vmax.f32 %v1747, 0.0
    %v2020 = vmax.f32 %v1756, 0.0
    %v2021 = vmax.f32 %v1765, 0.0
    %v2022 = vmax.f32 %v1774, 0.0
    %v2023 = vmax.f32 %v1783, 0.0
    %v2024 = vmax.f32 %v1792, 0.0
    %v2025 = vmax.f32 %v1801, 0.0
    %v2026 = vmax.f32 %v1810, 0.0
    %v2027 = vmax.f32 %v1819, 0.0
    %v2028 = vmax.f32 %v1828, 0.0
    %v2029 = vmax.f32 %v1837, 0.0
    %v2030 = vmax.f32 %v1846, 0.0
    %v2031 = vmax.f32 %v1855, 0.0
    %v2032 = vmax.f32 %v1864, 0.0
    %v2033 = vmax.f32 %v1873, 0.0
    %v2034 = vmax.f32 %v1882, 0.0
    %v2035 = vmax.f32 %v1891, 0.0
    %v2036 = vmax.f32 %v1900, 0.0
    %v2037 = vmax.f32 %v1909, 0.0
    %v2038 = vmax.f32 %v1918, 0.0
    %v2039 = vmax.f32 %v1927, 0.0
    %v2040 = vmax.f32 %v1936, 0.0
    %v2041 = vmax.f32 %v1945, 0.0
    %v2042 = vmax.f32 %v1954, 0.0
    %v2043 = vmax.f32 %v1963, 0.0
    %v2044 = vmax.f32 %v1972, 0.0
    %v2045 = vmax.f32 %v1981, 0.0
    %v2046 = vmax.f32 %v1990, 0.0
    %v2047 = vmax.f32 %v1999, 0.0
    %v2048 = vmax.f32 %v2008, 0.0
    %v2049 = vmax.f32 %v2017, 0.0
    %v2053 = vunpack.c.l.s4 1983009808
    %v2054 = vunpack.c.0.s8 %v2053
    %v2055 = vlaneseq
    %v2056 = vshrl.u32 %v2055, 7
    %v2057 = vsub.s32 %v2054, %v2056
    %v2058 = vrot.slane %v2018, %v2057
    %v2060 = vunpack.c.l.s4 1983009808
    %v2061 = vunpack.c.0.s8 %v2060
    %v2062 = vlaneseq
    %v2063 = vshrl.u32 %v2062, 7
    %v2064 = vsub.s32 %v2061, %v2063
    %v2065 = vrot.slane %v2034, %v2064
    %vm2066 = vcmask 1044484
    %v2067 = vsel %vm2066, %v2058, %v2058
    %vm2068 = vcmask 1046534
    %v2069 = vsel %vm2068, %v2058, %v2067
    %v2070 = vrot.slane %v2065, 7
    %vm2071 = vcmask 1041409
    %v2072 = vsel %vm2071, %v2070, %v2069
    %vm2073 = vcmask 1043459
    %v2074 = vsel %vm2073, %v2070, %v2072
    %vm2075 = vcmask 1045509
    %v2076 = vsel %vm2075, %v2070, %v2074
    %vm2077 = vcmask 1047559
    %v2078 = vsel %vm2077, %v2070, %v2076
    %2080 = vst [vmem:[#allocation4] sm:$0x3] %v2078
    %v2084 = vunpack.c.l.s4 1983009808
    %v2085 = vunpack.c.0.s8 %v2084
    %v2086 = vlaneseq
    %v2087 = vshrl.u32 %v2086, 7
    %v2088 = vsub.s32 %v2085, %v2087
    %v2089 = vrot.slane %v2019, %v2088
    %v2091 = vunpack.c.l.s4 1983009808
    %v2092 = vunpack.c.0.s8 %v2091
    %v2093 = vlaneseq
    %v2094 = vshrl.u32 %v2093, 7
    %v2095 = vsub.s32 %v2092, %v2094
    %v2096 = vrot.slane %v2035, %v2095
    %v2097 = vsel %vm2066, %v2089, %v2089
    %v2098 = vsel %vm2068, %v2089, %v2097
    %v2099 = vrot.slane %v2096, 7
    %v2100 = vsel %vm2071, %v2099, %v2098
    %v2101 = vsel %vm2073, %v2099, %v2100
    %v2102 = vsel %vm2075, %v2099, %v2101
    %v2103 = vsel %vm2077, %v2099, %v2102
    %2105 = vst [vmem:[#allocation4 + $0x2] sm:$0x3] %v2103
    %v2109 = vunpack.c.l.s4 1983009808
    %v2110 = vunpack.c.0.s8 %v2109
    %v2111 = vlaneseq
    %v2112 = vshrl.u32 %v2111, 7
    %v2113 = vsub.s32 %v2110, %v2112
    %v2114 = vrot.slane %v2020, %v2113
    %v2116 = vunpack.c.l.s4 1983009808
    %v2117 = vunpack.c.0.s8 %v2116
    %v2118 = vlaneseq
    %v2119 = vshrl.u32 %v2118, 7
    %v2120 = vsub.s32 %v2117, %v2119
    %v2121 = vrot.slane %v2036, %v2120
    %v2122 = vsel %vm2066, %v2114, %v2114
    %v2123 = vsel %vm2068, %v2114, %v2122
    %v2124 = vrot.slane %v2121, 7
    %v2125 = vsel %vm2071, %v2124, %v2123
    %v2126 = vsel %vm2073, %v2124, %v2125
    %v2127 = vsel %vm2075, %v2124, %v2126
    %v2128 = vsel %vm2077, %v2124, %v2127
    %2130 = vst [vmem:[#allocation4 + $0x4] sm:$0x3] %v2128
    %v2134 = vunpack.c.l.s4 1983009808
    %v2135 = vunpack.c.0.s8 %v2134
    %v2136 = vlaneseq
    %v2137 = vshrl.u32 %v2136, 7
    %v2138 = vsub.s32 %v2135, %v2137
    %v2139 = vrot.slane %v2021, %v2138
    %v2141 = vunpack.c.l.s4 1983009808
    %v2142 = vunpack.c.0.s8 %v2141
    %v2143 = vlaneseq
    %v2144 = vshrl.u32 %v2143, 7
    %v2145 = vsub.s32 %v2142, %v2144
    %v2146 = vrot.slane %v2037, %v2145
    %v2147 = vsel %vm2066, %v2139, %v2139
    %v2148 = vsel %vm2068, %v2139, %v2147
    %v2149 = vrot.slane %v2146, 7
    %v2150 = vsel %vm2071, %v2149, %v2148
    %v2151 = vsel %vm2073, %v2149, %v2150
    %v2152 = vsel %vm2075, %v2149, %v2151
    %v2153 = vsel %vm2077, %v2149, %v2152
    %2155 = vst [vmem:[#allocation4 + $0x6] sm:$0x3] %v2153
    %v2159 = vunpack.c.l.s4 1983009808
    %v2160 = vunpack.c.0.s8 %v2159
    %v2161 = vlaneseq
    %v2162 = vshrl.u32 %v2161, 7
    %v2163 = vsub.s32 %v2160, %v2162
    %v2164 = vrot.slane %v2022, %v2163
    %v2166 = vunpack.c.l.s4 1983009808
    %v2167 = vunpack.c.0.s8 %v2166
    %v2168 = vlaneseq
    %v2169 = vshrl.u32 %v2168, 7
    %v2170 = vsub.s32 %v2167, %v2169
    %v2171 = vrot.slane %v2038, %v2170
    %v2172 = vsel %vm2066, %v2164, %v2164
    %v2173 = vsel %vm2068, %v2164, %v2172
    %v2174 = vrot.slane %v2171, 7
    %v2175 = vsel %vm2071, %v2174, %v2173
    %v2176 = vsel %vm2073, %v2174, %v2175
    %v2177 = vsel %vm2075, %v2174, %v2176
    %v2178 = vsel %vm2077, %v2174, %v2177
    %2180 = vst [vmem:[#allocation4 + $0x8] sm:$0x3] %v2178
    %v2184 = vunpack.c.l.s4 1983009808
    %v2185 = vunpack.c.0.s8 %v2184
    %v2186 = vlaneseq
    %v2187 = vshrl.u32 %v2186, 7
    %v2188 = vsub.s32 %v2185, %v2187
    %v2189 = vrot.slane %v2023, %v2188
    %v2191 = vunpack.c.l.s4 1983009808
    %v2192 = vunpack.c.0.s8 %v2191
    %v2193 = vlaneseq
    %v2194 = vshrl.u32 %v2193, 7
    %v2195 = vsub.s32 %v2192, %v2194
    %v2196 = vrot.slane %v2039, %v2195
    %v2197 = vsel %vm2066, %v2189, %v2189
    %v2198 = vsel %vm2068, %v2189, %v2197
    %v2199 = vrot.slane %v2196, 7
    %v2200 = vsel %vm2071, %v2199, %v2198
    %v2201 = vsel %vm2073, %v2199, %v2200
    %v2202 = vsel %vm2075, %v2199, %v2201
    %v2203 = vsel %vm2077, %v2199, %v2202
    %2205 = vst [vmem:[#allocation4 + $0xa] sm:$0x3] %v2203
    %v2209 = vunpack.c.l.s4 1983009808
    %v2210 = vunpack.c.0.s8 %v2209
    %v2211 = vlaneseq
    %v2212 = vshrl.u32 %v2211, 7
    %v2213 = vsub.s32 %v2210, %v2212
    %v2214 = vrot.slane %v2024, %v2213
    %v2216 = vunpack.c.l.s4 1983009808
    %v2217 = vunpack.c.0.s8 %v2216
    %v2218 = vlaneseq
    %v2219 = vshrl.u32 %v2218, 7
    %v2220 = vsub.s32 %v2217, %v2219
    %v2221 = vrot.slane %v2040, %v2220
    %v2222 = vsel %vm2066, %v2214, %v2214
    %v2223 = vsel %vm2068, %v2214, %v2222
    %v2224 = vrot.slane %v2221, 7
    %v2225 = vsel %vm2071, %v2224, %v2223
    %v2226 = vsel %vm2073, %v2224, %v2225
    %v2227 = vsel %vm2075, %v2224, %v2226
    %v2228 = vsel %vm2077, %v2224, %v2227
    %2230 = vst [vmem:[#allocation4 + $0xc] sm:$0x3] %v2228
    %v2234 = vunpack.c.l.s4 1983009808
    %v2235 = vunpack.c.0.s8 %v2234
    %v2236 = vlaneseq
    %v2237 = vshrl.u32 %v2236, 7
    %v2238 = vsub.s32 %v2235, %v2237
    %v2239 = vrot.slane %v2025, %v2238
    %v2241 = vunpack.c.l.s4 1983009808
    %v2242 = vunpack.c.0.s8 %v2241
    %v2243 = vlaneseq
    %v2244 = vshrl.u32 %v2243, 7
    %v2245 = vsub.s32 %v2242, %v2244
    %v2246 = vrot.slane %v2041, %v2245
    %v2247 = vsel %vm2066, %v2239, %v2239
    %v2248 = vsel %vm2068, %v2239, %v2247
    %v2249 = vrot.slane %v2246, 7
    %v2250 = vsel %vm2071, %v2249, %v2248
    %v2251 = vsel %vm2073, %v2249, %v2250
    %v2252 = vsel %vm2075, %v2249, %v2251
    %v2253 = vsel %vm2077, %v2249, %v2252
    %2255 = vst [vmem:[#allocation4 + $0xe] sm:$0x3] %v2253
    %v2259 = vunpack.c.l.s4 1983009808
    %v2260 = vunpack.c.0.s8 %v2259
    %v2261 = vlaneseq
    %v2262 = vshrl.u32 %v2261, 7
    %v2263 = vsub.s32 %v2260, %v2262
    %v2264 = vrot.slane %v2026, %v2263
    %v2266 = vunpack.c.l.s4 1983009808
    %v2267 = vunpack.c.0.s8 %v2266
    %v2268 = vlaneseq
    %v2269 = vshrl.u32 %v2268, 7
    %v2270 = vsub.s32 %v2267, %v2269
    %v2271 = vrot.slane %v2042, %v2270
    %v2272 = vsel %vm2066, %v2264, %v2264
    %v2273 = vsel %vm2068, %v2264, %v2272
    %v2274 = vrot.slane %v2271, 7
    %v2275 = vsel %vm2071, %v2274, %v2273
    %v2276 = vsel %vm2073, %v2274, %v2275
    %v2277 = vsel %vm2075, %v2274, %v2276
    %v2278 = vsel %vm2077, %v2274, %v2277
    %2280 = vst [vmem:[#allocation4 + $0x10] sm:$0x3] %v2278
    %v2284 = vunpack.c.l.s4 1983009808
    %v2285 = vunpack.c.0.s8 %v2284
    %v2286 = vlaneseq
    %v2287 = vshrl.u32 %v2286, 7
    %v2288 = vsub.s32 %v2285, %v2287
    %v2289 = vrot.slane %v2027, %v2288
    %v2291 = vunpack.c.l.s4 1983009808
    %v2292 = vunpack.c.0.s8 %v2291
    %v2293 = vlaneseq
    %v2294 = vshrl.u32 %v2293, 7
    %v2295 = vsub.s32 %v2292, %v2294
    %v2296 = vrot.slane %v2043, %v2295
    %v2297 = vsel %vm2066, %v2289, %v2289
    %v2298 = vsel %vm2068, %v2289, %v2297
    %v2299 = vrot.slane %v2296, 7
    %v2300 = vsel %vm2071, %v2299, %v2298
    %v2301 = vsel %vm2073, %v2299, %v2300
    %v2302 = vsel %vm2075, %v2299, %v2301
    %v2303 = vsel %vm2077, %v2299, %v2302
    %2305 = vst [vmem:[#allocation4 + $0x12] sm:$0x3] %v2303
    %v2309 = vunpack.c.l.s4 1983009808
    %v2310 = vunpack.c.0.s8 %v2309
    %v2311 = vlaneseq
    %v2312 = vshrl.u32 %v2311, 7
    %v2313 = vsub.s32 %v2310, %v2312
    %v2314 = vrot.slane %v2028, %v2313
    %v2316 = vunpack.c.l.s4 1983009808
    %v2317 = vunpack.c.0.s8 %v2316
    %v2318 = vlaneseq
    %v2319 = vshrl.u32 %v2318, 7
    %v2320 = vsub.s32 %v2317, %v2319
    %v2321 = vrot.slane %v2044, %v2320
    %v2322 = vsel %vm2066, %v2314, %v2314
    %v2323 = vsel %vm2068, %v2314, %v2322
    %v2324 = vrot.slane %v2321, 7
    %v2325 = vsel %vm2071, %v2324, %v2323
    %v2326 = vsel %vm2073, %v2324, %v2325
    %v2327 = vsel %vm2075, %v2324, %v2326
    %v2328 = vsel %vm2077, %v2324, %v2327
    %2330 = vst [vmem:[#allocation4 + $0x14] sm:$0x3] %v2328
    %v2334 = vunpack.c.l.s4 1983009808
    %v2335 = vunpack.c.0.s8 %v2334
    %v2336 = vlaneseq
    %v2337 = vshrl.u32 %v2336, 7
    %v2338 = vsub.s32 %v2335, %v2337
    %v2339 = vrot.slane %v2029, %v2338
    %v2341 = vunpack.c.l.s4 1983009808
    %v2342 = vunpack.c.0.s8 %v2341
    %v2343 = vlaneseq
    %v2344 = vshrl.u32 %v2343, 7
    %v2345 = vsub.s32 %v2342, %v2344
    %v2346 = vrot.slane %v2045, %v2345
    %v2347 = vsel %vm2066, %v2339, %v2339
    %v2348 = vsel %vm2068, %v2339, %v2347
    %v2349 = vrot.slane %v2346, 7
    %v2350 = vsel %vm2071, %v2349, %v2348
    %v2351 = vsel %vm2073, %v2349, %v2350
    %v2352 = vsel %vm2075, %v2349, %v2351
    %v2353 = vsel %vm2077, %v2349, %v2352
    %2355 = vst [vmem:[#allocation4 + $0x16] sm:$0x3] %v2353
    %v2359 = vunpack.c.l.s4 1983009808
    %v2360 = vunpack.c.0.s8 %v2359
    %v2361 = vlaneseq
    %v2362 = vshrl.u32 %v2361, 7
    %v2363 = vsub.s32 %v2360, %v2362
    %v2364 = vrot.slane %v2030, %v2363
    %v2366 = vunpack.c.l.s4 1983009808
    %v2367 = vunpack.c.0.s8 %v2366
    %v2368 = vlaneseq
    %v2369 = vshrl.u32 %v2368, 7
    %v2370 = vsub.s32 %v2367, %v2369
    %v2371 = vrot.slane %v2046, %v2370
    %v2372 = vsel %vm2066, %v2364, %v2364
    %v2373 = vsel %vm2068, %v2364, %v2372
    %v2374 = vrot.slane %v2371, 7
    %v2375 = vsel %vm2071, %v2374, %v2373
    %v2376 = vsel %vm2073, %v2374, %v2375
    %v2377 = vsel %vm2075, %v2374, %v2376
    %v2378 = vsel %vm2077, %v2374, %v2377
    %2380 = vst [vmem:[#allocation4 + $0x18] sm:$0x3] %v2378
    %v2384 = vunpack.c.l.s4 1983009808
    %v2385 = vunpack.c.0.s8 %v2384
    %v2386 = vlaneseq
    %v2387 = vshrl.u32 %v2386, 7
    %v2388 = vsub.s32 %v2385, %v2387
    %v2389 = vrot.slane %v2031, %v2388
    %v2391 = vunpack.c.l.s4 1983009808
    %v2392 = vunpack.c.0.s8 %v2391
    %v2393 = vlaneseq
    %v2394 = vshrl.u32 %v2393, 7
    %v2395 = vsub.s32 %v2392, %v2394
    %v2396 = vrot.slane %v2047, %v2395
    %v2397 = vsel %vm2066, %v2389, %v2389
    %v2398 = vsel %vm2068, %v2389, %v2397
    %v2399 = vrot.slane %v2396, 7
    %v2400 = vsel %vm2071, %v2399, %v2398
    %v2401 = vsel %vm2073, %v2399, %v2400
    %v2402 = vsel %vm2075, %v2399, %v2401
    %v2403 = vsel %vm2077, %v2399, %v2402
    %2405 = vst [vmem:[#allocation4 + $0x1a] sm:$0x3] %v2403
    %v2409 = vunpack.c.l.s4 1983009808
    %v2410 = vunpack.c.0.s8 %v2409
    %v2411 = vlaneseq
    %v2412 = vshrl.u32 %v2411, 7
    %v2413 = vsub.s32 %v2410, %v2412
    %v2414 = vrot.slane %v2032, %v2413
    %v2416 = vunpack.c.l.s4 1983009808
    %v2417 = vunpack.c.0.s8 %v2416
    %v2418 = vlaneseq
    %v2419 = vshrl.u32 %v2418, 7
    %v2420 = vsub.s32 %v2417, %v2419
    %v2421 = vrot.slane %v2048, %v2420
    %v2422 = vsel %vm2066, %v2414, %v2414
    %v2423 = vsel %vm2068, %v2414, %v2422
    %v2424 = vrot.slane %v2421, 7
    %v2425 = vsel %vm2071, %v2424, %v2423
    %v2426 = vsel %vm2073, %v2424, %v2425
    %v2427 = vsel %vm2075, %v2424, %v2426
    %v2428 = vsel %vm2077, %v2424, %v2427
    %2430 = vst [vmem:[#allocation4 + $0x1c] sm:$0x3] %v2428
    %v2434 = vunpack.c.l.s4 1983009808
    %v2435 = vunpack.c.0.s8 %v2434
    %v2436 = vlaneseq
    %v2437 = vshrl.u32 %v2436, 7
    %v2438 = vsub.s32 %v2435, %v2437
    %v2439 = vrot.slane %v2033, %v2438
    %v2441 = vunpack.c.l.s4 1983009808
    %v2442 = vunpack.c.0.s8 %v2441
    %v2443 = vlaneseq
    %v2444 = vshrl.u32 %v2443, 7
    %v2445 = vsub.s32 %v2442, %v2444
    %v2446 = vrot.slane %v2049, %v2445
    %v2447 = vsel %vm2066, %v2439, %v2439
    %v2448 = vsel %vm2068, %v2439, %v2447
    %v2449 = vrot.slane %v2446, 7
    %v2450 = vsel %vm2071, %v2449, %v2448
    %v2451 = vsel %vm2073, %v2449, %v2450
    %v2452 = vsel %vm2075, %v2449, %v2451
    %v2453 = vsel %vm2077, %v2449, %v2452
    %2455 = vst [vmem:[#allocation4 + $0x1e] sm:$0x3] %v2453
    %v2456 = vld [vmem:[#allocation4] sm:$0xff]
    %v2457 = vld [vmem:[#allocation4 + $0x8] sm:$0xff]
    %v2458 = vld [vmem:[#allocation4 + $0x10] sm:$0xff]
    %v2459 = vld [vmem:[#allocation4 + $0x18] sm:$0xff]
    %v2460 = vld [vmem:[#allocation8] sm:$0xff]
    %v2461 = vld [vmem:[#allocation8 + $0x8] sm:$0xff]
    %v2462 = vld [vmem:[#allocation8 + $0x10] sm:$0xff]
    %v2463 = vld [vmem:[#allocation8 + $0x18] sm:$0xff]
    %v2464 = vld [vmem:[#allocation8 + $0x20] sm:$0xff]
    %v2465 = vld [vmem:[#allocation8 + $0x28] sm:$0xff]
    %v2466 = vld [vmem:[#allocation8 + $0x30] sm:$0xff]
    %v2467 = vld [vmem:[#allocation8 + $0x38] sm:$0xff]
    %v2468 = vld [vmem:[#allocation8 + $0x40] sm:$0xff]
    %v2469 = vld [vmem:[#allocation8 + $0x48] sm:$0xff]
    %v2470 = vld [vmem:[#allocation8 + $0x50] sm:$0xff]
    %v2471 = vld [vmem:[#allocation8 + $0x58] sm:$0xff]
    %v2472 = vld [vmem:[#allocation8 + $0x60] sm:$0xff]
    %v2473 = vld [vmem:[#allocation8 + $0x68] sm:$0xff]
    %v2474 = vld [vmem:[#allocation8 + $0x70] sm:$0xff]
    %v2475 = vld [vmem:[#allocation8 + $0x78] sm:$0xff]
    %v2476 = vld [vmem:[#allocation8 + $0x80] sm:$0xff]
    %v2477 = vld [vmem:[#allocation8 + $0x88] sm:$0xff]
    %v2478 = vld [vmem:[#allocation8 + $0x90] sm:$0xff]
    %v2479 = vld [vmem:[#allocation8 + $0x98] sm:$0xff]
    %v2480 = vld [vmem:[#allocation8 + $0xa0] sm:$0xff]
    %v2481 = vld [vmem:[#allocation8 + $0xa8] sm:$0xff]
    %v2482 = vld [vmem:[#allocation8 + $0xb0] sm:$0xff]
    %v2483 = vld [vmem:[#allocation8 + $0xb8] sm:$0xff]
    %v2484 = vld [vmem:[#allocation8 + $0xc0] sm:$0xff]
    %v2485 = vld [vmem:[#allocation8 + $0xc8] sm:$0xff]
    %v2486 = vld [vmem:[#allocation8 + $0xd0] sm:$0xff]
    %v2487 = vld [vmem:[#allocation8 + $0xd8] sm:$0xff]
    %v2488 = vld [vmem:[#allocation8 + $0xe0] sm:$0xff]
    %v2489 = vld [vmem:[#allocation8 + $0xe8] sm:$0xff]
    %v2490 = vld [vmem:[#allocation8 + $0xf0] sm:$0xff]
    %v2491 = vld [vmem:[#allocation8 + $0xf8] sm:$0xff]
    %v2492 = vld [vmem:[#allocation8 + $0x100] sm:$0xff]
    %v2493 = vld [vmem:[#allocation8 + $0x108] sm:$0xff]
    %v2494 = vld [vmem:[#allocation8 + $0x110] sm:$0xff]
    %v2495 = vld [vmem:[#allocation8 + $0x118] sm:$0xff]
    %v2496 = vld [vmem:[#allocation8 + $0x120] sm:$0xff]
    %v2497 = vld [vmem:[#allocation8 + $0x128] sm:$0xff]
    %v2498 = vld [vmem:[#allocation8 + $0x130] sm:$0xff]
    %v2499 = vld [vmem:[#allocation8 + $0x138] sm:$0xff]
    %v2500 = vld [vmem:[#allocation8 + $0x140] sm:$0xff]
    %v2501 = vld [vmem:[#allocation8 + $0x148] sm:$0xff]
    %v2502 = vld [vmem:[#allocation8 + $0x150] sm:$0xff]
    %v2503 = vld [vmem:[#allocation8 + $0x158] sm:$0xff]
    %v2504 = vld [vmem:[#allocation8 + $0x160] sm:$0xff]
    %v2505 = vld [vmem:[#allocation8 + $0x168] sm:$0xff]
    %v2506 = vld [vmem:[#allocation8 + $0x170] sm:$0xff]
    %v2507 = vld [vmem:[#allocation8 + $0x178] sm:$0xff]
    %v2508 = vld [vmem:[#allocation8 + $0x180] sm:$0xff]
    %v2509 = vld [vmem:[#allocation8 + $0x188] sm:$0xff]
    %v2510 = vld [vmem:[#allocation8 + $0x190] sm:$0xff]
    %v2511 = vld [vmem:[#allocation8 + $0x198] sm:$0xff]
    %v2512 = vld [vmem:[#allocation8 + $0x1a0] sm:$0xff]
    %v2513 = vld [vmem:[#allocation8 + $0x1a8] sm:$0xff]
    %v2514 = vld [vmem:[#allocation8 + $0x1b0] sm:$0xff]
    %v2515 = vld [vmem:[#allocation8 + $0x1b8] sm:$0xff]
    %v2516 = vld [vmem:[#allocation8 + $0x1c0] sm:$0xff]
    %v2517 = vld [vmem:[#allocation8 + $0x1c8] sm:$0xff]
    %v2518 = vld [vmem:[#allocation8 + $0x1d0] sm:$0xff]
    %v2519 = vld [vmem:[#allocation8 + $0x1d8] sm:$0xff]
    %v2520 = vld [vmem:[#allocation8 + $0x1e0] sm:$0xff]
    %v2521 = vld [vmem:[#allocation8 + $0x1e8] sm:$0xff]
    %v2522 = vld [vmem:[#allocation8 + $0x1f0] sm:$0xff]
    %v2523 = vld [vmem:[#allocation8 + $0x1f8] sm:$0xff]
    %v2524 = vld [vmem:[#allocation8 + $0x200] sm:$0xff]
    %v2525 = vld [vmem:[#allocation8 + $0x208] sm:$0xff]
    %v2526 = vld [vmem:[#allocation8 + $0x210] sm:$0xff]
    %v2527 = vld [vmem:[#allocation8 + $0x218] sm:$0xff]
    %v2528 = vld [vmem:[#allocation8 + $0x220] sm:$0xff]
    %v2529 = vld [vmem:[#allocation8 + $0x228] sm:$0xff]
    %v2530 = vld [vmem:[#allocation8 + $0x230] sm:$0xff]
    %v2531 = vld [vmem:[#allocation8 + $0x238] sm:$0xff]
    %v2532 = vld [vmem:[#allocation8 + $0x240] sm:$0xff]
    %v2533 = vld [vmem:[#allocation8 + $0x248] sm:$0xff]
    %v2534 = vld [vmem:[#allocation8 + $0x250] sm:$0xff]
    %v2535 = vld [vmem:[#allocation8 + $0x258] sm:$0xff]
    %v2536 = vld [vmem:[#allocation8 + $0x260] sm:$0xff]
    %v2537 = vld [vmem:[#allocation8 + $0x268] sm:$0xff]
    %v2538 = vld [vmem:[#allocation8 + $0x270] sm:$0xff]
    %v2539 = vld [vmem:[#allocation8 + $0x278] sm:$0xff]
    %v2540 = vld [vmem:[#allocation8 + $0x280] sm:$0xff]
    %v2541 = vld [vmem:[#allocation8 + $0x288] sm:$0xff]
    %v2542 = vld [vmem:[#allocation8 + $0x290] sm:$0xff]
    %v2543 = vld [vmem:[#allocation8 + $0x298] sm:$0xff]
    %v2544 = vld [vmem:[#allocation8 + $0x2a0] sm:$0xff]
    %v2545 = vld [vmem:[#allocation8 + $0x2a8] sm:$0xff]
    %v2546 = vld [vmem:[#allocation8 + $0x2b0] sm:$0xff]
    %v2547 = vld [vmem:[#allocation8 + $0x2b8] sm:$0xff]
    %v2548 = vld [vmem:[#allocation8 + $0x2c0] sm:$0xff]
    %v2549 = vld [vmem:[#allocation8 + $0x2c8] sm:$0xff]
    %v2550 = vld [vmem:[#allocation8 + $0x2d0] sm:$0xff]
    %v2551 = vld [vmem:[#allocation8 + $0x2d8] sm:$0xff]
    %v2552 = vld [vmem:[#allocation8 + $0x2e0] sm:$0xff]
    %v2553 = vld [vmem:[#allocation8 + $0x2e8] sm:$0xff]
    %v2554 = vld [vmem:[#allocation8 + $0x2f0] sm:$0xff]
    %v2555 = vld [vmem:[#allocation8 + $0x2f8] sm:$0xff]
    %v2556 = vld [vmem:[#allocation8 + $0x300] sm:$0xff]
    %v2557 = vld [vmem:[#allocation8 + $0x308] sm:$0xff]
    %v2558 = vld [vmem:[#allocation8 + $0x310] sm:$0xff]
    %v2559 = vld [vmem:[#allocation8 + $0x318] sm:$0xff]
    %v2560 = vld [vmem:[#allocation8 + $0x320] sm:$0xff]
    %v2561 = vld [vmem:[#allocation8 + $0x328] sm:$0xff]
    %v2562 = vld [vmem:[#allocation8 + $0x330] sm:$0xff]
    %v2563 = vld [vmem:[#allocation8 + $0x338] sm:$0xff]
    %v2564 = vld [vmem:[#allocation8 + $0x340] sm:$0xff]
    %v2565 = vld [vmem:[#allocation8 + $0x348] sm:$0xff]
    %v2566 = vld [vmem:[#allocation8 + $0x350] sm:$0xff]
    %v2567 = vld [vmem:[#allocation8 + $0x358] sm:$0xff]
    %v2568 = vld [vmem:[#allocation8 + $0x360] sm:$0xff]
    %v2569 = vld [vmem:[#allocation8 + $0x368] sm:$0xff]
    %v2570 = vld [vmem:[#allocation8 + $0x370] sm:$0xff]
    %v2571 = vld [vmem:[#allocation8 + $0x378] sm:$0xff]
    %v2572 = vld [vmem:[#allocation8 + $0x380] sm:$0xff]
    %v2573 = vld [vmem:[#allocation8 + $0x388] sm:$0xff]
    %v2574 = vld [vmem:[#allocation8 + $0x390] sm:$0xff]
    %v2575 = vld [vmem:[#allocation8 + $0x398] sm:$0xff]
    %v2576 = vld [vmem:[#allocation8 + $0x3a0] sm:$0xff]
    %v2577 = vld [vmem:[#allocation8 + $0x3a8] sm:$0xff]
    %v2578 = vld [vmem:[#allocation8 + $0x3b0] sm:$0xff]
    %v2579 = vld [vmem:[#allocation8 + $0x3b8] sm:$0xff]
    %v2580 = vld [vmem:[#allocation8 + $0x3c0] sm:$0xff]
    %v2581 = vld [vmem:[#allocation8 + $0x3c8] sm:$0xff]
    %v2582 = vld [vmem:[#allocation8 + $0x3d0] sm:$0xff]
    %v2583 = vld [vmem:[#allocation8 + $0x3d8] sm:$0xff]
    %v2584 = vld [vmem:[#allocation8 + $0x3e0] sm:$0xff]
    %v2585 = vld [vmem:[#allocation8 + $0x3e8] sm:$0xff]
    %v2586 = vld [vmem:[#allocation8 + $0x3f0] sm:$0xff]
    %v2587 = vld [vmem:[#allocation8 + $0x3f8] sm:$0xff]
    %v2588 = vld [vmem:[#allocation8 + $0x400] sm:$0xff]
    %v2589 = vld [vmem:[#allocation8 + $0x408] sm:$0xff]
    %v2590 = vld [vmem:[#allocation8 + $0x410] sm:$0xff]
    %v2591 = vld [vmem:[#allocation8 + $0x418] sm:$0xff]
    %v2592 = vld [vmem:[#allocation8 + $0x420] sm:$0xff]
    %v2593 = vld [vmem:[#allocation8 + $0x428] sm:$0xff]
    %v2594 = vld [vmem:[#allocation8 + $0x430] sm:$0xff]
    %v2595 = vld [vmem:[#allocation8 + $0x438] sm:$0xff]
    %v2596 = vld [vmem:[#allocation8 + $0x440] sm:$0xff]
    %v2597 = vld [vmem:[#allocation8 + $0x448] sm:$0xff]
    %v2598 = vld [vmem:[#allocation8 + $0x450] sm:$0xff]
    %v2599 = vld [vmem:[#allocation8 + $0x458] sm:$0xff]
    %v2600 = vld [vmem:[#allocation8 + $0x460] sm:$0xff]
    %v2601 = vld [vmem:[#allocation8 + $0x468] sm:$0xff]
    %v2602 = vld [vmem:[#allocation8 + $0x470] sm:$0xff]
    %v2603 = vld [vmem:[#allocation8 + $0x478] sm:$0xff]
    %v2604 = vld [vmem:[#allocation8 + $0x480] sm:$0xff]
    %v2605 = vld [vmem:[#allocation8 + $0x488] sm:$0xff]
    %v2606 = vld [vmem:[#allocation8 + $0x490] sm:$0xff]
    %v2607 = vld [vmem:[#allocation8 + $0x498] sm:$0xff]
    %v2608 = vld [vmem:[#allocation8 + $0x4a0] sm:$0xff]
    %v2609 = vld [vmem:[#allocation8 + $0x4a8] sm:$0xff]
    %v2610 = vld [vmem:[#allocation8 + $0x4b0] sm:$0xff]
    %v2611 = vld [vmem:[#allocation8 + $0x4b8] sm:$0xff]
    %v2612 = vld [vmem:[#allocation8 + $0x4c0] sm:$0xff]
    %v2613 = vld [vmem:[#allocation8 + $0x4c8] sm:$0xff]
    %v2614 = vld [vmem:[#allocation8 + $0x4d0] sm:$0xff]
    %v2615 = vld [vmem:[#allocation8 + $0x4d8] sm:$0xff]
    %v2616 = vld [vmem:[#allocation8 + $0x4e0] sm:$0xff]
    %v2617 = vld [vmem:[#allocation8 + $0x4e8] sm:$0xff]
    %v2618 = vld [vmem:[#allocation8 + $0x4f0] sm:$0xff]
    %v2619 = vld [vmem:[#allocation8 + $0x4f8] sm:$0xff]
    %v2620 = vld [vmem:[#allocation8 + $0x500] sm:$0xff]
    %v2621 = vld [vmem:[#allocation8 + $0x508] sm:$0xff]
    %v2622 = vld [vmem:[#allocation8 + $0x510] sm:$0xff]
    %v2623 = vld [vmem:[#allocation8 + $0x518] sm:$0xff]
    %v2624 = vld [vmem:[#allocation8 + $0x520] sm:$0xff]
    %v2625 = vld [vmem:[#allocation8 + $0x528] sm:$0xff]
    %v2626 = vld [vmem:[#allocation8 + $0x530] sm:$0xff]
    %v2627 = vld [vmem:[#allocation8 + $0x538] sm:$0xff]
    %v2628 = vld [vmem:[#allocation8 + $0x540] sm:$0xff]
    %v2629 = vld [vmem:[#allocation8 + $0x548] sm:$0xff]
    %v2630 = vld [vmem:[#allocation8 + $0x550] sm:$0xff]
    %v2631 = vld [vmem:[#allocation8 + $0x558] sm:$0xff]
    %v2632 = vld [vmem:[#allocation8 + $0x560] sm:$0xff]
    %v2633 = vld [vmem:[#allocation8 + $0x568] sm:$0xff]
    %v2634 = vld [vmem:[#allocation8 + $0x570] sm:$0xff]
    %v2635 = vld [vmem:[#allocation8 + $0x578] sm:$0xff]
    %v2636 = vld [vmem:[#allocation8 + $0x580] sm:$0xff]
    %v2637 = vld [vmem:[#allocation8 + $0x588] sm:$0xff]
    %v2638 = vld [vmem:[#allocation8 + $0x590] sm:$0xff]
    %v2639 = vld [vmem:[#allocation8 + $0x598] sm:$0xff]
    %v2640 = vld [vmem:[#allocation8 + $0x5a0] sm:$0xff]
    %v2641 = vld [vmem:[#allocation8 + $0x5a8] sm:$0xff]
    %v2642 = vld [vmem:[#allocation8 + $0x5b0] sm:$0xff]
    %v2643 = vld [vmem:[#allocation8 + $0x5b8] sm:$0xff]
    %v2644 = vld [vmem:[#allocation8 + $0x5c0] sm:$0xff]
    %v2645 = vld [vmem:[#allocation8 + $0x5c8] sm:$0xff]
    %v2646 = vld [vmem:[#allocation8 + $0x5d0] sm:$0xff]
    %v2647 = vld [vmem:[#allocation8 + $0x5d8] sm:$0xff]
    %v2648 = vld [vmem:[#allocation8 + $0x5e0] sm:$0xff]
    %v2649 = vld [vmem:[#allocation8 + $0x5e8] sm:$0xff]
    %v2650 = vld [vmem:[#allocation8 + $0x5f0] sm:$0xff]
    %v2651 = vld [vmem:[#allocation8 + $0x5f8] sm:$0xff]
    %v2652 = vld [vmem:[#allocation8 + $0x600] sm:$0xff]
    %v2653 = vld [vmem:[#allocation8 + $0x608] sm:$0xff]
    %v2654 = vld [vmem:[#allocation8 + $0x610] sm:$0xff]
    %v2655 = vld [vmem:[#allocation8 + $0x618] sm:$0xff]
    %v2656 = vld [vmem:[#allocation8 + $0x620] sm:$0xff]
    %v2657 = vld [vmem:[#allocation8 + $0x628] sm:$0xff]
    %v2658 = vld [vmem:[#allocation8 + $0x630] sm:$0xff]
    %v2659 = vld [vmem:[#allocation8 + $0x638] sm:$0xff]
    %v2660 = vld [vmem:[#allocation8 + $0x640] sm:$0xff]
    %v2661 = vld [vmem:[#allocation8 + $0x648] sm:$0xff]
    %v2662 = vld [vmem:[#allocation8 + $0x650] sm:$0xff]
    %v2663 = vld [vmem:[#allocation8 + $0x658] sm:$0xff]
    %v2664 = vld [vmem:[#allocation8 + $0x660] sm:$0xff]
    %v2665 = vld [vmem:[#allocation8 + $0x668] sm:$0xff]
    %v2666 = vld [vmem:[#allocation8 + $0x670] sm:$0xff]
    %v2667 = vld [vmem:[#allocation8 + $0x678] sm:$0xff]
    %v2668 = vld [vmem:[#allocation8 + $0x680] sm:$0xff]
    %v2669 = vld [vmem:[#allocation8 + $0x688] sm:$0xff]
    %v2670 = vld [vmem:[#allocation8 + $0x690] sm:$0xff]
    %v2671 = vld [vmem:[#allocation8 + $0x698] sm:$0xff]
    %v2672 = vld [vmem:[#allocation8 + $0x6a0] sm:$0xff]
    %v2673 = vld [vmem:[#allocation8 + $0x6a8] sm:$0xff]
    %v2674 = vld [vmem:[#allocation8 + $0x6b0] sm:$0xff]
    %v2675 = vld [vmem:[#allocation8 + $0x6b8] sm:$0xff]
    %v2676 = vld [vmem:[#allocation8 + $0x6c0] sm:$0xff]
    %v2677 = vld [vmem:[#allocation8 + $0x6c8] sm:$0xff]
    %v2678 = vld [vmem:[#allocation8 + $0x6d0] sm:$0xff]
    %v2679 = vld [vmem:[#allocation8 + $0x6d8] sm:$0xff]
    %v2680 = vld [vmem:[#allocation8 + $0x6e0] sm:$0xff]
    %v2681 = vld [vmem:[#allocation8 + $0x6e8] sm:$0xff]
    %v2682 = vld [vmem:[#allocation8 + $0x6f0] sm:$0xff]
    %v2683 = vld [vmem:[#allocation8 + $0x6f8] sm:$0xff]
    %v2684 = vld [vmem:[#allocation8 + $0x700] sm:$0xff]
    %v2685 = vld [vmem:[#allocation8 + $0x708] sm:$0xff]
    %v2686 = vld [vmem:[#allocation8 + $0x710] sm:$0xff]
    %v2687 = vld [vmem:[#allocation8 + $0x718] sm:$0xff]
    %v2688 = vld [vmem:[#allocation8 + $0x720] sm:$0xff]
    %v2689 = vld [vmem:[#allocation8 + $0x728] sm:$0xff]
    %v2690 = vld [vmem:[#allocation8 + $0x730] sm:$0xff]
    %v2691 = vld [vmem:[#allocation8 + $0x738] sm:$0xff]
    %v2692 = vld [vmem:[#allocation8 + $0x740] sm:$0xff]
    %v2693 = vld [vmem:[#allocation8 + $0x748] sm:$0xff]
    %v2694 = vld [vmem:[#allocation8 + $0x750] sm:$0xff]
    %v2695 = vld [vmem:[#allocation8 + $0x758] sm:$0xff]
    %v2696 = vld [vmem:[#allocation8 + $0x760] sm:$0xff]
    %v2697 = vld [vmem:[#allocation8 + $0x768] sm:$0xff]
    %v2698 = vld [vmem:[#allocation8 + $0x770] sm:$0xff]
    %v2699 = vld [vmem:[#allocation8 + $0x778] sm:$0xff]
    %v2700 = vld [vmem:[#allocation8 + $0x780] sm:$0xff]
    %v2701 = vld [vmem:[#allocation8 + $0x788] sm:$0xff]
    %v2702 = vld [vmem:[#allocation8 + $0x790] sm:$0xff]
    %v2703 = vld [vmem:[#allocation8 + $0x798] sm:$0xff]
    %v2704 = vld [vmem:[#allocation8 + $0x7a0] sm:$0xff]
    %v2705 = vld [vmem:[#allocation8 + $0x7a8] sm:$0xff]
    %v2706 = vld [vmem:[#allocation8 + $0x7b0] sm:$0xff]
    %v2707 = vld [vmem:[#allocation8 + $0x7b8] sm:$0xff]
    %v2708 = vld [vmem:[#allocation8 + $0x7c0] sm:$0xff]
    %v2709 = vld [vmem:[#allocation8 + $0x7c8] sm:$0xff]
    %v2710 = vld [vmem:[#allocation8 + $0x7d0] sm:$0xff]
    %v2711 = vld [vmem:[#allocation8 + $0x7d8] sm:$0xff]
    %v2712 = vld [vmem:[#allocation8 + $0x7e0] sm:$0xff]
    %v2713 = vld [vmem:[#allocation8 + $0x7e8] sm:$0xff]
    %v2714 = vld [vmem:[#allocation8 + $0x7f0] sm:$0xff]
    %v2715 = vld [vmem:[#allocation8 + $0x7f8] sm:$0xff]
    %v2716 = vld [vmem:[%s4] sm:$0x1]
    %v2718 = vlaneseq
    %v2719 = vshrl.u32 %v2718, 7
    %v2720 = vsub.s32 0, %v2719
    %v2721 = vrot.slane %v2716, %v2720
    %v2727 = vcombine.high %v2456, %v2456
    %v2729 = vunpack.c.l.s4 1983009808
    %v2730 = vunpack.c.0.s8 %v2729
    %v2731 = vlaneseq
    %v2732 = vshrl.u32 %v2731, 7
    %v2733 = vsub.s32 %v2730, %v2732
    %v2734 = vrot.slane %v2456, %v2733
    %v2736 = vunpack.c.l.s4 1983009808
    %v2737 = vunpack.c.0.s8 %v2736
    %v2738 = vlaneseq
    %v2739 = vshrl.u32 %v2738, 7
    %v2740 = vsub.s32 %v2737, %v2739
    %v2741 = vrot.slane %v2727, %v2740
    %v2742 = vcombine.high %v2734, %v2734
    %v2743 = vcombine.high %v2741, %v2741
    %v2744 = vcombine.high %v2457, %v2457
    %v2746 = vunpack.c.l.s4 1983009808
    %v2747 = vunpack.c.0.s8 %v2746
    %v2748 = vlaneseq
    %v2749 = vshrl.u32 %v2748, 7
    %v2750 = vsub.s32 %v2747, %v2749
    %v2751 = vrot.slane %v2457, %v2750
    %v2753 = vunpack.c.l.s4 1983009808
    %v2754 = vunpack.c.0.s8 %v2753
    %v2755 = vlaneseq
    %v2756 = vshrl.u32 %v2755, 7
    %v2757 = vsub.s32 %v2754, %v2756
    %v2758 = vrot.slane %v2744, %v2757
    %v2759 = vcombine.high %v2751, %v2751
    %v2760 = vcombine.high %v2758, %v2758
    %v2761 = vcombine.high %v2458, %v2458
    %v2763 = vunpack.c.l.s4 1983009808
    %v2764 = vunpack.c.0.s8 %v2763
    %v2765 = vlaneseq
    %v2766 = vshrl.u32 %v2765, 7
    %v2767 = vsub.s32 %v2764, %v2766
    %v2768 = vrot.slane %v2458, %v2767
    %v2770 = vunpack.c.l.s4 1983009808
    %v2771 = vunpack.c.0.s8 %v2770
    %v2772 = vlaneseq
    %v2773 = vshrl.u32 %v2772, 7
    %v2774 = vsub.s32 %v2771, %v2773
    %v2775 = vrot.slane %v2761, %v2774
    %v2776 = vcombine.high %v2768, %v2768
    %v2777 = vcombine.high %v2775, %v2775
    %v2778 = vcombine.high %v2459, %v2459
    %v2780 = vunpack.c.l.s4 1983009808
    %v2781 = vunpack.c.0.s8 %v2780
    %v2782 = vlaneseq
    %v2783 = vshrl.u32 %v2782, 7
    %v2784 = vsub.s32 %v2781, %v2783
    %v2785 = vrot.slane %v2459, %v2784
    %v2787 = vunpack.c.l.s4 1983009808
    %v2788 = vunpack.c.0.s8 %v2787
    %v2789 = vlaneseq
    %v2790 = vshrl.u32 %v2789, 7
    %v2791 = vsub.s32 %v2788, %v2790
    %v2792 = vrot.slane %v2778, %v2791
    %v2793 = vcombine.high %v2785, %v2785
    %v2794 = vcombine.high %v2792, %v2792
    %2811 = vmatprep.subr.mxu0 0.0
    %2812 = vmatpush1.msra.mxu0 %v2475
    %2813 = vmatprep.subr.mxu0 0.0
    %2814 = vmatpush1.msra.mxu0 %v2474
    %2815 = vmatprep.subr.mxu0 0.0
    %2816 = vmatpush1.msra.mxu0 %v2473
    %2817 = vmatprep.subr.mxu0 0.0
    %2818 = vmatpush1.msra.mxu0 %v2472
    %2819 = vmatprep.subr.mxu0 0.0
    %2820 = vmatpush1.msra.mxu0 %v2471
    %2821 = vmatprep.subr.mxu0 0.0
    %2822 = vmatpush1.msra.mxu0 %v2470
    %2823 = vmatprep.subr.mxu0 0.0
    %2824 = vmatpush1.msra.mxu0 %v2469
    %2825 = vmatprep.subr.mxu0 0.0
    %2826 = vmatpush1.msra.mxu0 %v2468
    %2827 = vmatprep.subr.mxu0 0.0
    %2828 = vmatpush1.msra.mxu0 %v2467
    %2829 = vmatprep.subr.mxu0 0.0
    %2830 = vmatpush1.msra.mxu0 %v2466
    %2831 = vmatprep.subr.mxu0 0.0
    %2832 = vmatpush1.msra.mxu0 %v2465
    %2833 = vmatprep.subr.mxu0 0.0
    %2834 = vmatpush1.msra.mxu0 %v2464
    %2835 = vmatprep.subr.mxu0 0.0
    %2836 = vmatpush1.msra.mxu0 %v2463
    %2837 = vmatprep.subr.mxu0 0.0
    %2838 = vmatpush1.msra.mxu0 %v2462
    %2839 = vmatprep.subr.mxu0 0.0
    %2840 = vmatpush1.msra.mxu0 %v2461
    %2841 = vmatprep.subr.mxu0 0.0
    %2842 = vmatpush1.msra.mxu0 %v2460
    %2843 = vmatprep.subr.mxu0 0.0
    %2844 = vmatpush2.msra.mxu0 %v2491
    %2845 = vmatprep.subr.mxu0 0.0
    %2846 = vmatpush2.msra.mxu0 %v2490
    %2847 = vmatprep.subr.mxu0 0.0
    %2848 = vmatpush2.msra.mxu0 %v2489
    %2849 = vmatprep.subr.mxu0 0.0
    %2850 = vmatpush2.msra.mxu0 %v2488
    %2851 = vmatprep.subr.mxu0 0.0
    %2852 = vmatpush2.msra.mxu0 %v2487
    %2853 = vmatprep.subr.mxu0 0.0
    %2854 = vmatpush2.msra.mxu0 %v2486
    %2855 = vmatprep.subr.mxu0 0.0
    %2856 = vmatpush2.msra.mxu0 %v2485
    %2857 = vmatprep.subr.mxu0 0.0
    %2858 = vmatpush2.msra.mxu0 %v2484
    %2859 = vmatprep.subr.mxu0 0.0
    %2860 = vmatpush2.msra.mxu0 %v2483
    %2861 = vmatprep.subr.mxu0 0.0
    %2862 = vmatpush2.msra.mxu0 %v2482
    %2863 = vmatprep.subr.mxu0 0.0
    %2864 = vmatpush2.msra.mxu0 %v2481
    %2865 = vmatprep.subr.mxu0 0.0
    %2866 = vmatpush2.msra.mxu0 %v2480
    %2867 = vmatprep.subr.mxu0 0.0
    %2868 = vmatpush2.msra.mxu0 %v2479
    %2869 = vmatprep.subr.mxu0 0.0
    %2870 = vmatpush2.msra.mxu0 %v2478
    %2871 = vmatprep.subr.mxu0 0.0
    %2872 = vmatpush2.msra.mxu0 %v2477
    %2873 = vmatprep.subr.mxu0 0.0
    %2874 = vmatpush2.msra.mxu0 %v2476
    %2875 = vmatprep.mubr.f32.mxu0 %v2742
    %2876 = vmatmul.mubr.f32.gmra.mxu0 %v2734
    %v2877 = vpop.f32.mrf.mxu0
    %v2878 = vadd.f32 %v2721, %v2877
    %v2879 = vpop.f32.mrf.mxu0
    %2880 = vdwg.mxu0
    %2881 = vmatprep.subr.mxu0 0.0
    %2882 = vmatpush1.msra.mxu0 %v2507
    %2883 = vmatprep.subr.mxu0 0.0
    %2884 = vmatpush1.msra.mxu0 %v2506
    %2885 = vmatprep.subr.mxu0 0.0
    %2886 = vmatpush1.msra.mxu0 %v2505
    %2887 = vmatprep.subr.mxu0 0.0
    %2888 = vmatpush1.msra.mxu0 %v2504
    %2889 = vmatprep.subr.mxu0 0.0
    %2890 = vmatpush1.msra.mxu0 %v2503
    %2891 = vmatprep.subr.mxu0 0.0
    %2892 = vmatpush1.msra.mxu0 %v2502
    %2893 = vmatprep.subr.mxu0 0.0
    %2894 = vmatpush1.msra.mxu0 %v2501
    %2895 = vmatprep.subr.mxu0 0.0
    %2896 = vmatpush1.msra.mxu0 %v2500
    %2897 = vmatprep.subr.mxu0 0.0
    %2898 = vmatpush1.msra.mxu0 %v2499
    %2899 = vmatprep.subr.mxu0 0.0
    %2900 = vmatpush1.msra.mxu0 %v2498
    %2901 = vmatprep.subr.mxu0 0.0
    %2902 = vmatpush1.msra.mxu0 %v2497
    %2903 = vmatprep.subr.mxu0 0.0
    %2904 = vmatpush1.msra.mxu0 %v2496
    %2905 = vmatprep.subr.mxu0 0.0
    %2906 = vmatpush1.msra.mxu0 %v2495
    %2907 = vmatprep.subr.mxu0 0.0
    %2908 = vmatpush1.msra.mxu0 %v2494
    %2909 = vmatprep.subr.mxu0 0.0
    %2910 = vmatpush1.msra.mxu0 %v2493
    %2911 = vmatprep.subr.mxu0 0.0
    %2912 = vmatpush1.msra.mxu0 %v2492
    %2913 = vmatprep.subr.mxu0 0.0
    %2914 = vmatpush2.msra.mxu0 %v2523
    %2915 = vmatprep.subr.mxu0 0.0
    %2916 = vmatpush2.msra.mxu0 %v2522
    %2917 = vmatprep.subr.mxu0 0.0
    %2918 = vmatpush2.msra.mxu0 %v2521
    %2919 = vmatprep.subr.mxu0 0.0
    %2920 = vmatpush2.msra.mxu0 %v2520
    %2921 = vmatprep.subr.mxu0 0.0
    %2922 = vmatpush2.msra.mxu0 %v2519
    %2923 = vmatprep.subr.mxu0 0.0
    %2924 = vmatpush2.msra.mxu0 %v2518
    %2925 = vmatprep.subr.mxu0 0.0
    %2926 = vmatpush2.msra.mxu0 %v2517
    %2927 = vmatprep.subr.mxu0 0.0
    %2928 = vmatpush2.msra.mxu0 %v2516
    %2929 = vmatprep.subr.mxu0 0.0
    %2930 = vmatpush2.msra.mxu0 %v2515
    %2931 = vmatprep.subr.mxu0 0.0
    %2932 = vmatpush2.msra.mxu0 %v2514
    %2933 = vmatprep.subr.mxu0 0.0
    %2934 = vmatpush2.msra.mxu0 %v2513
    %2935 = vmatprep.subr.mxu0 0.0
    %2936 = vmatpush2.msra.mxu0 %v2512
    %2937 = vmatprep.subr.mxu0 0.0
    %2938 = vmatpush2.msra.mxu0 %v2511
    %2939 = vmatprep.subr.mxu0 0.0
    %2940 = vmatpush2.msra.mxu0 %v2510
    %2941 = vmatprep.subr.mxu0 0.0
    %2942 = vmatpush2.msra.mxu0 %v2509
    %2943 = vmatprep.subr.mxu0 0.0
    %2944 = vmatpush2.msra.mxu0 %v2508
    %2945 = vmatprep.mubr.f32.mxu0 %v2743
    %2946 = vmatmul.mubr.f32.gmra.mxu0 %v2741
    %v2947 = vpop.f32.mrf.mxu0
    %v2948 = vadd.f32 %v2878, %v2947
    %v2949 = vpop.f32.mrf.mxu0
    %2950 = vdwg.mxu0
    %2951 = vmatprep.subr.mxu0 0.0
    %2952 = vmatpush1.msra.mxu0 %v2539
    %2953 = vmatprep.subr.mxu0 0.0
    %2954 = vmatpush1.msra.mxu0 %v2538
    %2955 = vmatprep.subr.mxu0 0.0
    %2956 = vmatpush1.msra.mxu0 %v2537
    %2957 = vmatprep.subr.mxu0 0.0
    %2958 = vmatpush1.msra.mxu0 %v2536
    %2959 = vmatprep.subr.mxu0 0.0
    %2960 = vmatpush1.msra.mxu0 %v2535
    %2961 = vmatprep.subr.mxu0 0.0
    %2962 = vmatpush1.msra.mxu0 %v2534
    %2963 = vmatprep.subr.mxu0 0.0
    %2964 = vmatpush1.msra.mxu0 %v2533
    %2965 = vmatprep.subr.mxu0 0.0
    %2966 = vmatpush1.msra.mxu0 %v2532
    %2967 = vmatprep.subr.mxu0 0.0
    %2968 = vmatpush1.msra.mxu0 %v2531
    %2969 = vmatprep.subr.mxu0 0.0
    %2970 = vmatpush1.msra.mxu0 %v2530
    %2971 = vmatprep.subr.mxu0 0.0
    %2972 = vmatpush1.msra.mxu0 %v2529
    %2973 = vmatprep.subr.mxu0 0.0
    %2974 = vmatpush1.msra.mxu0 %v2528
    %2975 = vmatprep.subr.mxu0 0.0
    %2976 = vmatpush1.msra.mxu0 %v2527
    %2977 = vmatprep.subr.mxu0 0.0
    %2978 = vmatpush1.msra.mxu0 %v2526
    %2979 = vmatprep.subr.mxu0 0.0
    %2980 = vmatpush1.msra.mxu0 %v2525
    %2981 = vmatprep.subr.mxu0 0.0
    %2982 = vmatpush1.msra.mxu0 %v2524
    %2983 = vmatprep.subr.mxu0 0.0
    %2984 = vmatpush2.msra.mxu0 %v2555
    %2985 = vmatprep.subr.mxu0 0.0
    %2986 = vmatpush2.msra.mxu0 %v2554
    %2987 = vmatprep.subr.mxu0 0.0
    %2988 = vmatpush2.msra.mxu0 %v2553
    %2989 = vmatprep.subr.mxu0 0.0
    %2990 = vmatpush2.msra.mxu0 %v2552
    %2991 = vmatprep.subr.mxu0 0.0
    %2992 = vmatpush2.msra.mxu0 %v2551
    %2993 = vmatprep.subr.mxu0 0.0
    %2994 = vmatpush2.msra.mxu0 %v2550
    %2995 = vmatprep.subr.mxu0 0.0
    %2996 = vmatpush2.msra.mxu0 %v2549
    %2997 = vmatprep.subr.mxu0 0.0
    %2998 = vmatpush2.msra.mxu0 %v2548
    %2999 = vmatprep.subr.mxu0 0.0
    %3000 = vmatpush2.msra.mxu0 %v2547
    %3001 = vmatprep.subr.mxu0 0.0
    %3002 = vmatpush2.msra.mxu0 %v2546
    %3003 = vmatprep.subr.mxu0 0.0
    %3004 = vmatpush2.msra.mxu0 %v2545
    %3005 = vmatprep.subr.mxu0 0.0
    %3006 = vmatpush2.msra.mxu0 %v2544
    %3007 = vmatprep.subr.mxu0 0.0
    %3008 = vmatpush2.msra.mxu0 %v2543
    %3009 = vmatprep.subr.mxu0 0.0
    %3010 = vmatpush2.msra.mxu0 %v2542
    %3011 = vmatprep.subr.mxu0 0.0
    %3012 = vmatpush2.msra.mxu0 %v2541
    %3013 = vmatprep.subr.mxu0 0.0
    %3014 = vmatpush2.msra.mxu0 %v2540
    %3015 = vmatprep.mubr.f32.mxu0 %v2759
    %3016 = vmatmul.mubr.f32.gmra.mxu0 %v2751
    %v3017 = vpop.f32.mrf.mxu0
    %v3018 = vadd.f32 %v2948, %v3017
    %v3019 = vpop.f32.mrf.mxu0
    %3020 = vdwg.mxu0
    %3021 = vmatprep.subr.mxu0 0.0
    %3022 = vmatpush1.msra.mxu0 %v2571
    %3023 = vmatprep.subr.mxu0 0.0
    %3024 = vmatpush1.msra.mxu0 %v2570
    %3025 = vmatprep.subr.mxu0 0.0
    %3026 = vmatpush1.msra.mxu0 %v2569
    %3027 = vmatprep.subr.mxu0 0.0
    %3028 = vmatpush1.msra.mxu0 %v2568
    %3029 = vmatprep.subr.mxu0 0.0
    %3030 = vmatpush1.msra.mxu0 %v2567
    %3031 = vmatprep.subr.mxu0 0.0
    %3032 = vmatpush1.msra.mxu0 %v2566
    %3033 = vmatprep.subr.mxu0 0.0
    %3034 = vmatpush1.msra.mxu0 %v2565
    %3035 = vmatprep.subr.mxu0 0.0
    %3036 = vmatpush1.msra.mxu0 %v2564
    %3037 = vmatprep.subr.mxu0 0.0
    %3038 = vmatpush1.msra.mxu0 %v2563
    %3039 = vmatprep.subr.mxu0 0.0
    %3040 = vmatpush1.msra.mxu0 %v2562
    %3041 = vmatprep.subr.mxu0 0.0
    %3042 = vmatpush1.msra.mxu0 %v2561
    %3043 = vmatprep.subr.mxu0 0.0
    %3044 = vmatpush1.msra.mxu0 %v2560
    %3045 = vmatprep.subr.mxu0 0.0
    %3046 = vmatpush1.msra.mxu0 %v2559
    %3047 = vmatprep.subr.mxu0 0.0
    %3048 = vmatpush1.msra.mxu0 %v2558
    %3049 = vmatprep.subr.mxu0 0.0
    %3050 = vmatpush1.msra.mxu0 %v2557
    %3051 = vmatprep.subr.mxu0 0.0
    %3052 = vmatpush1.msra.mxu0 %v2556
    %3053 = vmatprep.subr.mxu0 0.0
    %3054 = vmatpush2.msra.mxu0 %v2587
    %3055 = vmatprep.subr.mxu0 0.0
    %3056 = vmatpush2.msra.mxu0 %v2586
    %3057 = vmatprep.subr.mxu0 0.0
    %3058 = vmatpush2.msra.mxu0 %v2585
    %3059 = vmatprep.subr.mxu0 0.0
    %3060 = vmatpush2.msra.mxu0 %v2584
    %3061 = vmatprep.subr.mxu0 0.0
    %3062 = vmatpush2.msra.mxu0 %v2583
    %3063 = vmatprep.subr.mxu0 0.0
    %3064 = vmatpush2.msra.mxu0 %v2582
    %3065 = vmatprep.subr.mxu0 0.0
    %3066 = vmatpush2.msra.mxu0 %v2581
    %3067 = vmatprep.subr.mxu0 0.0
    %3068 = vmatpush2.msra.mxu0 %v2580
    %3069 = vmatprep.subr.mxu0 0.0
    %3070 = vmatpush2.msra.mxu0 %v2579
    %3071 = vmatprep.subr.mxu0 0.0
    %3072 = vmatpush2.msra.mxu0 %v2578
    %3073 = vmatprep.subr.mxu0 0.0
    %3074 = vmatpush2.msra.mxu0 %v2577
    %3075 = vmatprep.subr.mxu0 0.0
    %3076 = vmatpush2.msra.mxu0 %v2576
    %3077 = vmatprep.subr.mxu0 0.0
    %3078 = vmatpush2.msra.mxu0 %v2575
    %3079 = vmatprep.subr.mxu0 0.0
    %3080 = vmatpush2.msra.mxu0 %v2574
    %3081 = vmatprep.subr.mxu0 0.0
    %3082 = vmatpush2.msra.mxu0 %v2573
    %3083 = vmatprep.subr.mxu0 0.0
    %3084 = vmatpush2.msra.mxu0 %v2572
    %3085 = vmatprep.mubr.f32.mxu0 %v2760
    %3086 = vmatmul.mubr.f32.gmra.mxu0 %v2758
    %v3087 = vpop.f32.mrf.mxu0
    %v3088 = vadd.f32 %v3018, %v3087
    %v3089 = vpop.f32.mrf.mxu0
    %3090 = vdwg.mxu0
    %3091 = vmatprep.subr.mxu0 0.0
    %3092 = vmatpush1.msra.mxu0 %v2603
    %3093 = vmatprep.subr.mxu0 0.0
    %3094 = vmatpush1.msra.mxu0 %v2602
    %3095 = vmatprep.subr.mxu0 0.0
    %3096 = vmatpush1.msra.mxu0 %v2601
    %3097 = vmatprep.subr.mxu0 0.0
    %3098 = vmatpush1.msra.mxu0 %v2600
    %3099 = vmatprep.subr.mxu0 0.0
    %3100 = vmatpush1.msra.mxu0 %v2599
    %3101 = vmatprep.subr.mxu0 0.0
    %3102 = vmatpush1.msra.mxu0 %v2598
    %3103 = vmatprep.subr.mxu0 0.0
    %3104 = vmatpush1.msra.mxu0 %v2597
    %3105 = vmatprep.subr.mxu0 0.0
    %3106 = vmatpush1.msra.mxu0 %v2596
    %3107 = vmatprep.subr.mxu0 0.0
    %3108 = vmatpush1.msra.mxu0 %v2595
    %3109 = vmatprep.subr.mxu0 0.0
    %3110 = vmatpush1.msra.mxu0 %v2594
    %3111 = vmatprep.subr.mxu0 0.0
    %3112 = vmatpush1.msra.mxu0 %v2593
    %3113 = vmatprep.subr.mxu0 0.0
    %3114 = vmatpush1.msra.mxu0 %v2592
    %3115 = vmatprep.subr.mxu0 0.0
    %3116 = vmatpush1.msra.mxu0 %v2591
    %3117 = vmatprep.subr.mxu0 0.0
    %3118 = vmatpush1.msra.mxu0 %v2590
    %3119 = vmatprep.subr.mxu0 0.0
    %3120 = vmatpush1.msra.mxu0 %v2589
    %3121 = vmatprep.subr.mxu0 0.0
    %3122 = vmatpush1.msra.mxu0 %v2588
    %3123 = vmatprep.subr.mxu0 0.0
    %3124 = vmatpush2.msra.mxu0 %v2619
    %3125 = vmatprep.subr.mxu0 0.0
    %3126 = vmatpush2.msra.mxu0 %v2618
    %3127 = vmatprep.subr.mxu0 0.0
    %3128 = vmatpush2.msra.mxu0 %v2617
    %3129 = vmatprep.subr.mxu0 0.0
    %3130 = vmatpush2.msra.mxu0 %v2616
    %3131 = vmatprep.subr.mxu0 0.0
    %3132 = vmatpush2.msra.mxu0 %v2615
    %3133 = vmatprep.subr.mxu0 0.0
    %3134 = vmatpush2.msra.mxu0 %v2614
    %3135 = vmatprep.subr.mxu0 0.0
    %3136 = vmatpush2.msra.mxu0 %v2613
    %3137 = vmatprep.subr.mxu0 0.0
    %3138 = vmatpush2.msra.mxu0 %v2612
    %3139 = vmatprep.subr.mxu0 0.0
    %3140 = vmatpush2.msra.mxu0 %v2611
    %3141 = vmatprep.subr.mxu0 0.0
    %3142 = vmatpush2.msra.mxu0 %v2610
    %3143 = vmatprep.subr.mxu0 0.0
    %3144 = vmatpush2.msra.mxu0 %v2609
    %3145 = vmatprep.subr.mxu0 0.0
    %3146 = vmatpush2.msra.mxu0 %v2608
    %3147 = vmatprep.subr.mxu0 0.0
    %3148 = vmatpush2.msra.mxu0 %v2607
    %3149 = vmatprep.subr.mxu0 0.0
    %3150 = vmatpush2.msra.mxu0 %v2606
    %3151 = vmatprep.subr.mxu0 0.0
    %3152 = vmatpush2.msra.mxu0 %v2605
    %3153 = vmatprep.subr.mxu0 0.0
    %3154 = vmatpush2.msra.mxu0 %v2604
    %3155 = vmatprep.mubr.f32.mxu0 %v2776
    %3156 = vmatmul.mubr.f32.gmra.mxu0 %v2768
    %v3157 = vpop.f32.mrf.mxu0
    %v3158 = vadd.f32 %v3088, %v3157
    %v3159 = vpop.f32.mrf.mxu0
    %3160 = vdwg.mxu0
    %3161 = vmatprep.subr.mxu0 0.0
    %3162 = vmatpush1.msra.mxu0 %v2635
    %3163 = vmatprep.subr.mxu0 0.0
    %3164 = vmatpush1.msra.mxu0 %v2634
    %3165 = vmatprep.subr.mxu0 0.0
    %3166 = vmatpush1.msra.mxu0 %v2633
    %3167 = vmatprep.subr.mxu0 0.0
    %3168 = vmatpush1.msra.mxu0 %v2632
    %3169 = vmatprep.subr.mxu0 0.0
    %3170 = vmatpush1.msra.mxu0 %v2631
    %3171 = vmatprep.subr.mxu0 0.0
    %3172 = vmatpush1.msra.mxu0 %v2630
    %3173 = vmatprep.subr.mxu0 0.0
    %3174 = vmatpush1.msra.mxu0 %v2629
    %3175 = vmatprep.subr.mxu0 0.0
    %3176 = vmatpush1.msra.mxu0 %v2628
    %3177 = vmatprep.subr.mxu0 0.0
    %3178 = vmatpush1.msra.mxu0 %v2627
    %3179 = vmatprep.subr.mxu0 0.0
    %3180 = vmatpush1.msra.mxu0 %v2626
    %3181 = vmatprep.subr.mxu0 0.0
    %3182 = vmatpush1.msra.mxu0 %v2625
    %3183 = vmatprep.subr.mxu0 0.0
    %3184 = vmatpush1.msra.mxu0 %v2624
    %3185 = vmatprep.subr.mxu0 0.0
    %3186 = vmatpush1.msra.mxu0 %v2623
    %3187 = vmatprep.subr.mxu0 0.0
    %3188 = vmatpush1.msra.mxu0 %v2622
    %3189 = vmatprep.subr.mxu0 0.0
    %3190 = vmatpush1.msra.mxu0 %v2621
    %3191 = vmatprep.subr.mxu0 0.0
    %3192 = vmatpush1.msra.mxu0 %v2620
    %3193 = vmatprep.subr.mxu0 0.0
    %3194 = vmatpush2.msra.mxu0 %v2651
    %3195 = vmatprep.subr.mxu0 0.0
    %3196 = vmatpush2.msra.mxu0 %v2650
    %3197 = vmatprep.subr.mxu0 0.0
    %3198 = vmatpush2.msra.mxu0 %v2649
    %3199 = vmatprep.subr.mxu0 0.0
    %3200 = vmatpush2.msra.mxu0 %v2648
    %3201 = vmatprep.subr.mxu0 0.0
    %3202 = vmatpush2.msra.mxu0 %v2647
    %3203 = vmatprep.subr.mxu0 0.0
    %3204 = vmatpush2.msra.mxu0 %v2646
    %3205 = vmatprep.subr.mxu0 0.0
    %3206 = vmatpush2.msra.mxu0 %v2645
    %3207 = vmatprep.subr.mxu0 0.0
    %3208 = vmatpush2.msra.mxu0 %v2644
    %3209 = vmatprep.subr.mxu0 0.0
    %3210 = vmatpush2.msra.mxu0 %v2643
    %3211 = vmatprep.subr.mxu0 0.0
    %3212 = vmatpush2.msra.mxu0 %v2642
    %3213 = vmatprep.subr.mxu0 0.0
    %3214 = vmatpush2.msra.mxu0 %v2641
    %3215 = vmatprep.subr.mxu0 0.0
    %3216 = vmatpush2.msra.mxu0 %v2640
    %3217 = vmatprep.subr.mxu0 0.0
    %3218 = vmatpush2.msra.mxu0 %v2639
    %3219 = vmatprep.subr.mxu0 0.0
    %3220 = vmatpush2.msra.mxu0 %v2638
    %3221 = vmatprep.subr.mxu0 0.0
    %3222 = vmatpush2.msra.mxu0 %v2637
    %3223 = vmatprep.subr.mxu0 0.0
    %3224 = vmatpush2.msra.mxu0 %v2636
    %3225 = vmatprep.mubr.f32.mxu0 %v2777
    %3226 = vmatmul.mubr.f32.gmra.mxu0 %v2775
    %v3227 = vpop.f32.mrf.mxu0
    %v3228 = vadd.f32 %v3158, %v3227
    %v3229 = vpop.f32.mrf.mxu0
    %3230 = vdwg.mxu0
    %3231 = vmatprep.subr.mxu0 0.0
    %3232 = vmatpush1.msra.mxu0 %v2667
    %3233 = vmatprep.subr.mxu0 0.0
    %3234 = vmatpush1.msra.mxu0 %v2666
    %3235 = vmatprep.subr.mxu0 0.0
    %3236 = vmatpush1.msra.mxu0 %v2665
    %3237 = vmatprep.subr.mxu0 0.0
    %3238 = vmatpush1.msra.mxu0 %v2664
    %3239 = vmatprep.subr.mxu0 0.0
    %3240 = vmatpush1.msra.mxu0 %v2663
    %3241 = vmatprep.subr.mxu0 0.0
    %3242 = vmatpush1.msra.mxu0 %v2662
    %3243 = vmatprep.subr.mxu0 0.0
    %3244 = vmatpush1.msra.mxu0 %v2661
    %3245 = vmatprep.subr.mxu0 0.0
    %3246 = vmatpush1.msra.mxu0 %v2660
    %3247 = vmatprep.subr.mxu0 0.0
    %3248 = vmatpush1.msra.mxu0 %v2659
    %3249 = vmatprep.subr.mxu0 0.0
    %3250 = vmatpush1.msra.mxu0 %v2658
    %3251 = vmatprep.subr.mxu0 0.0
    %3252 = vmatpush1.msra.mxu0 %v2657
    %3253 = vmatprep.subr.mxu0 0.0
    %3254 = vmatpush1.msra.mxu0 %v2656
    %3255 = vmatprep.subr.mxu0 0.0
    %3256 = vmatpush1.msra.mxu0 %v2655
    %3257 = vmatprep.subr.mxu0 0.0
    %3258 = vmatpush1.msra.mxu0 %v2654
    %3259 = vmatprep.subr.mxu0 0.0
    %3260 = vmatpush1.msra.mxu0 %v2653
    %3261 = vmatprep.subr.mxu0 0.0
    %3262 = vmatpush1.msra.mxu0 %v2652
    %3263 = vmatprep.subr.mxu0 0.0
    %3264 = vmatpush2.msra.mxu0 %v2683
    %3265 = vmatprep.subr.mxu0 0.0
    %3266 = vmatpush2.msra.mxu0 %v2682
    %3267 = vmatprep.subr.mxu0 0.0
    %3268 = vmatpush2.msra.mxu0 %v2681
    %3269 = vmatprep.subr.mxu0 0.0
    %3270 = vmatpush2.msra.mxu0 %v2680
    %3271 = vmatprep.subr.mxu0 0.0
    %3272 = vmatpush2.msra.mxu0 %v2679
    %3273 = vmatprep.subr.mxu0 0.0
    %3274 = vmatpush2.msra.mxu0 %v2678
    %3275 = vmatprep.subr.mxu0 0.0
    %3276 = vmatpush2.msra.mxu0 %v2677
    %3277 = vmatprep.subr.mxu0 0.0
    %3278 = vmatpush2.msra.mxu0 %v2676
    %3279 = vmatprep.subr.mxu0 0.0
    %3280 = vmatpush2.msra.mxu0 %v2675
    %3281 = vmatprep.subr.mxu0 0.0
    %3282 = vmatpush2.msra.mxu0 %v2674
    %3283 = vmatprep.subr.mxu0 0.0
    %3284 = vmatpush2.msra.mxu0 %v2673
    %3285 = vmatprep.subr.mxu0 0.0
    %3286 = vmatpush2.msra.mxu0 %v2672
    %3287 = vmatprep.subr.mxu0 0.0
    %3288 = vmatpush2.msra.mxu0 %v2671
    %3289 = vmatprep.subr.mxu0 0.0
    %3290 = vmatpush2.msra.mxu0 %v2670
    %3291 = vmatprep.subr.mxu0 0.0
    %3292 = vmatpush2.msra.mxu0 %v2669
    %3293 = vmatprep.subr.mxu0 0.0
    %3294 = vmatpush2.msra.mxu0 %v2668
    %3295 = vmatprep.mubr.f32.mxu0 %v2793
    %3296 = vmatmul.mubr.f32.gmra.mxu0 %v2785
    %v3297 = vpop.f32.mrf.mxu0
    %v3298 = vadd.f32 %v3228, %v3297
    %v3299 = vpop.f32.mrf.mxu0
    %3300 = vdwg.mxu0
    %3301 = vmatprep.subr.mxu0 0.0
    %3302 = vmatpush1.msra.mxu0 %v2699
    %3303 = vmatprep.subr.mxu0 0.0
    %3304 = vmatpush1.msra.mxu0 %v2698
    %3305 = vmatprep.subr.mxu0 0.0
    %3306 = vmatpush1.msra.mxu0 %v2697
    %3307 = vmatprep.subr.mxu0 0.0
    %3308 = vmatpush1.msra.mxu0 %v2696
    %3309 = vmatprep.subr.mxu0 0.0
    %3310 = vmatpush1.msra.mxu0 %v2695
    %3311 = vmatprep.subr.mxu0 0.0
    %3312 = vmatpush1.msra.mxu0 %v2694
    %3313 = vmatprep.subr.mxu0 0.0
    %3314 = vmatpush1.msra.mxu0 %v2693
    %3315 = vmatprep.subr.mxu0 0.0
    %3316 = vmatpush1.msra.mxu0 %v2692
    %3317 = vmatprep.subr.mxu0 0.0
    %3318 = vmatpush1.msra.mxu0 %v2691
    %3319 = vmatprep.subr.mxu0 0.0
    %3320 = vmatpush1.msra.mxu0 %v2690
    %3321 = vmatprep.subr.mxu0 0.0
    %3322 = vmatpush1.msra.mxu0 %v2689
    %3323 = vmatprep.subr.mxu0 0.0
    %3324 = vmatpush1.msra.mxu0 %v2688
    %3325 = vmatprep.subr.mxu0 0.0
    %3326 = vmatpush1.msra.mxu0 %v2687
    %3327 = vmatprep.subr.mxu0 0.0
    %3328 = vmatpush1.msra.mxu0 %v2686
    %3329 = vmatprep.subr.mxu0 0.0
    %3330 = vmatpush1.msra.mxu0 %v2685
    %3331 = vmatprep.subr.mxu0 0.0
    %3332 = vmatpush1.msra.mxu0 %v2684
    %3333 = vmatprep.subr.mxu0 0.0
    %3334 = vmatpush2.msra.mxu0 %v2715
    %3335 = vmatprep.subr.mxu0 0.0
    %3336 = vmatpush2.msra.mxu0 %v2714
    %3337 = vmatprep.subr.mxu0 0.0
    %3338 = vmatpush2.msra.mxu0 %v2713
    %3339 = vmatprep.subr.mxu0 0.0
    %3340 = vmatpush2.msra.mxu0 %v2712
    %3341 = vmatprep.subr.mxu0 0.0
    %3342 = vmatpush2.msra.mxu0 %v2711
    %3343 = vmatprep.subr.mxu0 0.0
    %3344 = vmatpush2.msra.mxu0 %v2710
    %3345 = vmatprep.subr.mxu0 0.0
    %3346 = vmatpush2.msra.mxu0 %v2709
    %3347 = vmatprep.subr.mxu0 0.0
    %3348 = vmatpush2.msra.mxu0 %v2708
    %3349 = vmatprep.subr.mxu0 0.0
    %3350 = vmatpush2.msra.mxu0 %v2707
    %3351 = vmatprep.subr.mxu0 0.0
    %3352 = vmatpush2.msra.mxu0 %v2706
    %3353 = vmatprep.subr.mxu0 0.0
    %3354 = vmatpush2.msra.mxu0 %v2705
    %3355 = vmatprep.subr.mxu0 0.0
    %3356 = vmatpush2.msra.mxu0 %v2704
    %3357 = vmatprep.subr.mxu0 0.0
    %3358 = vmatpush2.msra.mxu0 %v2703
    %3359 = vmatprep.subr.mxu0 0.0
    %3360 = vmatpush2.msra.mxu0 %v2702
    %3361 = vmatprep.subr.mxu0 0.0
    %3362 = vmatpush2.msra.mxu0 %v2701
    %3363 = vmatprep.subr.mxu0 0.0
    %3364 = vmatpush2.msra.mxu0 %v2700
    %3365 = vmatprep.mubr.f32.mxu0 %v2794
    %3366 = vmatmul.mubr.f32.gmra.mxu0 %v2792
    %v3367 = vpop.f32.mrf.mxu0
    %v3368 = vadd.f32 %v3298, %v3367
    %v3369 = vpop.f32.mrf.mxu0
    %3370 = vdwg.mxu0
    %v3371 = vmax.f32 %v3368, 0.0
    %v3372 = vld [vmem:[#allocation10] sm:$0xff]
    %v3373 = vld [vmem:[#allocation10 + $0x8] sm:$0xff]
    %v3374 = vld [vmem:[#allocation10 + $0x10] sm:$0xff]
    %v3375 = vld [vmem:[#allocation10 + $0x18] sm:$0xff]
    %v3376 = vld [vmem:[#allocation10 + $0x20] sm:$0xff]
    %v3377 = vld [vmem:[#allocation10 + $0x28] sm:$0xff]
    %v3378 = vld [vmem:[#allocation10 + $0x30] sm:$0xff]
    %v3379 = vld [vmem:[#allocation10 + $0x38] sm:$0xff]
    %v3380 = vld [vmem:[#allocation10 + $0x40] sm:$0xff]
    %v3381 = vld [vmem:[#allocation10 + $0x48] sm:$0xff]
    %v3382 = vld [vmem:[#allocation10 + $0x50] sm:$0xff]
    %v3383 = vld [vmem:[#allocation10 + $0x58] sm:$0xff]
    %v3384 = vld [vmem:[#allocation10 + $0x60] sm:$0xff]
    %v3385 = vld [vmem:[#allocation10 + $0x68] sm:$0xff]
    %v3386 = vld [vmem:[#allocation10 + $0x70] sm:$0xff]
    %v3387 = vld [vmem:[#allocation10 + $0x78] sm:$0xff]
    %v3388 = vld [vmem:[%s6] sm:$0x1]
    %v3390 = vlaneseq
    %v3391 = vshrl.u32 %v3390, 7
    %v3392 = vsub.s32 0, %v3391
    %v3393 = vrot.slane %v3388, %v3392
    %3395 = vmatprep.subr.mxu0 0.0
    %3396 = vmatpush1.msra.mxu0 %v3387
    %3397 = vmatprep.subr.mxu0 0.0
    %3398 = vmatpush1.msra.mxu0 %v3386
    %3399 = vmatprep.subr.mxu0 0.0
    %3400 = vmatpush1.msra.mxu0 %v3385
    %3401 = vmatprep.subr.mxu0 0.0
    %3402 = vmatpush1.msra.mxu0 %v3384
    %3403 = vmatprep.subr.mxu0 0.0
    %3404 = vmatpush1.msra.mxu0 %v3383
    %3405 = vmatprep.subr.mxu0 0.0
    %3406 = vmatpush1.msra.mxu0 %v3382
    %3407 = vmatprep.subr.mxu0 0.0
    %3408 = vmatpush1.msra.mxu0 %v3381
    %3409 = vmatprep.subr.mxu0 0.0
    %3410 = vmatpush1.msra.mxu0 %v3380
    %3411 = vmatprep.subr.mxu0 0.0
    %3412 = vmatpush1.msra.mxu0 %v3379
    %3413 = vmatprep.subr.mxu0 0.0
    %3414 = vmatpush1.msra.mxu0 %v3378
    %3415 = vmatprep.subr.mxu0 0.0
    %3416 = vmatpush1.msra.mxu0 %v3377
    %3417 = vmatprep.subr.mxu0 0.0
    %3418 = vmatpush1.msra.mxu0 %v3376
    %3419 = vmatprep.subr.mxu0 0.0
    %3420 = vmatpush1.msra.mxu0 %v3375
    %3421 = vmatprep.subr.mxu0 0.0
    %3422 = vmatpush1.msra.mxu0 %v3374
    %3423 = vmatprep.subr.mxu0 0.0
    %3424 = vmatpush1.msra.mxu0 %v3373
    %3425 = vmatprep.subr.mxu0 0.0
    %3426 = vmatpush1.msra.mxu0 %v3372
    %3427 = vmatprep.subr.mxu0 0.0
    %3428 = vmatpush2.msra.mxu0 0.0
    %3429 = vmatprep.subr.mxu0 0.0
    %3430 = vmatpush2.msra.mxu0 0.0
    %3431 = vmatprep.subr.mxu0 0.0
    %3432 = vmatpush2.msra.mxu0 0.0
    %3433 = vmatprep.subr.mxu0 0.0
    %3434 = vmatpush2.msra.mxu0 0.0
    %3435 = vmatprep.subr.mxu0 0.0
    %3436 = vmatpush2.msra.mxu0 0.0
    %3437 = vmatprep.subr.mxu0 0.0
    %3438 = vmatpush2.msra.mxu0 0.0
    %3439 = vmatprep.subr.mxu0 0.0
    %3440 = vmatpush2.msra.mxu0 0.0
    %3441 = vmatprep.subr.mxu0 0.0
    %3442 = vmatpush2.msra.mxu0 0.0
    %3443 = vmatprep.subr.mxu0 0.0
    %3444 = vmatpush2.msra.mxu0 0.0
    %3445 = vmatprep.subr.mxu0 0.0
    %3446 = vmatpush2.msra.mxu0 0.0
    %3447 = vmatprep.subr.mxu0 0.0
    %3448 = vmatpush2.msra.mxu0 0.0
    %3449 = vmatprep.subr.mxu0 0.0
    %3450 = vmatpush2.msra.mxu0 0.0
    %3451 = vmatprep.subr.mxu0 0.0
    %3452 = vmatpush2.msra.mxu0 0.0
    %3453 = vmatprep.subr.mxu0 0.0
    %3454 = vmatpush2.msra.mxu0 0.0
    %3455 = vmatprep.subr.mxu0 0.0
    %3456 = vmatpush2.msra.mxu0 0.0
    %3457 = vmatprep.subr.mxu0 0.0
    %3458 = vmatpush2.msra.mxu0 0.0
    %3459 = vmatprep.mubr.f32.mxu0 0.0
    %3460 = vmatmul.mubr.f32.gmra.mxu0 %v3371
    %v3461 = vpop.f32.mrf.mxu0
    %v3462 = vadd.f32 %v3393, %v3461
    %v3463 = vpop.f32.mrf.mxu0
    %3464 = vdwg.mxu0
    %v3465 = vmax.f32 %v3462, 0.0
    %v3466 = vld [vmem:[#allocation11] sm:$0xff]
    %v3467 = vld [vmem:[#allocation11 + $0x8] sm:$0xff]
    %v3468 = vld [vmem:[#allocation11 + $0x10] sm:$0xff]
    %v3469 = vld [vmem:[#allocation11 + $0x18] sm:$0xff]
    %v3470 = vld [vmem:[#allocation11 + $0x20] sm:$0xff]
    %v3471 = vld [vmem:[#allocation11 + $0x28] sm:$0xff]
    %v3472 = vld [vmem:[#allocation11 + $0x30] sm:$0xff]
    %v3473 = vld [vmem:[#allocation11 + $0x38] sm:$0xff]
    %v3474 = vld [vmem:[#allocation11 + $0x40] sm:$0xff]
    %v3475 = vld [vmem:[#allocation11 + $0x48] sm:$0xff]
    %v3476 = vld [vmem:[#allocation11 + $0x50] sm:$0xff]
    %v3477 = vld [vmem:[#allocation11 + $0x58] sm:$0xff]
    %v3478 = vld [vmem:[#allocation11 + $0x60] sm:$0xff]
    %v3479 = vld [vmem:[#allocation11 + $0x68] sm:$0xff]
    %v3480 = vld [vmem:[#allocation11 + $0x70] sm:$0xff]
    %v3481 = vld [vmem:[#allocation11 + $0x78] sm:$0xff]
    %v3482 = vld [vmem:[%s8] sm:$0x1]
    %v3484 = vlaneseq
    %v3485 = vshrl.u32 %v3484, 7
    %v3486 = vsub.s32 0, %v3485
    %v3487 = vrot.slane %v3482, %v3486
    %3489 = vmatprep.subr.mxu0 0.0
    %3490 = vmatpush1.msra.mxu0 %v3481
    %3491 = vmatprep.subr.mxu0 0.0
    %3492 = vmatpush1.msra.mxu0 %v3480
    %3493 = vmatprep.subr.mxu0 0.0
    %3494 = vmatpush1.msra.mxu0 %v3479
    %3495 = vmatprep.subr.mxu0 0.0
    %3496 = vmatpush1.msra.mxu0 %v3478
    %3497 = vmatprep.subr.mxu0 0.0
    %3498 = vmatpush1.msra.mxu0 %v3477
    %3499 = vmatprep.subr.mxu0 0.0
    %3500 = vmatpush1.msra.mxu0 %v3476
    %3501 = vmatprep.subr.mxu0 0.0
    %3502 = vmatpush1.msra.mxu0 %v3475
    %3503 = vmatprep.subr.mxu0 0.0
    %3504 = vmatpush1.msra.mxu0 %v3474
    %3505 = vmatprep.subr.mxu0 0.0
    %3506 = vmatpush1.msra.mxu0 %v3473
    %3507 = vmatprep.subr.mxu0 0.0
    %3508 = vmatpush1.msra.mxu0 %v3472
    %3509 = vmatprep.subr.mxu0 0.0
    %3510 = vmatpush1.msra.mxu0 %v3471
    %3511 = vmatprep.subr.mxu0 0.0
    %3512 = vmatpush1.msra.mxu0 %v3470
    %3513 = vmatprep.subr.mxu0 0.0
    %3514 = vmatpush1.msra.mxu0 %v3469
    %3515 = vmatprep.subr.mxu0 0.0
    %3516 = vmatpush1.msra.mxu0 %v3468
    %3517 = vmatprep.subr.mxu0 0.0
    %3518 = vmatpush1.msra.mxu0 %v3467
    %3519 = vmatprep.subr.mxu0 0.0
    %3520 = vmatpush1.msra.mxu0 %v3466
    %3521 = vmatprep.subr.mxu0 0.0
    %3522 = vmatpush2.msra.mxu0 0.0
    %3523 = vmatprep.subr.mxu0 0.0
    %3524 = vmatpush2.msra.mxu0 0.0
    %3525 = vmatprep.subr.mxu0 0.0
    %3526 = vmatpush2.msra.mxu0 0.0
    %3527 = vmatprep.subr.mxu0 0.0
    %3528 = vmatpush2.msra.mxu0 0.0
    %3529 = vmatprep.subr.mxu0 0.0
    %3530 = vmatpush2.msra.mxu0 0.0
    %3531 = vmatprep.subr.mxu0 0.0
    %3532 = vmatpush2.msra.mxu0 0.0
    %3533 = vmatprep.subr.mxu0 0.0
    %3534 = vmatpush2.msra.mxu0 0.0
    %3535 = vmatprep.subr.mxu0 0.0
    %3536 = vmatpush2.msra.mxu0 0.0
    %3537 = vmatprep.subr.mxu0 0.0
    %3538 = vmatpush2.msra.mxu0 0.0
    %3539 = vmatprep.subr.mxu0 0.0
    %3540 = vmatpush2.msra.mxu0 0.0
    %3541 = vmatprep.subr.mxu0 0.0
    %3542 = vmatpush2.msra.mxu0 0.0
    %3543 = vmatprep.subr.mxu0 0.0
    %3544 = vmatpush2.msra.mxu0 0.0
    %3545 = vmatprep.subr.mxu0 0.0
    %3546 = vmatpush2.msra.mxu0 0.0
    %3547 = vmatprep.subr.mxu0 0.0
    %3548 = vmatpush2.msra.mxu0 0.0
    %3549 = vmatprep.subr.mxu0 0.0
    %3550 = vmatpush2.msra.mxu0 0.0
    %3551 = vmatprep.subr.mxu0 0.0
    %3552 = vmatpush2.msra.mxu0 0.0
    %3553 = vmatprep.mubr.f32.mxu0 0.0
    %3554 = vmatmul.mubr.f32.gmra.mxu0 %v3465
    %v3555 = vpop.f32.mrf.mxu0
    %v3556 = vadd.f32 %v3487, %v3555
    %v3557 = vpop.f32.mrf.mxu0
    %3558 = vdwg.mxu0
    %v3559 = vmax.f32 %v3556, 0.0
    %v3560 = vld [vmem:[#allocation13] sm:$0xff]
    %v3561 = vld [vmem:[#allocation13 + $0x8] sm:$0xff]
    %v3562 = vld [vmem:[#allocation13 + $0x10] sm:$0xff]
    %v3563 = vld [vmem:[#allocation13 + $0x18] sm:$0xff]
    %v3564 = vld [vmem:[#allocation13 + $0x20] sm:$0xff]
    %v3565 = vld [vmem:[#allocation13 + $0x28] sm:$0xff]
    %v3566 = vld [vmem:[#allocation13 + $0x30] sm:$0xff]
    %v3567 = vld [vmem:[#allocation13 + $0x38] sm:$0xff]
    %v3568 = vld [vmem:[#allocation13 + $0x40] sm:$0xff]
    %v3569 = vld [vmem:[#allocation13 + $0x48] sm:$0xff]
    %v3570 = vld [vmem:[#allocation13 + $0x50] sm:$0xff]
    %v3571 = vld [vmem:[#allocation13 + $0x58] sm:$0xff]
    %v3572 = vld [vmem:[#allocation13 + $0x60] sm:$0xff]
    %v3573 = vld [vmem:[#allocation13 + $0x68] sm:$0xff]
    %v3574 = vld [vmem:[#allocation13 + $0x70] sm:$0xff]
    %v3575 = vld [vmem:[#allocation13 + $0x78] sm:$0xff]
    %v3576 = vld [vmem:[%s10] sm:$0x1]
    %v3578 = vlaneseq
    %v3579 = vshrl.u32 %v3578, 7
    %v3580 = vsub.s32 0, %v3579
    %v3581 = vrot.slane %v3576, %v3580
    %3583 = vmatprep.subr.mxu0 0.0
    %3584 = vmatpush1.msra.mxu0 %v3575
    %3585 = vmatprep.subr.mxu0 0.0
    %3586 = vmatpush1.msra.mxu0 %v3574
    %3587 = vmatprep.subr.mxu0 0.0
    %3588 = vmatpush1.msra.mxu0 %v3573
    %3589 = vmatprep.subr.mxu0 0.0
    %3590 = vmatpush1.msra.mxu0 %v3572
    %3591 = vmatprep.subr.mxu0 0.0
    %3592 = vmatpush1.msra.mxu0 %v3571
    %3593 = vmatprep.subr.mxu0 0.0
    %3594 = vmatpush1.msra.mxu0 %v3570
    %3595 = vmatprep.subr.mxu0 0.0
    %3596 = vmatpush1.msra.mxu0 %v3569
    %3597 = vmatprep.subr.mxu0 0.0
    %3598 = vmatpush1.msra.mxu0 %v3568
    %3599 = vmatprep.subr.mxu0 0.0
    %3600 = vmatpush1.msra.mxu0 %v3567
    %3601 = vmatprep.subr.mxu0 0.0
    %3602 = vmatpush1.msra.mxu0 %v3566
    %3603 = vmatprep.subr.mxu0 0.0
    %3604 = vmatpush1.msra.mxu0 %v3565
    %3605 = vmatprep.subr.mxu0 0.0
    %3606 = vmatpush1.msra.mxu0 %v3564
    %3607 = vmatprep.subr.mxu0 0.0
    %3608 = vmatpush1.msra.mxu0 %v3563
    %3609 = vmatprep.subr.mxu0 0.0
    %3610 = vmatpush1.msra.mxu0 %v3562
    %3611 = vmatprep.subr.mxu0 0.0
    %3612 = vmatpush1.msra.mxu0 %v3561
    %3613 = vmatprep.subr.mxu0 0.0
    %3614 = vmatpush1.msra.mxu0 %v3560
    %3615 = vmatprep.subr.mxu0 0.0
    %3616 = vmatpush2.msra.mxu0 0.0
    %3617 = vmatprep.subr.mxu0 0.0
    %3618 = vmatpush2.msra.mxu0 0.0
    %3619 = vmatprep.subr.mxu0 0.0
    %3620 = vmatpush2.msra.mxu0 0.0
    %3621 = vmatprep.subr.mxu0 0.0
    %3622 = vmatpush2.msra.mxu0 0.0
    %3623 = vmatprep.subr.mxu0 0.0
    %3624 = vmatpush2.msra.mxu0 0.0
    %3625 = vmatprep.subr.mxu0 0.0
    %3626 = vmatpush2.msra.mxu0 0.0
    %3627 = vmatprep.subr.mxu0 0.0
    %3628 = vmatpush2.msra.mxu0 0.0
    %3629 = vmatprep.subr.mxu0 0.0
    %3630 = vmatpush2.msra.mxu0 0.0
    %3631 = vmatprep.subr.mxu0 0.0
    %3632 = vmatpush2.msra.mxu0 0.0
    %3633 = vmatprep.subr.mxu0 0.0
    %3634 = vmatpush2.msra.mxu0 0.0
    %3635 = vmatprep.subr.mxu0 0.0
    %3636 = vmatpush2.msra.mxu0 0.0
    %3637 = vmatprep.subr.mxu0 0.0
    %3638 = vmatpush2.msra.mxu0 0.0
    %3639 = vmatprep.subr.mxu0 0.0
    %3640 = vmatpush2.msra.mxu0 0.0
    %3641 = vmatprep.subr.mxu0 0.0
    %3642 = vmatpush2.msra.mxu0 0.0
    %3643 = vmatprep.subr.mxu0 0.0
    %3644 = vmatpush2.msra.mxu0 0.0
    %3645 = vmatprep.subr.mxu0 0.0
    %3646 = vmatpush2.msra.mxu0 0.0
    %3647 = vmatprep.mubr.f32.mxu0 0.0
    %3648 = vmatmul.mubr.f32.gmra.mxu0 %v3559
    %v3649 = vpop.f32.mrf.mxu0
    %v3650 = vadd.f32 %v3581, %v3649
    %v3651 = vpop.f32.mrf.mxu0
    %3652 = vdwg.mxu0
    %v3653 = vmax.f32 %v3650, 0.0
    %v3654 = vld [vmem:[%s11] sm:$0xff]
    %v3655 = vld [vmem:[%s11 + $0x8] sm:$0xff]
    %v3656 = vld [vmem:[%s11 + $0x10] sm:$0xff]
    %v3657 = vld [vmem:[%s11 + $0x18] sm:$0xff]
    %v3658 = vld [vmem:[%s11 + $0x20] sm:$0xff]
    %v3659 = vld [vmem:[%s11 + $0x28] sm:$0xff]
    %v3660 = vld [vmem:[%s11 + $0x30] sm:$0xff]
    %v3661 = vld [vmem:[%s11 + $0x38] sm:$0xff]
    %v3662 = vld [vmem:[%s11 + $0x40] sm:$0xff]
    %v3663 = vld [vmem:[%s11 + $0x48] sm:$0xff]
    %v3664 = vld [vmem:[%s11 + $0x50] sm:$0xff]
    %v3665 = vld [vmem:[%s11 + $0x58] sm:$0xff]
    %v3666 = vld [vmem:[%s11 + $0x60] sm:$0xff]
    %v3667 = vld [vmem:[%s11 + $0x68] sm:$0xff]
    %v3668 = vld [vmem:[%s11 + $0x70] sm:$0xff]
    %v3669 = vld [vmem:[%s11 + $0x78] sm:$0xff]
    %v3670 = vld [vmem:[#allocation5] sm:$0x1]
    %v3672 = vlaneseq
    %v3673 = vshrl.u32 %v3672, 7
    %v3674 = vsub.s32 0, %v3673
    %v3675 = vrot.slane %v3670, %v3674
    %3677 = vmatprep.subr.mxu0 0.0
    %3678 = vmatpush1.msra.mxu0 %v3669
    %3679 = vmatprep.subr.mxu0 0.0
    %3680 = vmatpush1.msra.mxu0 %v3668
    %3681 = vmatprep.subr.mxu0 0.0
    %3682 = vmatpush1.msra.mxu0 %v3667
    %3683 = vmatprep.subr.mxu0 0.0
    %3684 = vmatpush1.msra.mxu0 %v3666
    %3685 = vmatprep.subr.mxu0 0.0
    %3686 = vmatpush1.msra.mxu0 %v3665
    %3687 = vmatprep.subr.mxu0 0.0
    %3688 = vmatpush1.msra.mxu0 %v3664
    %3689 = vmatprep.subr.mxu0 0.0
    %3690 = vmatpush1.msra.mxu0 %v3663
    %3691 = vmatprep.subr.mxu0 0.0
    %3692 = vmatpush1.msra.mxu0 %v3662
    %3693 = vmatprep.subr.mxu0 0.0
    %3694 = vmatpush1.msra.mxu0 %v3661
    %3695 = vmatprep.subr.mxu0 0.0
    %3696 = vmatpush1.msra.mxu0 %v3660
    %3697 = vmatprep.subr.mxu0 0.0
    %3698 = vmatpush1.msra.mxu0 %v3659
    %3699 = vmatprep.subr.mxu0 0.0
    %3700 = vmatpush1.msra.mxu0 %v3658
    %3701 = vmatprep.subr.mxu0 0.0
    %3702 = vmatpush1.msra.mxu0 %v3657
    %3703 = vmatprep.subr.mxu0 0.0
    %3704 = vmatpush1.msra.mxu0 %v3656
    %3705 = vmatprep.subr.mxu0 0.0
    %3706 = vmatpush1.msra.mxu0 %v3655
    %3707 = vmatprep.subr.mxu0 0.0
    %3708 = vmatpush1.msra.mxu0 %v3654
    %3709 = vmatprep.subr.mxu0 0.0
    %3710 = vmatpush2.msra.mxu0 0.0
    %3711 = vmatprep.subr.mxu0 0.0
    %3712 = vmatpush2.msra.mxu0 0.0
    %3713 = vmatprep.subr.mxu0 0.0
    %3714 = vmatpush2.msra.mxu0 0.0
    %3715 = vmatprep.subr.mxu0 0.0
    %3716 = vmatpush2.msra.mxu0 0.0
    %3717 = vmatprep.subr.mxu0 0.0
    %3718 = vmatpush2.msra.mxu0 0.0
    %3719 = vmatprep.subr.mxu0 0.0
    %3720 = vmatpush2.msra.mxu0 0.0
    %3721 = vmatprep.subr.mxu0 0.0
    %3722 = vmatpush2.msra.mxu0 0.0
    %3723 = vmatprep.subr.mxu0 0.0
    %3724 = vmatpush2.msra.mxu0 0.0
    %3725 = vmatprep.subr.mxu0 0.0
    %3726 = vmatpush2.msra.mxu0 0.0
    %3727 = vmatprep.subr.mxu0 0.0
    %3728 = vmatpush2.msra.mxu0 0.0
    %3729 = vmatprep.subr.mxu0 0.0
    %3730 = vmatpush2.msra.mxu0 0.0
    %3731 = vmatprep.subr.mxu0 0.0
    %3732 = vmatpush2.msra.mxu0 0.0
    %3733 = vmatprep.subr.mxu0 0.0
    %3734 = vmatpush2.msra.mxu0 0.0
    %3735 = vmatprep.subr.mxu0 0.0
    %3736 = vmatpush2.msra.mxu0 0.0
    %3737 = vmatprep.subr.mxu0 0.0
    %3738 = vmatpush2.msra.mxu0 0.0
    %3739 = vmatprep.subr.mxu0 0.0
    %3740 = vmatpush2.msra.mxu0 0.0
    %3741 = vmatprep.mubr.f32.mxu0 0.0
    %3742 = vmatmul.mubr.f32.gmra.mxu0 %v3653
    %v3743 = vpop.f32.mrf.mxu0
    %v3744 = vadd.f32 %v3675, %v3743
    %v3745 = vpop.f32.mrf.mxu0
    %3746 = vdwg.mxu0
    %v3747 = vxor.u32 %v3744, 2147483648
    %v3748 = vmul.f32 %v3747, 1.442695
    %v3749 = vpow.pop %v3748
    %v3750 = vadd.f32 %v3749, 1.0
    %v3751 = vrcp.pop %v3750
    %v3752 = vmul.f32 1.0, %v3751
    %vm3753 = vcmask 1024
    %3754 = vst.msk [vmem:[%s13] sm:$0x3] %vm3753, %v3752
    // Predicated region
    $region74: #{tpu_custom_call.1} parent=1 // pred_check
      _
    $region75: #{tpu_custom_call.1} parent=1 // pred_check_branch
      %3756 = sbr.rel (0) target = $region77
    $region76: #{tpu_custom_call.1} parent=1 // pred_region
      _
    $region77: #{tpu_custom_call.1} parent=1 // pred_fallthru
      _
    // Predicated region
    $region78: #{tpu_custom_call.1} parent=1 // pred_check
      _
    $region79: #{tpu_custom_call.1} parent=1 // pred_check_branch
      %3758 = sbr.rel (0) target = $region81
    $region80: #{tpu_custom_call.1} parent=1 // pred_region
      _
    $region81: #{tpu_custom_call.1} parent=1 // pred_fallthru
      _
    %3759 = vsyncpa [#allocation7], 1
    %3760 = vsyncpa [#allocation9], 1
    %3761 = vsyncpa [#allocation12], 1

</llo_original>
